<compile_context>
chip_gen: v7x
topology: tpu7x:2x2x1
jax: 0.10.0
libtpu: 0.0.40
codegen_flags: <defaults>
</compile_context>

<pallas_src>
import jax
import jax.numpy as jnp
import numpy as np
from jax import lax
from jax.experimental import pallas as pl
from jax.experimental.pallas import tpu as pltpu

MULTI_SCALES = (0.1, 1.0, 5.0, 10.0, 20.0, 50.0, 100.0)


def _tap_offsets(dilation):
    # t = ky*3 + kx ordering, matching the wrapper's weight reshape.
    return [((ky - 1) * dilation, (kx - 1) * dilation)
            for ky in range(3) for kx in range(3)]


def _make_kernel(H, W, dil, Cmid):
    HW = H * W
    offsets = _tap_offsets(dil)
    # shifted[i] = x[i + dy*W + dx]  ->  jnp.roll-style shift of -(dy*W+dx), normalized to [0, HW).
    shifts = [(-(dy * W + dx)) % HW for dy, dx in offsets]

    def kernel(x_ref, dwT_ref, masks_ref, wconv_ref, bconv_ref, w1_ref, b1_ref, wpw_ref,
               prob_ref, wcum_ref, wpool_ref, scale_ref,
               acc_ref):
        f32 = jnp.float32
        k = pl.program_id(1)

        # ---- 3x3 dilated conv: shift-and-accumulate over the 9 taps for this Cin chunk ----------
        # x chunk is (Cin_tile, HW) lane-dense; each tap is a lane roll + border mask (zero padding)
        # followed by a bf16 MXU matmul (Cmid, Cin_tile) @ (Cin_tile, HW) accumulated in f32.
        xf = x_ref[0].astype(f32)                                  # (Cin_tile, HW)
        part = None
        for t, (dy, dx) in enumerate(offsets):
            if dy == 0 and dx == 0:
                sh = xf                                            # center tap: no shift, full mask
            else:
                sh = pltpu.roll(xf, shifts[t], axis=1) * masks_ref[pl.ds(t, 1), :]
            d = jnp.dot(wconv_ref[0, t], sh.astype(jnp.bfloat16),
                        preferred_element_type=f32)                # (Cmid, HW) f32
            part = d if part is None else part + d

        @pl.when(k == 0)
        def _():
            acc_ref[...] = part

        @pl.when(k != 0)
        def _():
            acc_ref[...] = acc_ref[...] + part

        # ---- diffusion / softmax tail: only once the conv contraction is complete ---------------
        @pl.when(k == pl.num_programs(1) - 1)
        def _():
            out_feat = acc_ref[...] + bconv_ref[...]               # (Cmid, HW), conv bias added
            # exact reassociation: apply the 1x1 conv before the diffusion matmuls
            g = jnp.dot(w1_ref[...], out_feat, preferred_element_type=f32)   # (ncls, HW)
            b1 = b1_ref[...]                                       # (ncls, 1)

            # q1[j, i] = diffW[i, j]  (transposed in the wrapper), strictly positive, diag == 1.
            q1 = dwT_ref[0]                                        # (HW, HW)

            def scale_logits(qp):
                qt = jnp.where(qp > 0.8, qp, 0.0)                  # hard threshold (as in torch)
                # row sums of p == column sums of q; divide the SMALL result instead of p itself.
                inv_rs = pl.reciprocal(jnp.sum(qt, axis=0, keepdims=True), approx=True)  # (1, HW)
                return jnp.dot(g, qt, preferred_element_type=f32) * inv_rs + b1          # (ncls, HW)

            # scale 0.1 is the only non-integer exponent (EUP exp/log); the integer scales are
            # built by repeated multiplication (exact, runs on the VALU slack under the MXU).
            best = scale_logits(jnp.exp(0.1 * jnp.log(q1)))
            best_idx = jnp.zeros(best.shape, jnp.int32)

            def update(best, best_idx, qp, it):
                wc = scale_logits(qp)
                upd = wc > best                                    # strict '>' == first-max on ties
                return (jnp.where(upd, wc, best),
                        jnp.where(upd, jnp.int32(it), best_idx))

            best, best_idx = update(best, best_idx, q1, 1)         # sc = 1
            q2 = q1 * q1
            q5 = q2 * q2 * q1
            best, best_idx = update(best, best_idx, q5, 2)         # sc = 5
            q10 = q5 * q5
            best, best_idx = update(best, best_idx, q10, 3)        # sc = 10
            q20 = q10 * q10
            best, best_idx = update(best, best_idx, q20, 4)        # sc = 20
            q50 = q20 * q20 * q10
            best, best_idx = update(best, best_idx, q50, 5)        # sc = 50
            best, best_idx = update(best, best_idx, q50 * q50, 6)  # sc = 100

            # wei_cum = softmax over classes of the per-pixel max-over-scales logits
            m = jnp.max(best, axis=0, keepdims=True)
            e = jnp.exp(best - m)
            wcum = e * pl.reciprocal(jnp.sum(e, axis=0, keepdims=True), approx=True)

            # weiPooling_sm: spatial softmax of wcum * exp(weights)
            scaled = wcum * jnp.exp(wpw_ref[...])                  # (ncls, 1) broadcast
            m2 = jnp.max(scaled, axis=1, keepdims=True)
            e2 = jnp.exp(scaled - m2)
            wpool = e2 * pl.reciprocal(jnp.sum(e2, axis=1, keepdims=True), approx=True)

            # prob[k] = sigmoid( sum_i wpool[k,i]*best[k,i] + (Cmid-1)*b1[k] )  (exact collapse)
            z = jnp.sum(wpool * best, axis=1, keepdims=True) + (Cmid - 1.0) * b1   # (ncls, 1)
            prob = 1.0 / (1.0 + jnp.exp(-z))

            prob_ref[0] = jnp.broadcast_to(prob, (prob.shape[0], prob_ref.shape[-1])
                                           ).astype(prob_ref.dtype)
            wcum_ref[0] = wcum.astype(wcum_ref.dtype)
            wpool_ref[0] = wpool.astype(wpool_ref.dtype)
            scale_ref[0] = best_idx

    return kernel


def self_attention_multiscale_v2(x, diffW, params, *, dilation, padding, cin_tile=None):
    """Pallas forward of SelfAttention_Module_multiscale_v2 (single ASPP branch, n_stride=1).

    x:      (bs, Cin, H, W) float32, NCHW (same as PyTorch).
    diffW:  (bs, H*W, H*W)  float32, strictly positive diffusion affinity matrices (diag == 1).
    params: (Wconv OIHW (Cmid,Cin,3,3), bconv (Cmid,), W1 (ncls,Cmid,1,1), b1 (ncls,), wp (1,ncls))
    returns (prob (bs,ncls), wei_cum (bs,ncls,H*W), wei_pool (bs,ncls,H*W), scale (bs,ncls,H*W) int32)
    """
    Wconv, bconv, W1, b1, wp = params
    bs, Cin, H, W_ = x.shape
    HW = H * W_
    Cmid = Wconv.shape[0]
    ncls = W1.shape[0]
    assert diffW.shape == (bs, HW, HW)
    assert dilation == padding, "same-size output (needed by diffW's HWxHW shape) requires padding == dilation"

    if cin_tile is None:
        cin_tile = Cin if Cin <= 256 else 256
    assert Cin % cin_tile == 0 and cin_tile % 8 == 0
    nK = Cin // cin_tile

    # ---- lane-dense layouts prepared once in the wrapper (layout plumbing, not compute) ---------
    x_hw = x.reshape(bs, Cin, HW)                                   # spatial on lanes
    dwT = jnp.swapaxes(diffW, 1, 2)                                 # so in-kernel diffusion is plain A@B

    # conv weight: [k_chunk, tap, out_ch, in_ch_chunk], bf16 MXU operand
    w = jnp.transpose(Wconv, (2, 3, 0, 1)).reshape(9, Cmid, Cin)    # [t = ky*3+kx, o, i]
    wconv_k = (w.reshape(9, Cmid, nK, cin_tile)
                .transpose(2, 0, 1, 3)
                .astype(jnp.bfloat16))                              # (nK, 9, Cmid, cin_tile)
    bconv_col = bconv.reshape(Cmid, 1).astype(jnp.float32)
    w1_mat = W1.reshape(ncls, Cmid).astype(jnp.float32)
    b1_col = b1.reshape(ncls, 1).astype(jnp.float32)
    wp_col = wp.reshape(ncls, 1).astype(jnp.float32)

    # per-tap validity masks (emulate the zero padding of the dilated conv after a lane roll)
    ys, xs = np.divmod(np.arange(HW), W_)
    masks = np.zeros((9, HW), np.float32)
    for t, (dy, dx) in enumerate(_tap_offsets(dilation)):
        masks[t] = ((ys + dy >= 0) & (ys + dy < H) &
                    (xs + dx >= 0) & (xs + dx < W_)).astype(np.float32)
    masks = jnp.asarray(masks)

    PROB_LANES = 128
    kernel = _make_kernel(H, W_, dilation, Cmid)

    grid_spec = pltpu.PrefetchScalarGridSpec(
        num_scalar_prefetch=0,
        grid=(bs, nK),                                              # batch "parallel", Cin chunks "arbitrary"
        in_specs=[
            pl.BlockSpec((1, cin_tile, HW), lambda n, k: (n, k, 0)),        # x channel chunk
            pl.BlockSpec((1, HW, HW), lambda n, k: (n, 0, 0)),              # diffW^T (re-used across k)
            pl.BlockSpec((9, HW), lambda n, k: (0, 0)),                     # conv tap masks
            pl.BlockSpec((1, 9, Cmid, cin_tile), lambda n, k: (k, 0, 0, 0)),  # bf16 conv weight chunk
            pl.BlockSpec((Cmid, 1), lambda n, k: (0, 0)),                   # conv bias
            pl.BlockSpec((ncls, Cmid), lambda n, k: (0, 0)),                # 1x1 conv weight
            pl.BlockSpec((ncls, 1), lambda n, k: (0, 0)),                   # 1x1 conv bias
            pl.BlockSpec((ncls, 1), lambda n, k: (0, 0)),                   # weiPooling_sm weights
        ],
        out_specs=[
            pl.BlockSpec((1, ncls, PROB_LANES), lambda n, k: (n, 0, 0)),    # prob (lane-padded)
            pl.BlockSpec((1, ncls, HW), lambda n, k: (n, 0, 0)),            # wei_cum
            pl.BlockSpec((1, ncls, HW), lambda n, k: (n, 0, 0)),            # wei_pool
            pl.BlockSpec((1, ncls, HW), lambda n, k: (n, 0, 0)),            # scale (argmax over scales)
        ],
        scratch_shapes=[
            pltpu.VMEM((Cmid, HW), jnp.float32),                            # conv accumulator
        ],
    )

    # advisory cost estimate (conv dominates at real channel counts)
    flops = int(bs * (2 * 9 * Cin * Cmid * HW + 2 * ncls * Cmid * HW
                      + len(MULTI_SCALES) * 2 * ncls * HW * HW + 30 * HW * HW))
    transcendentals = int(bs * (2 * HW * HW + 3 * ncls * HW))
    bytes_accessed = int(4 * (x_hw.size + dwT.size + 3 * bs * ncls * HW + bs * ncls * PROB_LANES)
                         + 2 * bs * wconv_k.size)

    prob_pad, wcum, wpool, scale = pl.pallas_call(
        kernel,
        out_shape=(jax.ShapeDtypeStruct((bs, ncls, PROB_LANES), jnp.float32),
                   jax.ShapeDtypeStruct((bs, ncls, HW), jnp.float32),
                   jax.ShapeDtypeStruct((bs, ncls, HW), jnp.float32),
                   jax.ShapeDtypeStruct((bs, ncls, HW), jnp.int32)),
        grid_spec=grid_spec,
        compiler_params=pltpu.CompilerParams(
            dimension_semantics=("parallel", "arbitrary"),
            vmem_limit_bytes=64 * 1024 * 1024),
        cost_estimate=pl.CostEstimate(flops=flops,
                                      transcendentals=transcendentals,
                                      bytes_accessed=bytes_accessed),
    )(x_hw, dwT, masks, wconv_k, bconv_col, w1_mat, b1_col, wp_col)

    return prob_pad[:, :, 0], wcum, wpool, scale


# --------------------------- literal pure-JAX reference ---------------------------------------
def self_attention_multiscale_v2_ref(x, diffW, params, *, dilation, padding):
    """Literal translation of the PyTorch forward (materializes out_diff_all, scatter, gather)."""
    Wconv, bconv, W1, b1, wp = params
    bs, Cin, H, W = x.shape
    HW = H * W
    Cmid = Wconv.shape[0]
    ncls = W1.shape[0]
    nsc = len(MULTI_SCALES)

    out_feat = lax.conv_general_dilated(
        x, Wconv, window_strides=(1, 1),
        padding=[(padding, padding), (padding, padding)],
        rhs_dilation=(dilation, dilation),
        dimension_numbers=("NCHW", "OIHW", "NCHW")) + bconv.reshape(1, Cmid, 1, 1)
    of = out_feat.reshape(bs, Cmid, HW)
    w1m = W1.reshape(ncls, Cmid)

    wc_all, od_all = [], []
    for sc in MULTI_SCALES:
        p = diffW ** sc
        p = jnp.where(p > 0.8, p, 0.0)
        a = p / jnp.sum(p, axis=2, keepdims=True)                 # row-normalized
        od = jnp.einsum('bcj,bij->bci', of, a)                    # out_feat.bmm(diffW_norm)
        od_all.append(od)
        wc_all.append(jnp.einsum('kc,bci->bki', w1m, od) + b1.reshape(1, ncls, 1))
    wc_all = jnp.stack(wc_all, axis=1)                            # (bs, nsc, ncls, HW)
    od_all = jnp.stack(od_all, axis=1)                            # (bs, nsc, Cmid, HW)

    scale = jnp.argmax(wc_all, axis=1)                            # (bs, ncls, HW)
    wmax = jnp.max(wc_all, axis=1)                                # == (wei_cum * wei_mask).sum(1)
    wcum = jax.nn.softmax(wmax, axis=1)
    wpool = jax.nn.softmax(wcum * jnp.exp(wp[0]).reshape(1, ncls, 1), axis=2)

    probs = []
    for k in range(ncls):
        onehot = jax.nn.one_hot(scale[:, k, :], nsc, axis=1)      # (bs, nsc, HW)
        feat_cls = jnp.einsum('bsci,bsi->bci', od_all, onehot)    # gather at argmax scale
        feat_sg = jnp.einsum('bci,bi->bc', feat_cls, wpool[:, k, :])
        z = (feat_sg * w1m[k][None, :] + b1[k]).sum(axis=1)
        probs.append(jax.nn.sigmoid(z))
    prob = jnp.stack(probs, axis=1)
    return prob, wcum, wpool, scale, wc_all


# --------------------------------------- main --------------------------------------------------
if __name__ == "__main__":
    # Small stand-in shapes (real model: Cin=2048, Cmid=1024, ncls=num_classes, HW = feature map).
    bs, Cin, Cmid, ncls = 2, 32, 32, 4
    H = W = 16
    HW = H * W
    dilation = padding = 2          # one ASPP branch; n_stride = 1

    key = jax.random.PRNGKey(0)
    kx_, kd, k1, k2, k3, k4 = jax.random.split(key, 6)

    # x and Wconv are rounded to be exactly bf16-representable, so the kernel's bf16 MXU path is
    # product-exact vs the f32 reference (tolerances below therefore stay tight; with arbitrary f32
    # inputs the bf16 conv would need ~1e-2 relative tolerances).
    x = jax.random.normal(kx_, (bs, Cin, H, W), jnp.float32).astype(jnp.bfloat16).astype(jnp.float32)

    # Diffusion affinity: strictly positive, diag == 1, off-diagonal values quantized to a grid that
    # stays away from every scale's `> 0.8` threshold boundary (so kernel/reference make identical
    # keep/drop decisions despite pow-vs-exp / repeated-multiplication float differences).
    q = jax.random.randint(kd, (bs, HW, HW), 0, 40)
    diffW = (q.astype(jnp.float32) + 0.5) / 40.0
    eye = jnp.eye(HW, dtype=jnp.float32)[None]
    diffW = diffW * (1.0 - eye) + eye

    Wconv = (0.1 * jax.random.normal(k1, (Cmid, Cin, 3, 3), jnp.float32)
             ).astype(jnp.bfloat16).astype(jnp.float32)               # conv2d_list[0] (OIHW)
    bconv = 0.1 * jax.random.normal(k2, (Cmid,), jnp.float32)
    W1 = 0.1 * jax.random.normal(k3, (ncls, Cmid, 1, 1), jnp.float32)  # conv1_list[0]
    b1 = 0.1 * jax.random.normal(k4, (ncls,), jnp.float32)
    wp = jnp.full((1, ncls), 1.6, jnp.float32)                         # weiPooling_sm init
    params = (Wconv, bconv, W1, b1, wp)

    prob, wcum, wpool, scale = jax.block_until_ready(
        self_attention_multiscale_v2(x, diffW, params,
                                     dilation=dilation, padding=padding, cin_tile=16))

    prob_r, wcum_r, wpool_r, scale_r, wc_all_r = self_attention_multiscale_v2_ref(
        x, diffW, params, dilation=dilation, padding=padding)

    np.testing.assert_allclose(np.asarray(prob), np.asarray(prob_r), rtol=2e-2, atol=2e-3)
    np.testing.assert_allclose(np.asarray(wcum), np.asarray(wcum_r), rtol=2e-2, atol=2e-3)
    np.testing.assert_allclose(np.asarray(wpool), np.asarray(wpool_r), rtol=2e-2, atol=1e-5)

    # `scale` is checked tie-tolerantly: the kernel's chosen scale must (numerically) attain the
    # per-pixel maximum of the reference logits.
    wc_all_np = np.asarray(wc_all_r)
    picked = np.take_along_axis(wc_all_np, np.asarray(scale)[:, None], axis=1)[:, 0]
    np.testing.assert_array_less(wc_all_np.max(axis=1) - picked, 2e-2)

    print("KERNEL_OK")
</pallas_src>

<mosaic_0001>
module attributes {stable_mosaic.version = 11 : i64} {
  func.func @kernel(%arg0: i32, %arg1: i32, %arg2: memref<1x16x256xf32, #tpu.memory_space<vmem>>, %arg3: memref<1x256x256xf32, #tpu.memory_space<vmem>>, %arg4: memref<9x256xf32, #tpu.memory_space<vmem>>, %arg5: memref<1x9x32x16xbf16, #tpu.memory_space<vmem>>, %arg6: memref<32x1xf32, #tpu.memory_space<vmem>>, %arg7: memref<4x32xf32, #tpu.memory_space<vmem>>, %arg8: memref<4x1xf32, #tpu.memory_space<vmem>>, %arg9: memref<4x1xf32, #tpu.memory_space<vmem>>, %arg10: memref<1x4x128xf32, #tpu.memory_space<vmem>>, %arg11: memref<1x4x256xf32, #tpu.memory_space<vmem>>, %arg12: memref<1x4x256xf32, #tpu.memory_space<vmem>>, %arg13: memref<1x4x256xi32, #tpu.memory_space<vmem>>, %arg14: memref<32x256xf32, #tpu.memory_space<vmem>>) attributes {dimension_semantics = [#tpu.dimension_semantics<parallel>, #tpu.dimension_semantics<arbitrary>], iteration_bounds = array<i64: 2, 2>, scalar_prefetch = 0 : i64, scratch_operands = 1 : i64, tpu.core_type = #tpu.core_type<tc>, window_params = [{transform_indices = @transform_0, window_bounds = array<i64: 1, 16, 256>}, {transform_indices = @transform_1, window_bounds = array<i64: 1, 256, 256>}, {pipeline_mode = #tpu.pipeline_mode<synchronous>, transform_indices = @transform_2, window_bounds = array<i64: 9, 256>}, {transform_indices = @transform_3, window_bounds = array<i64: 1, 9, 32, 16>}, {pipeline_mode = #tpu.pipeline_mode<synchronous>, transform_indices = @transform_4, window_bounds = array<i64: 32, 1>}, {pipeline_mode = #tpu.pipeline_mode<synchronous>, transform_indices = @transform_5, window_bounds = array<i64: 4, 32>}, {pipeline_mode = #tpu.pipeline_mode<synchronous>, transform_indices = @transform_6, window_bounds = array<i64: 4, 1>}, {pipeline_mode = #tpu.pipeline_mode<synchronous>, transform_indices = @transform_7, window_bounds = array<i64: 4, 1>}, {transform_indices = @transform_8, window_bounds = array<i64: 1, 4, 128>}, {transform_indices = @transform_9, window_bounds = array<i64: 1, 4, 256>}, {transform_indices = @transform_10, window_bounds = array<i64: 1, 4, 256>}, {transform_indices = @transform_11, window_bounds = array<i64: 1, 4, 256>}]} {
    %c0 = arith.constant 0 : index
    %c0_0 = arith.constant 0 : index
    %c0_1 = arith.constant 0 : index
    %0 = vector.load %arg2[%c0, %c0_0, %c0_1] : memref<1x16x256xf32, #tpu.memory_space<vmem>>, vector<1x16x256xf32>
    %1 = vector.shape_cast %0 : vector<1x16x256xf32> to vector<16x256xf32>
    %c34_i32 = arith.constant 34 : i32
    %2 = tpu.dynamic_rotate %1 by %c34_i32 dim 1 : vector<16x256xf32>, i32 -> vector<16x256xf32>
    %c0_2 = arith.constant 0 : index
    %c0_3 = arith.constant 0 : index
    %3 = vector.load %arg4[%c0_2, %c0_3] : memref<9x256xf32, #tpu.memory_space<vmem>>, vector<1x256xf32>
    %4 = vector.broadcast %3 : vector<1x256xf32> to vector<16x256xf32>
    %5 = arith.mulf %2, %4 : vector<16x256xf32>
    %c0_4 = arith.constant 0 : index
    %c0_5 = arith.constant 0 : index
    %c0_6 = arith.constant 0 : index
    %c0_7 = arith.constant 0 : index
    %6 = vector.load %arg5[%c0_4, %c0_5, %c0_6, %c0_7] : memref<1x9x32x16xbf16, #tpu.memory_space<vmem>>, vector<1x1x32x16xbf16>
    %7 = vector.shape_cast %6 : vector<1x1x32x16xbf16> to vector<32x16xbf16>
    %8 = arith.truncf %5 : vector<16x256xf32> to vector<16x256xbf16>
    %cst = arith.constant dense<0.000000e+00> : vector<32x256xf32>
    %9 = tpu.matmul %7, %8, %cst {dimension_numbers = #tpu.dot_dimension_numbers<[1], [0], [0], [1], [0, 0, 1, 1], [], []>} : vector<32x16xbf16>, vector<16x256xbf16>, vector<32x256xf32> -> vector<32x256xf32>
    %c32_i32 = arith.constant 32 : i32
    %10 = tpu.dynamic_rotate %1 by %c32_i32 dim 1 : vector<16x256xf32>, i32 -> vector<16x256xf32>
    %c1 = arith.constant 1 : index
    %c0_8 = arith.constant 0 : index
    %11 = vector.load %arg4[%c1, %c0_8] : memref<9x256xf32, #tpu.memory_space<vmem>>, vector<1x256xf32>
    %12 = vector.broadcast %11 : vector<1x256xf32> to vector<16x256xf32>
    %13 = arith.mulf %10, %12 : vector<16x256xf32>
    %c0_9 = arith.constant 0 : index
    %c1_10 = arith.constant 1 : index
    %c0_11 = arith.constant 0 : index
    %c0_12 = arith.constant 0 : index
    %14 = vector.load %arg5[%c0_9, %c1_10, %c0_11, %c0_12] : memref<1x9x32x16xbf16, #tpu.memory_space<vmem>>, vector<1x1x32x16xbf16>
    %15 = vector.shape_cast %14 : vector<1x1x32x16xbf16> to vector<32x16xbf16>
    %16 = arith.truncf %13 : vector<16x256xf32> to vector<16x256xbf16>
    %cst_13 = arith.constant dense<0.000000e+00> : vector<32x256xf32>
    %17 = tpu.matmul %15, %16, %cst_13 {dimension_numbers = #tpu.dot_dimension_numbers<[1], [0], [0], [1], [0, 0, 1, 1], [], []>} : vector<32x16xbf16>, vector<16x256xbf16>, vector<32x256xf32> -> vector<32x256xf32>
    %18 = arith.addf %9, %17 : vector<32x256xf32>
    %c30_i32 = arith.constant 30 : i32
    %19 = tpu.dynamic_rotate %1 by %c30_i32 dim 1 : vector<16x256xf32>, i32 -> vector<16x256xf32>
    %c2 = arith.constant 2 : index
    %c0_14 = arith.constant 0 : index
    %20 = vector.load %arg4[%c2, %c0_14] : memref<9x256xf32, #tpu.memory_space<vmem>>, vector<1x256xf32>
    %21 = vector.broadcast %20 : vector<1x256xf32> to vector<16x256xf32>
    %22 = arith.mulf %19, %21 : vector<16x256xf32>
    %c0_15 = arith.constant 0 : index
    %c2_16 = arith.constant 2 : index
    %c0_17 = arith.constant 0 : index
    %c0_18 = arith.constant 0 : index
    %23 = vector.load %arg5[%c0_15, %c2_16, %c0_17, %c0_18] : memref<1x9x32x16xbf16, #tpu.memory_space<vmem>>, vector<1x1x32x16xbf16>
    %24 = vector.shape_cast %23 : vector<1x1x32x16xbf16> to vector<32x16xbf16>
    %25 = arith.truncf %22 : vector<16x256xf32> to vector<16x256xbf16>
    %cst_19 = arith.constant dense<0.000000e+00> : vector<32x256xf32>
    %26 = tpu.matmul %24, %25, %cst_19 {dimension_numbers = #tpu.dot_dimension_numbers<[1], [0], [0], [1], [0, 0, 1, 1], [], []>} : vector<32x16xbf16>, vector<16x256xbf16>, vector<32x256xf32> -> vector<32x256xf32>
    %27 = arith.addf %18, %26 : vector<32x256xf32>
    %c2_i32 = arith.constant 2 : i32
    %28 = tpu.dynamic_rotate %1 by %c2_i32 dim 1 : vector<16x256xf32>, i32 -> vector<16x256xf32>
    %c3 = arith.constant 3 : index
    %c0_20 = arith.constant 0 : index
    %29 = vector.load %arg4[%c3, %c0_20] : memref<9x256xf32, #tpu.memory_space<vmem>>, vector<1x256xf32>
    %30 = vector.broadcast %29 : vector<1x256xf32> to vector<16x256xf32>
    %31 = arith.mulf %28, %30 : vector<16x256xf32>
    %c0_21 = arith.constant 0 : index
    %c3_22 = arith.constant 3 : index
    %c0_23 = arith.constant 0 : index
    %c0_24 = arith.constant 0 : index
    %32 = vector.load %arg5[%c0_21, %c3_22, %c0_23, %c0_24] : memref<1x9x32x16xbf16, #tpu.memory_space<vmem>>, vector<1x1x32x16xbf16>
    %33 = vector.shape_cast %32 : vector<1x1x32x16xbf16> to vector<32x16xbf16>
    %34 = arith.truncf %31 : vector<16x256xf32> to vector<16x256xbf16>
    %cst_25 = arith.constant dense<0.000000e+00> : vector<32x256xf32>
    %35 = tpu.matmul %33, %34, %cst_25 {dimension_numbers = #tpu.dot_dimension_numbers<[1], [0], [0], [1], [0, 0, 1, 1], [], []>} : vector<32x16xbf16>, vector<16x256xbf16>, vector<32x256xf32> -> vector<32x256xf32>
    %36 = arith.addf %27, %35 : vector<32x256xf32>
    %c0_26 = arith.constant 0 : index
    %c4 = arith.constant 4 : index
    %c0_27 = arith.constant 0 : index
    %c0_28 = arith.constant 0 : index
    %37 = vector.load %arg5[%c0_26, %c4, %c0_27, %c0_28] : memref<1x9x32x16xbf16, #tpu.memory_space<vmem>>, vector<1x1x32x16xbf16>
    %38 = vector.shape_cast %37 : vector<1x1x32x16xbf16> to vector<32x16xbf16>
    %39 = arith.truncf %1 : vector<16x256xf32> to vector<16x256xbf16>
    %cst_29 = arith.constant dense<0.000000e+00> : vector<32x256xf32>
    %40 = tpu.matmul %38, %39, %cst_29 {dimension_numbers = #tpu.dot_dimension_numbers<[1], [0], [0], [1], [0, 0, 1, 1], [], []>} : vector<32x16xbf16>, vector<16x256xbf16>, vector<32x256xf32> -> vector<32x256xf32>
    %41 = arith.addf %36, %40 : vector<32x256xf32>
    %c254_i32 = arith.constant 254 : i32
    %42 = tpu.dynamic_rotate %1 by %c254_i32 dim 1 : vector<16x256xf32>, i32 -> vector<16x256xf32>
    %c5 = arith.constant 5 : index
    %c0_30 = arith.constant 0 : index
    %43 = vector.load %arg4[%c5, %c0_30] : memref<9x256xf32, #tpu.memory_space<vmem>>, vector<1x256xf32>
    %44 = vector.broadcast %43 : vector<1x256xf32> to vector<16x256xf32>
    %45 = arith.mulf %42, %44 : vector<16x256xf32>
    %c0_31 = arith.constant 0 : index
    %c5_32 = arith.constant 5 : index
    %c0_33 = arith.constant 0 : index
    %c0_34 = arith.constant 0 : index
    %46 = vector.load %arg5[%c0_31, %c5_32, %c0_33, %c0_34] : memref<1x9x32x16xbf16, #tpu.memory_space<vmem>>, vector<1x1x32x16xbf16>
    %47 = vector.shape_cast %46 : vector<1x1x32x16xbf16> to vector<32x16xbf16>
    %48 = arith.truncf %45 : vector<16x256xf32> to vector<16x256xbf16>
    %cst_35 = arith.constant dense<0.000000e+00> : vector<32x256xf32>
    %49 = tpu.matmul %47, %48, %cst_35 {dimension_numbers = #tpu.dot_dimension_numbers<[1], [0], [0], [1], [0, 0, 1, 1], [], []>} : vector<32x16xbf16>, vector<16x256xbf16>, vector<32x256xf32> -> vector<32x256xf32>
    %50 = arith.addf %41, %49 : vector<32x256xf32>
    %c226_i32 = arith.constant 226 : i32
    %51 = tpu.dynamic_rotate %1 by %c226_i32 dim 1 : vector<16x256xf32>, i32 -> vector<16x256xf32>
    %c6 = arith.constant 6 : index
    %c0_36 = arith.constant 0 : index
    %52 = vector.load %arg4[%c6, %c0_36] : memref<9x256xf32, #tpu.memory_space<vmem>>, vector<1x256xf32>
    %53 = vector.broadcast %52 : vector<1x256xf32> to vector<16x256xf32>
    %54 = arith.mulf %51, %53 : vector<16x256xf32>
    %c0_37 = arith.constant 0 : index
    %c6_38 = arith.constant 6 : index
    %c0_39 = arith.constant 0 : index
    %c0_40 = arith.constant 0 : index
    %55 = vector.load %arg5[%c0_37, %c6_38, %c0_39, %c0_40] : memref<1x9x32x16xbf16, #tpu.memory_space<vmem>>, vector<1x1x32x16xbf16>
    %56 = vector.shape_cast %55 : vector<1x1x32x16xbf16> to vector<32x16xbf16>
    %57 = arith.truncf %54 : vector<16x256xf32> to vector<16x256xbf16>
    %cst_41 = arith.constant dense<0.000000e+00> : vector<32x256xf32>
    %58 = tpu.matmul %56, %57, %cst_41 {dimension_numbers = #tpu.dot_dimension_numbers<[1], [0], [0], [1], [0, 0, 1, 1], [], []>} : vector<32x16xbf16>, vector<16x256xbf16>, vector<32x256xf32> -> vector<32x256xf32>
    %59 = arith.addf %50, %58 : vector<32x256xf32>
    %c224_i32 = arith.constant 224 : i32
    %60 = tpu.dynamic_rotate %1 by %c224_i32 dim 1 : vector<16x256xf32>, i32 -> vector<16x256xf32>
    %c7 = arith.constant 7 : index
    %c0_42 = arith.constant 0 : index
    %61 = vector.load %arg4[%c7, %c0_42] : memref<9x256xf32, #tpu.memory_space<vmem>>, vector<1x256xf32>
    %62 = vector.broadcast %61 : vector<1x256xf32> to vector<16x256xf32>
    %63 = arith.mulf %60, %62 : vector<16x256xf32>
    %c0_43 = arith.constant 0 : index
    %c7_44 = arith.constant 7 : index
    %c0_45 = arith.constant 0 : index
    %c0_46 = arith.constant 0 : index
    %64 = vector.load %arg5[%c0_43, %c7_44, %c0_45, %c0_46] : memref<1x9x32x16xbf16, #tpu.memory_space<vmem>>, vector<1x1x32x16xbf16>
    %65 = vector.shape_cast %64 : vector<1x1x32x16xbf16> to vector<32x16xbf16>
    %66 = arith.truncf %63 : vector<16x256xf32> to vector<16x256xbf16>
    %cst_47 = arith.constant dense<0.000000e+00> : vector<32x256xf32>
    %67 = tpu.matmul %65, %66, %cst_47 {dimension_numbers = #tpu.dot_dimension_numbers<[1], [0], [0], [1], [0, 0, 1, 1], [], []>} : vector<32x16xbf16>, vector<16x256xbf16>, vector<32x256xf32> -> vector<32x256xf32>
    %68 = arith.addf %59, %67 : vector<32x256xf32>
    %c222_i32 = arith.constant 222 : i32
    %69 = tpu.dynamic_rotate %1 by %c222_i32 dim 1 : vector<16x256xf32>, i32 -> vector<16x256xf32>
    %c8 = arith.constant 8 : index
    %c0_48 = arith.constant 0 : index
    %70 = vector.load %arg4[%c8, %c0_48] : memref<9x256xf32, #tpu.memory_space<vmem>>, vector<1x256xf32>
    %71 = vector.broadcast %70 : vector<1x256xf32> to vector<16x256xf32>
    %72 = arith.mulf %69, %71 : vector<16x256xf32>
    %c0_49 = arith.constant 0 : index
    %c8_50 = arith.constant 8 : index
    %c0_51 = arith.constant 0 : index
    %c0_52 = arith.constant 0 : index
    %73 = vector.load %arg5[%c0_49, %c8_50, %c0_51, %c0_52] : memref<1x9x32x16xbf16, #tpu.memory_space<vmem>>, vector<1x1x32x16xbf16>
    %74 = vector.shape_cast %73 : vector<1x1x32x16xbf16> to vector<32x16xbf16>
    %75 = arith.truncf %72 : vector<16x256xf32> to vector<16x256xbf16>
    %cst_53 = arith.constant dense<0.000000e+00> : vector<32x256xf32>
    %76 = tpu.matmul %74, %75, %cst_53 {dimension_numbers = #tpu.dot_dimension_numbers<[1], [0], [0], [1], [0, 0, 1, 1], [], []>} : vector<32x16xbf16>, vector<16x256xbf16>, vector<32x256xf32> -> vector<32x256xf32>
    %77 = arith.addf %68, %76 : vector<32x256xf32>
    %c0_i32 = arith.constant 0 : i32
    %78 = arith.cmpi eq, %arg1, %c0_i32 : i32
    %79 = arith.extui %78 : i1 to i32
    %c0_i32_54 = arith.constant 0 : i32
    %80 = arith.cmpi ne, %79, %c0_i32_54 : i32
    scf.if %80 {
      %c0_58 = arith.constant 0 : index
      %c0_59 = arith.constant 0 : index
      %87 = vector.load %arg14[%c0_58, %c0_59] : memref<32x256xf32, #tpu.memory_space<vmem>>, vector<32x256xf32>
      tpu.vector_store %arg14[%c0_58, %c0_59], %77 {strides = array<i32>} : memref<32x256xf32, #tpu.memory_space<vmem>>, vector<32x256xf32>,
    } else {
    }
    %c0_i32_55 = arith.constant 0 : i32
    %81 = arith.cmpi ne, %arg1, %c0_i32_55 : i32
    %82 = arith.extui %81 : i1 to i32
    %c0_i32_56 = arith.constant 0 : i32
    %83 = arith.cmpi ne, %82, %c0_i32_56 : i32
    scf.if %83 {
      %c0_58 = arith.constant 0 : index
      %c0_59 = arith.constant 0 : index
      %87 = vector.load %arg14[%c0_58, %c0_59] : memref<32x256xf32, #tpu.memory_space<vmem>>, vector<32x256xf32>
      %88 = arith.addf %87, %77 : vector<32x256xf32>
      %c0_60 = arith.constant 0 : index
      %c0_61 = arith.constant 0 : index
      %89 = vector.load %arg14[%c0_60, %c0_61] : memref<32x256xf32, #tpu.memory_space<vmem>>, vector<32x256xf32>
      tpu.vector_store %arg14[%c0_60, %c0_61], %88 {strides = array<i32>} : memref<32x256xf32, #tpu.memory_space<vmem>>, vector<32x256xf32>,
    } else {
    }
    %c1_i32 = arith.constant 1 : i32
    %84 = arith.cmpi eq, %arg1, %c1_i32 : i32
    %85 = arith.extui %84 : i1 to i32
    %c0_i32_57 = arith.constant 0 : i32
    %86 = arith.cmpi ne, %85, %c0_i32_57 : i32
    scf.if %86 {
      %c0_58 = arith.constant 0 : index
      %c0_59 = arith.constant 0 : index
      %87 = vector.load %arg14[%c0_58, %c0_59] : memref<32x256xf32, #tpu.memory_space<vmem>>, vector<32x256xf32>
      %c0_60 = arith.constant 0 : index
      %c0_61 = arith.constant 0 : index
      %88 = vector.load %arg6[%c0_60, %c0_61] : memref<32x1xf32, #tpu.memory_space<vmem>>, vector<32x1xf32>
      %89 = vector.broadcast %88 : vector<32x1xf32> to vector<32x256xf32>
      %90 = arith.addf %87, %89 : vector<32x256xf32>
      %c0_62 = arith.constant 0 : index
      %c0_63 = arith.constant 0 : index
      %91 = vector.load %arg7[%c0_62, %c0_63] : memref<4x32xf32, #tpu.memory_space<vmem>>, vector<4x32xf32>
      %cst_64 = arith.constant dense<0.000000e+00> : vector<4x256xf32>
      %92 = tpu.matmul %91, %90, %cst_64 {dimension_numbers = #tpu.dot_dimension_numbers<[1], [0], [0], [1], [0, 0, 1, 1], [], []>} : vector<4x32xf32>, vector<32x256xf32>, vector<4x256xf32> -> vector<4x256xf32>
      %c0_65 = arith.constant 0 : index
      %c0_66 = arith.constant 0 : index
      %93 = vector.load %arg8[%c0_65, %c0_66] : memref<4x1xf32, #tpu.memory_space<vmem>>, vector<4x1xf32>
      %c0_67 = arith.constant 0 : index
      %c0_68 = arith.constant 0 : index
      %c0_69 = arith.constant 0 : index
      %94 = vector.load %arg3[%c0_67, %c0_68, %c0_69] : memref<1x256x256xf32, #tpu.memory_space<vmem>>, vector<1x256x256xf32>
      %95 = vector.shape_cast %94 : vector<1x256x256xf32> to vector<256x256xf32>
      %96 = math.log %95 : vector<256x256xf32>
      %cst_70 = arith.constant 1.000000e-01 : f32
      %97 = vector.broadcast %cst_70 : f32 to vector<256x256xf32>
      %98 = arith.mulf %97, %96 : vector<256x256xf32>
      %99 = math.exp %98 : vector<256x256xf32>
      %cst_71 = arith.constant 8.000000e-01 : f32
      %100 = vector.broadcast %cst_71 : f32 to vector<256x256xf32>
      %101 = arith.cmpf ogt, %99, %100 : vector<256x256xf32>
      %cst_72 = arith.constant 0.000000e+00 : f32
      %102 = vector.broadcast %cst_72 : f32 to vector<256x256xf32>
      %103 = arith.select %101, %99, %102 : vector<256x256xi1>, vector<256x256xf32>
      %cst_73 = arith.constant dense<0.000000e+00> : vector<256xf32>
      %104 = vector.multi_reduction <add>, %103, %cst_73 [0] : vector<256x256xf32> to vector<256xf32>
      %105 = vector.shape_cast %104 : vector<256xf32> to vector<1x256xf32>
      %106 = tpu.reciprocal %105 {approx = true} : vector<1x256xf32> -> vector<1x256xf32>
      %cst_74 = arith.constant dense<0.000000e+00> : vector<4x256xf32>
      %107 = tpu.matmul %92, %103, %cst_74 {dimension_numbers = #tpu.dot_dimension_numbers<[1], [0], [0], [1], [0, 0, 1, 1], [], []>} : vector<4x256xf32>, vector<256x256xf32>, vector<4x256xf32> -> vector<4x256xf32>
      %108 = vector.broadcast %106 : vector<1x256xf32> to vector<4x256xf32>
      %109 = arith.mulf %107, %108 : vector<4x256xf32>
      %110 = vector.broadcast %93 : vector<4x1xf32> to vector<4x256xf32>
      %111 = arith.addf %109, %110 : vector<4x256xf32>
      %c0_i32_75 = arith.constant 0 : i32
      %112 = vector.broadcast %c0_i32_75 : i32 to vector<4x256xi32>
      %cst_76 = arith.constant 8.000000e-01 : f32
      %113 = vector.broadcast %cst_76 : f32 to vector<256x256xf32>
      %114 = arith.cmpf ogt, %95, %113 : vector<256x256xf32>
      %cst_77 = arith.constant 0.000000e+00 : f32
      %115 = vector.broadcast %cst_77 : f32 to vector<256x256xf32>
      %116 = arith.select %114, %95, %115 : vector<256x256xi1>, vector<256x256xf32>
      %cst_78 = arith.constant dense<0.000000e+00> : vector<256xf32>
      %117 = vector.multi_reduction <add>, %116, %cst_78 [0] : vector<256x256xf32> to vector<256xf32>
      %118 = vector.shape_cast %117 : vector<256xf32> to vector<1x256xf32>
      %119 = tpu.reciprocal %118 {approx = true} : vector<1x256xf32> -> vector<1x256xf32>
      %cst_79 = arith.constant dense<0.000000e+00> : vector<4x256xf32>
      %120 = tpu.matmul %92, %116, %cst_79 {dimension_numbers = #tpu.dot_dimension_numbers<[1], [0], [0], [1], [0, 0, 1, 1], [], []>} : vector<4x256xf32>, vector<256x256xf32>, vector<4x256xf32> -> vector<4x256xf32>
      %121 = vector.broadcast %119 : vector<1x256xf32> to vector<4x256xf32>
      %122 = arith.mulf %120, %121 : vector<4x256xf32>
      %123 = vector.broadcast %93 : vector<4x1xf32> to vector<4x256xf32>
      %124 = arith.addf %122, %123 : vector<4x256xf32>
      %125 = arith.cmpf ogt, %124, %111 : vector<4x256xf32>
      %126 = arith.select %125, %124, %111 : vector<4x256xi1>, vector<4x256xf32>
      %c1_i32_80 = arith.constant 1 : i32
      %127 = vector.broadcast %c1_i32_80 : i32 to vector<4x256xi32>
      %128 = arith.select %125, %127, %112 : vector<4x256xi1>, vector<4x256xi32>
      %129 = arith.mulf %95, %95 : vector<256x256xf32>
      %130 = arith.mulf %129, %129 : vector<256x256xf32>
      %131 = arith.mulf %130, %95 : vector<256x256xf32>
      %cst_81 = arith.constant 8.000000e-01 : f32
      %132 = vector.broadcast %cst_81 : f32 to vector<256x256xf32>
      %133 = arith.cmpf ogt, %131, %132 : vector<256x256xf32>
      %cst_82 = arith.constant 0.000000e+00 : f32
      %134 = vector.broadcast %cst_82 : f32 to vector<256x256xf32>
      %135 = arith.select %133, %131, %134 : vector<256x256xi1>, vector<256x256xf32>
      %cst_83 = arith.constant dense<0.000000e+00> : vector<256xf32>
      %136 = vector.multi_reduction <add>, %135, %cst_83 [0] : vector<256x256xf32> to vector<256xf32>
      %137 = vector.shape_cast %136 : vector<256xf32> to vector<1x256xf32>
      %138 = tpu.reciprocal %137 {approx = true} : vector<1x256xf32> -> vector<1x256xf32>
      %cst_84 = arith.constant dense<0.000000e+00> : vector<4x256xf32>
      %139 = tpu.matmul %92, %135, %cst_84 {dimension_numbers = #tpu.dot_dimension_numbers<[1], [0], [0], [1], [0, 0, 1, 1], [], []>} : vector<4x256xf32>, vector<256x256xf32>, vector<4x256xf32> -> vector<4x256xf32>
      %140 = vector.broadcast %138 : vector<1x256xf32> to vector<4x256xf32>
      %141 = arith.mulf %139, %140 : vector<4x256xf32>
      %142 = vector.broadcast %93 : vector<4x1xf32> to vector<4x256xf32>
      %143 = arith.addf %141, %142 : vector<4x256xf32>
      %144 = arith.cmpf ogt, %143, %126 : vector<4x256xf32>
      %145 = arith.select %144, %143, %126 : vector<4x256xi1>, vector<4x256xf32>
      %c2_i32_85 = arith.constant 2 : i32
      %146 = vector.broadcast %c2_i32_85 : i32 to vector<4x256xi32>
      %147 = arith.select %144, %146, %128 : vector<4x256xi1>, vector<4x256xi32>
      %148 = arith.mulf %131, %131 : vector<256x256xf32>
      %cst_86 = arith.constant 8.000000e-01 : f32
      %149 = vector.broadcast %cst_86 : f32 to vector<256x256xf32>
      %150 = arith.cmpf ogt, %148, %149 : vector<256x256xf32>
      %cst_87 = arith.constant 0.000000e+00 : f32
      %151 = vector.broadcast %cst_87 : f32 to vector<256x256xf32>
      %152 = arith.select %150, %148, %151 : vector<256x256xi1>, vector<256x256xf32>
      %cst_88 = arith.constant dense<0.000000e+00> : vector<256xf32>
      %153 = vector.multi_reduction <add>, %152, %cst_88 [0] : vector<256x256xf32> to vector<256xf32>
      %154 = vector.shape_cast %153 : vector<256xf32> to vector<1x256xf32>
      %155 = tpu.reciprocal %154 {approx = true} : vector<1x256xf32> -> vector<1x256xf32>
      %cst_89 = arith.constant dense<0.000000e+00> : vector<4x256xf32>
      %156 = tpu.matmul %92, %152, %cst_89 {dimension_numbers = #tpu.dot_dimension_numbers<[1], [0], [0], [1], [0, 0, 1, 1], [], []>} : vector<4x256xf32>, vector<256x256xf32>, vector<4x256xf32> -> vector<4x256xf32>
      %157 = vector.broadcast %155 : vector<1x256xf32> to vector<4x256xf32>
      %158 = arith.mulf %156, %157 : vector<4x256xf32>
      %159 = vector.broadcast %93 : vector<4x1xf32> to vector<4x256xf32>
      %160 = arith.addf %158, %159 : vector<4x256xf32>
      %161 = arith.cmpf ogt, %160, %145 : vector<4x256xf32>
      %162 = arith.select %161, %160, %145 : vector<4x256xi1>, vector<4x256xf32>
      %c3_i32 = arith.constant 3 : i32
      %163 = vector.broadcast %c3_i32 : i32 to vector<4x256xi32>
      %164 = arith.select %161, %163, %147 : vector<4x256xi1>, vector<4x256xi32>
      %165 = arith.mulf %148, %148 : vector<256x256xf32>
      %cst_90 = arith.constant 8.000000e-01 : f32
      %166 = vector.broadcast %cst_90 : f32 to vector<256x256xf32>
      %167 = arith.cmpf ogt, %165, %166 : vector<256x256xf32>
      %cst_91 = arith.constant 0.000000e+00 : f32
      %168 = vector.broadcast %cst_91 : f32 to vector<256x256xf32>
      %169 = arith.select %167, %165, %168 : vector<256x256xi1>, vector<256x256xf32>
      %cst_92 = arith.constant dense<0.000000e+00> : vector<256xf32>
      %170 = vector.multi_reduction <add>, %169, %cst_92 [0] : vector<256x256xf32> to vector<256xf32>
      %171 = vector.shape_cast %170 : vector<256xf32> to vector<1x256xf32>
      %172 = tpu.reciprocal %171 {approx = true} : vector<1x256xf32> -> vector<1x256xf32>
      %cst_93 = arith.constant dense<0.000000e+00> : vector<4x256xf32>
      %173 = tpu.matmul %92, %169, %cst_93 {dimension_numbers = #tpu.dot_dimension_numbers<[1], [0], [0], [1], [0, 0, 1, 1], [], []>} : vector<4x256xf32>, vector<256x256xf32>, vector<4x256xf32> -> vector<4x256xf32>
      %174 = vector.broadcast %172 : vector<1x256xf32> to vector<4x256xf32>
      %175 = arith.mulf %173, %174 : vector<4x256xf32>
      %176 = vector.broadcast %93 : vector<4x1xf32> to vector<4x256xf32>
      %177 = arith.addf %175, %176 : vector<4x256xf32>
      %178 = arith.cmpf ogt, %177, %162 : vector<4x256xf32>
      %179 = arith.select %178, %177, %162 : vector<4x256xi1>, vector<4x256xf32>
      %c4_i32 = arith.constant 4 : i32
      %180 = vector.broadcast %c4_i32 : i32 to vector<4x256xi32>
      %181 = arith.select %178, %180, %164 : vector<4x256xi1>, vector<4x256xi32>
      %182 = arith.mulf %165, %165 : vector<256x256xf32>
      %183 = arith.mulf %182, %148 : vector<256x256xf32>
      %cst_94 = arith.constant 8.000000e-01 : f32
      %184 = vector.broadcast %cst_94 : f32 to vector<256x256xf32>
      %185 = arith.cmpf ogt, %183, %184 : vector<256x256xf32>
      %cst_95 = arith.constant 0.000000e+00 : f32
      %186 = vector.broadcast %cst_95 : f32 to vector<256x256xf32>
      %187 = arith.select %185, %183, %186 : vector<256x256xi1>, vector<256x256xf32>
      %cst_96 = arith.constant dense<0.000000e+00> : vector<256xf32>
      %188 = vector.multi_reduction <add>, %187, %cst_96 [0] : vector<256x256xf32> to vector<256xf32>
      %189 = vector.shape_cast %188 : vector<256xf32> to vector<1x256xf32>
      %190 = tpu.reciprocal %189 {approx = true} : vector<1x256xf32> -> vector<1x256xf32>
      %cst_97 = arith.constant dense<0.000000e+00> : vector<4x256xf32>
      %191 = tpu.matmul %92, %187, %cst_97 {dimension_numbers = #tpu.dot_dimension_numbers<[1], [0], [0], [1], [0, 0, 1, 1], [], []>} : vector<4x256xf32>, vector<256x256xf32>, vector<4x256xf32> -> vector<4x256xf32>
      %192 = vector.broadcast %190 : vector<1x256xf32> to vector<4x256xf32>
      %193 = arith.mulf %191, %192 : vector<4x256xf32>
      %194 = vector.broadcast %93 : vector<4x1xf32> to vector<4x256xf32>
      %195 = arith.addf %193, %194 : vector<4x256xf32>
      %196 = arith.cmpf ogt, %195, %179 : vector<4x256xf32>
      %197 = arith.select %196, %195, %179 : vector<4x256xi1>, vector<4x256xf32>
      %c5_i32 = arith.constant 5 : i32
      %198 = vector.broadcast %c5_i32 : i32 to vector<4x256xi32>
      %199 = arith.select %196, %198, %181 : vector<4x256xi1>, vector<4x256xi32>
      %200 = arith.mulf %183, %183 : vector<256x256xf32>
      %cst_98 = arith.constant 8.000000e-01 : f32
      %201 = vector.broadcast %cst_98 : f32 to vector<256x256xf32>
      %202 = arith.cmpf ogt, %200, %201 : vector<256x256xf32>
      %cst_99 = arith.constant 0.000000e+00 : f32
      %203 = vector.broadcast %cst_99 : f32 to vector<256x256xf32>
      %204 = arith.select %202, %200, %203 : vector<256x256xi1>, vector<256x256xf32>
      %cst_100 = arith.constant dense<0.000000e+00> : vector<256xf32>
      %205 = vector.multi_reduction <add>, %204, %cst_100 [0] : vector<256x256xf32> to vector<256xf32>
      %206 = vector.shape_cast %205 : vector<256xf32> to vector<1x256xf32>
      %207 = tpu.reciprocal %206 {approx = true} : vector<1x256xf32> -> vector<1x256xf32>
      %cst_101 = arith.constant dense<0.000000e+00> : vector<4x256xf32>
      %208 = tpu.matmul %92, %204, %cst_101 {dimension_numbers = #tpu.dot_dimension_numbers<[1], [0], [0], [1], [0, 0, 1, 1], [], []>} : vector<4x256xf32>, vector<256x256xf32>, vector<4x256xf32> -> vector<4x256xf32>
      %209 = vector.broadcast %207 : vector<1x256xf32> to vector<4x256xf32>
      %210 = arith.mulf %208, %209 : vector<4x256xf32>
      %211 = vector.broadcast %93 : vector<4x1xf32> to vector<4x256xf32>
      %212 = arith.addf %210, %211 : vector<4x256xf32>
      %213 = arith.cmpf ogt, %212, %197 : vector<4x256xf32>
      %214 = arith.select %213, %212, %197 : vector<4x256xi1>, vector<4x256xf32>
      %c6_i32 = arith.constant 6 : i32
      %215 = vector.broadcast %c6_i32 : i32 to vector<4x256xi32>
      %216 = arith.select %213, %215, %199 : vector<4x256xi1>, vector<4x256xi32>
      %cst_102 = arith.constant dense<0xFF800000> : vector<256xf32>
      %217 = vector.multi_reduction <maximumf>, %214, %cst_102 [0] : vector<4x256xf32> to vector<256xf32>
      %218 = vector.shape_cast %217 : vector<256xf32> to vector<1x256xf32>
      %219 = vector.broadcast %218 : vector<1x256xf32> to vector<4x256xf32>
      %220 = arith.subf %214, %219 : vector<4x256xf32>
      %221 = math.exp %220 : vector<4x256xf32>
      %cst_103 = arith.constant dense<0.000000e+00> : vector<256xf32>
      %222 = vector.multi_reduction <add>, %221, %cst_103 [0] : vector<4x256xf32> to vector<256xf32>
      %223 = vector.shape_cast %222 : vector<256xf32> to vector<1x256xf32>
      %224 = tpu.reciprocal %223 {approx = true} : vector<1x256xf32> -> vector<1x256xf32>
      %225 = vector.broadcast %224 : vector<1x256xf32> to vector<4x256xf32>
      %226 = arith.mulf %221, %225 : vector<4x256xf32>
      %c0_104 = arith.constant 0 : index
      %c0_105 = arith.constant 0 : index
      %227 = vector.load %arg9[%c0_104, %c0_105] : memref<4x1xf32, #tpu.memory_space<vmem>>, vector<4x1xf32>
      %228 = math.exp %227 : vector<4x1xf32>
      %229 = vector.broadcast %228 : vector<4x1xf32> to vector<4x256xf32>
      %230 = arith.mulf %226, %229 : vector<4x256xf32>
      %cst_106 = arith.constant dense<0xFF800000> : vector<4xf32>
      %231 = vector.multi_reduction <maximumf>, %230, %cst_106 [1] : vector<4x256xf32> to vector<4xf32>
      %232 = vector.shape_cast %231 : vector<4xf32> to vector<4x1xf32>
      %233 = vector.broadcast %232 : vector<4x1xf32> to vector<4x256xf32>
      %234 = arith.subf %230, %233 : vector<4x256xf32>
      %235 = math.exp %234 : vector<4x256xf32>
      %cst_107 = arith.constant dense<0.000000e+00> : vector<4xf32>
      %236 = vector.multi_reduction <add>, %235, %cst_107 [1] : vector<4x256xf32> to vector<4xf32>
      %237 = vector.shape_cast %236 : vector<4xf32> to vector<4x1xf32>
      %238 = tpu.reciprocal %237 {approx = true} : vector<4x1xf32> -> vector<4x1xf32>
      %239 = vector.broadcast %238 : vector<4x1xf32> to vector<4x256xf32>
      %240 = arith.mulf %235, %239 : vector<4x256xf32>
      %241 = arith.mulf %240, %214 : vector<4x256xf32>
      %cst_108 = arith.constant dense<0.000000e+00> : vector<4xf32>
      %242 = vector.multi_reduction <add>, %241, %cst_108 [1] : vector<4x256xf32> to vector<4xf32>
      %243 = vector.shape_cast %242 : vector<4xf32> to vector<4x1xf32>
      %cst_109 = arith.constant 3.100000e+01 : f32
      %244 = vector.broadcast %cst_109 : f32 to vector<4x1xf32>
      %245 = arith.mulf %244, %93 : vector<4x1xf32>
      %246 = arith.addf %243, %245 : vector<4x1xf32>
      %cst_110 = arith.constant 0.000000e+00 : f32
      %247 = vector.broadcast %cst_110 : f32 to vector<4x1xf32>
      %248 = arith.subf %247, %246 : vector<4x1xf32>
      %249 = math.exp %248 : vector<4x1xf32>
      %cst_111 = arith.constant 1.000000e+00 : f32
      %250 = vector.broadcast %cst_111 : f32 to vector<4x1xf32>
      %251 = arith.addf %250, %249 : vector<4x1xf32>
      %cst_112 = arith.constant 1.000000e+00 : f32
      %252 = vector.broadcast %cst_112 : f32 to vector<4x1xf32>
      %253 = arith.divf %252, %251 : vector<4x1xf32>
      %254 = vector.shape_cast %253 : vector<4x1xf32> to vector<4x1xf32>
      %255 = vector.broadcast %254 : vector<4x1xf32> to vector<4x128xf32>
      %c0_113 = arith.constant 0 : index
      %c0_114 = arith.constant 0 : index
      %c0_115 = arith.constant 0 : index
      %256 = vector.load %arg10[%c0_113, %c0_114, %c0_115] : memref<1x4x128xf32, #tpu.memory_space<vmem>>, vector<1x4x128xf32>
      %257 = vector.shape_cast %256 : vector<1x4x128xf32> to vector<4x128xf32>
      %258 = vector.shape_cast %255 : vector<4x128xf32> to vector<1x4x128xf32>
      tpu.vector_store %arg10[%c0_113, %c0_114, %c0_115], %258 {strides = array<i32>} : memref<1x4x128xf32, #tpu.memory_space<vmem>>, vector<1x4x128xf32>,
      %c0_116 = arith.constant 0 : index
      %c0_117 = arith.constant 0 : index
      %c0_118 = arith.constant 0 : index
      %259 = vector.load %arg11[%c0_116, %c0_117, %c0_118] : memref<1x4x256xf32, #tpu.memory_space<vmem>>, vector<1x4x256xf32>
      %260 = vector.shape_cast %259 : vector<1x4x256xf32> to vector<4x256xf32>
      %261 = vector.shape_cast %226 : vector<4x256xf32> to vector<1x4x256xf32>
      tpu.vector_store %arg11[%c0_116, %c0_117, %c0_118], %261 {strides = array<i32>} : memref<1x4x256xf32, #tpu.memory_space<vmem>>, vector<1x4x256xf32>,
      %c0_119 = arith.constant 0 : index
      %c0_120 = arith.constant 0 : index
      %c0_121 = arith.constant 0 : index
      %262 = vector.load %arg12[%c0_119, %c0_120, %c0_121] : memref<1x4x256xf32, #tpu.memory_space<vmem>>, vector<1x4x256xf32>
      %263 = vector.shape_cast %262 : vector<1x4x256xf32> to vector<4x256xf32>
      %264 = vector.shape_cast %240 : vector<4x256xf32> to vector<1x4x256xf32>
      tpu.vector_store %arg12[%c0_119, %c0_120, %c0_121], %264 {strides = array<i32>} : memref<1x4x256xf32, #tpu.memory_space<vmem>>, vector<1x4x256xf32>,
      %c0_122 = arith.constant 0 : index
      %c0_123 = arith.constant 0 : index
      %c0_124 = arith.constant 0 : index
      %265 = vector.load %arg13[%c0_122, %c0_123, %c0_124] : memref<1x4x256xi32, #tpu.memory_space<vmem>>, vector<1x4x256xi32>
      %266 = vector.shape_cast %265 : vector<1x4x256xi32> to vector<4x256xi32>
      %267 = vector.shape_cast %216 : vector<4x256xi32> to vector<1x4x256xi32>
      tpu.vector_store %arg13[%c0_122, %c0_123, %c0_124], %267 {strides = array<i32>} : memref<1x4x256xi32, #tpu.memory_space<vmem>>, vector<1x4x256xi32>,
    } else {
    }
    return
  }
  func.func @transform_0(%arg0: i32, %arg1: i32) -> (i32, i32, i32) {
    %c0_i32 = arith.constant 0 : i32
    %c0_i32_0 = arith.constant 0 : i32
    return %arg0, %arg1, %c0_i32 : i32, i32, i32
  }
  func.func @transform_1(%arg0: i32, %arg1: i32) -> (i32, i32, i32) {
    %c0_i32 = arith.constant 0 : i32
    %c0_i32_0 = arith.constant 0 : i32
    %c0_i32_1 = arith.constant 0 : i32
    return %arg0, %c0_i32, %c0_i32_0 : i32, i32, i32
  }
  func.func @transform_2(%arg0: i32, %arg1: i32) -> (i32, i32) {
    %c0_i32 = arith.constant 0 : i32
    %c0_i32_0 = arith.constant 0 : i32
    %c0_i32_1 = arith.constant 0 : i32
    return %c0_i32, %c0_i32_0 : i32, i32
  }
  func.func @transform_3(%arg0: i32, %arg1: i32) -> (i32, i32, i32, i32) {
    %c0_i32 = arith.constant 0 : i32
    %c0_i32_0 = arith.constant 0 : i32
    %c0_i32_1 = arith.constant 0 : i32
    %c0_i32_2 = arith.constant 0 : i32
    return %arg1, %c0_i32, %c0_i32_0, %c0_i32_1 : i32, i32, i32, i32
  }
  func.func @transform_4(%arg0: i32, %arg1: i32) -> (i32, i32) {
    %c0_i32 = arith.constant 0 : i32
    %c0_i32_0 = arith.constant 0 : i32
    %c0_i32_1 = arith.constant 0 : i32
    return %c0_i32, %c0_i32_0 : i32, i32
  }
  func.func @transform_5(%arg0: i32, %arg1: i32) -> (i32, i32) {
    %c0_i32 = arith.constant 0 : i32
    %c0_i32_0 = arith.constant 0 : i32
    %c0_i32_1 = arith.constant 0 : i32
    return %c0_i32, %c0_i32_0 : i32, i32
  }
  func.func @transform_6(%arg0: i32, %arg1: i32) -> (i32, i32) {
    %c0_i32 = arith.constant 0 : i32
    %c0_i32_0 = arith.constant 0 : i32
    %c0_i32_1 = arith.constant 0 : i32
    return %c0_i32, %c0_i32_0 : i32, i32
  }
  func.func @transform_7(%arg0: i32, %arg1: i32) -> (i32, i32) {
    %c0_i32 = arith.constant 0 : i32
    %c0_i32_0 = arith.constant 0 : i32
    %c0_i32_1 = arith.constant 0 : i32
    return %c0_i32, %c0_i32_0 : i32, i32
  }
  func.func @transform_8(%arg0: i32, %arg1: i32) -> (i32, i32, i32) {
    %c0_i32 = arith.constant 0 : i32
    %c0_i32_0 = arith.constant 0 : i32
    %c0_i32_1 = arith.constant 0 : i32
    return %arg0, %c0_i32, %c0_i32_0 : i32, i32, i32
  }
  func.func @transform_9(%arg0: i32, %arg1: i32) -> (i32, i32, i32) {
    %c0_i32 = arith.constant 0 : i32
    %c0_i32_0 = arith.constant 0 : i32
    %c0_i32_1 = arith.constant 0 : i32
    return %arg0, %c0_i32, %c0_i32_0 : i32, i32, i32
  }
  func.func @transform_10(%arg0: i32, %arg1: i32) -> (i32, i32, i32) {
    %c0_i32 = arith.constant 0 : i32
    %c0_i32_0 = arith.constant 0 : i32
    %c0_i32_1 = arith.constant 0 : i32
    return %arg0, %c0_i32, %c0_i32_0 : i32, i32, i32
  }
  func.func @transform_11(%arg0: i32, %arg1: i32) -> (i32, i32, i32) {
    %c0_i32 = arith.constant 0 : i32
    %c0_i32_0 = arith.constant 0 : i32
    %c0_i32_1 = arith.constant 0 : i32
    return %arg0, %c0_i32, %c0_i32_0 : i32, i32, i32
  }
}

</mosaic_0001>

<llo_original>
// kernel: tpu_custom_call.1
$region0: #{tpu_custom_call.1}
  #allocation0 [shape = 'u32[]', space=smem, size = 0x4, offset = 0x4, fixed_abs, tag = 'smem constant byte address 0x4 - core index']
  #allocation1 [shape = 'u32[144,128]{1,0:T(1,128)}', space=vmem, size = 0x12000, scoped, tag = 'internal scratch']
  #allocation2 [shape = 'f32[32,256]{1,0:T(8,128)}', space=vmem, size = 0x8000, scoped, tag = 'scratch operand']
  %s0 = inlined_call_operand.hbm [shape: f32[2,32,256], index: 0, kind: input, shape index: {}]
  %s1 = inlined_call_operand.hbm [shape: f32[2,256,256], index: 1, kind: input, shape index: {}]
  %s2 = inlined_call_operand.hbm [shape: f32[9,256], index: 2, kind: input, shape index: {}]
  %s3 = inlined_call_operand.hbm [shape: bf16[2,9,32,16], index: 3, kind: input, shape index: {}]
  %s4 = inlined_call_operand.hbm [shape: f32[32,1], index: 4, kind: input, shape index: {}]
  %s5 = inlined_call_operand.hbm [shape: f32[4,32], index: 5, kind: input, shape index: {}]
  %s6 = inlined_call_operand.hbm [shape: f32[4,1], index: 6, kind: input, shape index: {}]
  %s7 = inlined_call_operand.hbm [shape: f32[4,1], index: 7, kind: input, shape index: {}]
  %s8 = inlined_call_operand.hbm [shape: f32[2,4,128], index: 8, kind: output, shape index: {0}]
  %s9 = inlined_call_operand.hbm [shape: f32[2,4,256], index: 9, kind: output, shape index: {1}]
  %s10 = inlined_call_operand.hbm [shape: f32[2,4,256], index: 10, kind: output, shape index: {2}]
  %s11 = inlined_call_operand.hbm [shape: s32[2,4,256], index: 11, kind: output, shape index: {3}]
  %12 = xla_tuple %s8, %s9, %s10, %s11
  %s13 = sld [smem:[#allocation0]]
  $region133: #{tpu_custom_call.1} parent=0
    _
  %s15 = ssub.s32 1, %s13
  %s16 = scalar_select 0, %s15, %s13
  $region1: #{tpu_custom_call.1} parent=0
    #allocation3 [shape = 'u8[32768]{0}', space=vmem, size = 0x8000, scoped, tag = 'input window, operand 0']
    #allocation4 [shape = 's32[2]{0}', space=sflag, size = 0x8, scoped, tag = 'scoped memory for tpu_custom_call.1']
    #allocation5 [shape = 's32[2]{0}', space=sflag, size = 0x8, scoped, tag = 'scoped memory for tpu_custom_call.1']
    #allocation6 [shape = 'u8[524288]{0}', space=vmem, size = 0x80000, scoped, tag = 'input window, operand 1']
    #allocation7 [shape = 's32[2]{0}', space=sflag, size = 0x8, scoped, tag = 'scoped memory for tpu_custom_call.1']
    #allocation8 [shape = 'u8[16384]{0}', space=vmem, size = 0x4000, scoped, tag = 'input window, operand 2, single buffered']
    #allocation9 [shape = 'u8[147456]{0}', space=vmem, size = 0x24000, scoped, tag = 'input window, operand 3']
    #allocation10 [shape = 's32[2]{0}', space=sflag, size = 0x8, scoped, tag = 'scoped memory for tpu_custom_call.1']
    #allocation11 [shape = 'u8[16384]{0}', space=vmem, size = 0x4000, scoped, tag = 'input window, operand 4, single buffered']
    #allocation12 [shape = 'u8[2048]{0}', space=vmem, size = 0x800, scoped, tag = 'input window, operand 5, single buffered']
    #allocation13 [shape = 's32[1]{0}', space=sflag, size = 0x4, scoped, tag = 'scoped memory for tpu_custom_call.1']
    #allocation14 [shape = 'u8[2048]{0}', space=vmem, size = 0x800, scoped, tag = 'input window, operand 6, single buffered']
    #allocation15 [shape = 'u8[2048]{0}', space=vmem, size = 0x800, scoped, tag = 'input window, operand 7, single buffered']
    #allocation16 [shape = 's32[1]{0}', space=sflag, size = 0x4, scoped, tag = 'scoped memory for tpu_custom_call.1']
    #allocation17 [shape = 'u8[4096]{0}', space=vmem, size = 0x1000, scoped, tag = 'output window, operand 0']
    #allocation18 [shape = 'u8[8192]{0}', space=vmem, size = 0x2000, scoped, tag = 'output window, operand 1']
    #allocation19 [shape = 's32[2]{0}', space=sflag, size = 0x8, scoped, tag = 'scoped memory for tpu_custom_call.1']
    #allocation20 [shape = 'u8[8192]{0}', space=vmem, size = 0x2000, scoped, tag = 'output window, operand 2']
    #allocation21 [shape = 'u8[8192]{0}', space=vmem, size = 0x2000, scoped, tag = 'output window, operand 3']
    #allocation22 [shape = 's32[2]{0}', space=sflag, size = 0x8, scoped, tag = 'scoped memory for tpu_custom_call.1']
    %17 = vsyncpa [#allocation4], 0
    %s18 = scalar_lea.sflag [#allocation4], 1
    %19 = vsyncpa %s18, 0
    %20 = vsyncpa [#allocation7], 0
    %s21 = scalar_lea.sflag [#allocation7], 1
    %22 = vsyncpa %s21, 0
    %23 = vsyncpa [#allocation10], 0
    %s24 = scalar_lea.sflag [#allocation10], 1
    %25 = vsyncpa %s24, 0
    %26 = vsyncpa [#allocation13], 0
    %27 = vsyncpa [#allocation16], 0
    %28 = vsyncpa [#allocation5], 0
    %s29 = scalar_lea.sflag [#allocation5], 1
    %30 = vsyncpa %s29, 0
    %31 = vsyncpa [#allocation19], 0
    %s32 = scalar_lea.sflag [#allocation19], 1
    %33 = vsyncpa %s32, 0
    %34 = vsyncpa [#allocation22], 0
    %s35 = scalar_lea.sflag [#allocation22], 1
    %36 = vsyncpa %s35, 0
    loop: start=0, step=1, limit=6
    $region2: #{tpu_custom_call.1} parent=1 // loop_pre_header
      _
    $region3: #{tpu_custom_call.1} parent=1 // loop_header
      %s38 = sphi 0, %s42
      %p39 = scmp.ge.s32.totalorder %s38, 6
      %s45 = sphi 0, %s57
      %s46 = sphi 0, %s53
      %s47 = sphi 0, %s45
      %s48 = sphi 0, %s46
      %s49 = sphi 0, %s47
      %s50 = sphi 0, %s48
      %s62 = sphi 0, %s64
      %s65 = sphi 0, %s62
      %s66 = sphi 0, %s65
      %s82 = sphi 0, %s66
      %s88 = sphi 0, %s90
      %s91 = sphi 0, %s88
      %s92 = sphi 0, %s91
      %s108 = sphi 0, %s92
      %s112 = sphi 0, %s112
      %s114 = sphi 0, %s112
      %s115 = sphi 0, %s114
      %s129 = sphi 0, %s115
      %s135 = sphi 0, %s137
      %s138 = sphi 0, %s135
      %s139 = sphi 0, %s138
      %s155 = sphi 0, %s139
      %s159 = sphi 0, %s159
      %s161 = sphi 0, %s159
      %s162 = sphi 0, %s161
      %s176 = sphi 0, %s162
      %s180 = sphi 0, %s180
      %s182 = sphi 0, %s180
      %s183 = sphi 0, %s182
      %s197 = sphi 0, %s183
      %s201 = sphi 0, %s201
      %s203 = sphi 0, %s201
      %s204 = sphi 0, %s203
      %s218 = sphi 0, %s204
      %s222 = sphi 0, %s222
      %s224 = sphi 0, %s222
      %s225 = sphi 0, %s224
      %s239 = sphi 0, %s225
      %s245 = sphi 0, %s247
      %s248 = sphi 0, %s245
      %s249 = sphi 0, %s248
      %s265 = sphi 0, %s249
      %s271 = sphi 0, %s273
      %s274 = sphi 0, %s271
      %s275 = sphi 0, %s274
      %s291 = sphi 0, %s275
      %s297 = sphi 0, %s299
      %s300 = sphi 0, %s297
      %s301 = sphi 0, %s300
      %s317 = sphi 0, %s301
      %s323 = sphi 0, %s325
      %s326 = sphi 0, %s323
      %s327 = sphi 0, %s326
      %s343 = sphi 0, %s327
    $region4: #{tpu_custom_call.1} parent=1 // loop_header_branch
      %41 = sbr.rel (%p39) target = $region8
    $region5: #{tpu_custom_call.1} parent=1 // loop_body
      %s43 = ssub.s32 %s38, 1
      %s44 = ssub.s32 %s38, 2
      %s51 = sadd.s32 1, %s46
      %p52 = scmp.ge.s32.totalorder %s51, 2
      %s53 = scalar_select %p52, 0, %s51
      %s54 = sadd.s32 1, %s45
      %s55 = scalar_select %p52, %s54, %s45
      %p56 = scmp.ge.s32.totalorder %s55, 2
      %s57 = scalar_select %p56, 0, %s55
      %s58 = ssub.s32 %s45, %s57
      %s59 = ssub.s32 %s46, %s53
      %s60 = sor.u32 %s58, %s59
      %p61 = scmp.eq.s32.totalorder %s60, 0
      %s63 = sadd.s32 %s62, 1
      %s64 = scalar_select %p61, %s62, %s63
      %p67 = pneg %p61
      %p68 = scmp.eq.s32.totalorder %s38, 3
      %p69 = por %p67, %p68
      %p70 = scmp.ne.s32.totalorder %s62, %s65
      %p71 = scmp.eq.s32.totalorder %s38, 0
      %p72 = por %p70, %p71
      %p73 = scmp.ne.s32.totalorder %s62, %s65
      %p74 = scmp.eq.s32.totalorder %s43, 3
      %p75 = por %p73, %p74
      %p76 = scmp.ne.s32.totalorder %s65, %s66
      %p77 = scmp.eq.s32.totalorder %s43, 0
      %p78 = por %p76, %p77
      %p79 = scmp.ne.s32.totalorder %s65, %s66
      %p80 = scmp.eq.s32.totalorder %s44, 3
      %p81 = por %p79, %p80
      %p83 = scmp.ne.s32.totalorder %s66, %s82
      %p84 = scmp.eq.s32.totalorder %s44, 0
      %p85 = por %p83, %p84
      %s86 = ssub.s32 %s45, %s57
      %p87 = scmp.eq.s32.totalorder %s86, 0
      %s89 = sadd.s32 %s88, 1
      %s90 = scalar_select %p87, %s88, %s89
      %p93 = pneg %p87
      %p94 = scmp.eq.s32.totalorder %s38, 3
      %p95 = por %p93, %p94
      %p96 = scmp.ne.s32.totalorder %s88, %s91
      %p97 = scmp.eq.s32.totalorder %s38, 0
      %p98 = por %p96, %p97
      %p99 = scmp.ne.s32.totalorder %s88, %s91
      %p100 = scmp.eq.s32.totalorder %s43, 3
      %p101 = por %p99, %p100
      %p102 = scmp.ne.s32.totalorder %s91, %s92
      %p103 = scmp.eq.s32.totalorder %s43, 0
      %p104 = por %p102, %p103
      %p105 = scmp.ne.s32.totalorder %s91, %s92
      %p106 = scmp.eq.s32.totalorder %s44, 3
      %p107 = por %p105, %p106
      %p109 = scmp.ne.s32.totalorder %s92, %s108
      %p110 = scmp.eq.s32.totalorder %s44, 0
      %p111 = por %p109, %p110
      %s113 = sadd.s32 %s112, 1
      %p116 = scmp.eq.s32.totalorder %s38, 3
      %p117 = scmp.ne.s32.totalorder %s112, %s114
      %p118 = scmp.eq.s32.totalorder %s38, 0
      %p119 = por %p117, %p118
      %p120 = scmp.ne.s32.totalorder %s112, %s114
      %p121 = scmp.eq.s32.totalorder %s43, 3
      %p122 = por %p120, %p121
      %p123 = scmp.ne.s32.totalorder %s114, %s115
      %p124 = scmp.eq.s32.totalorder %s43, 0
      %p125 = por %p123, %p124
      %p126 = scmp.ne.s32.totalorder %s114, %s115
      %p127 = scmp.eq.s32.totalorder %s44, 3
      %p128 = por %p126, %p127
      %p130 = scmp.ne.s32.totalorder %s115, %s129
      %p131 = scmp.eq.s32.totalorder %s44, 0
      %p132 = por %p130, %p131
      %s133 = ssub.s32 %s46, %s53
      %p134 = scmp.eq.s32.totalorder %s133, 0
      %s136 = sadd.s32 %s135, 1
      %s137 = scalar_select %p134, %s135, %s136
      %p140 = pneg %p134
      %p141 = scmp.eq.s32.totalorder %s38, 3
      %p142 = por %p140, %p141
      %p143 = scmp.ne.s32.totalorder %s135, %s138
      %p144 = scmp.eq.s32.totalorder %s38, 0
      %p145 = por %p143, %p144
      %p146 = scmp.ne.s32.totalorder %s135, %s138
      %p147 = scmp.eq.s32.totalorder %s43, 3
      %p148 = por %p146, %p147
      %p149 = scmp.ne.s32.totalorder %s138, %s139
      %p150 = scmp.eq.s32.totalorder %s43, 0
      %p151 = por %p149, %p150
      %p152 = scmp.ne.s32.totalorder %s138, %s139
      %p153 = scmp.eq.s32.totalorder %s44, 3
      %p154 = por %p152, %p153
      %p156 = scmp.ne.s32.totalorder %s139, %s155
      %p157 = scmp.eq.s32.totalorder %s44, 0
      %p158 = por %p156, %p157
      %s160 = sadd.s32 %s159, 1
      %p163 = scmp.eq.s32.totalorder %s38, 3
      %p164 = scmp.ne.s32.totalorder %s159, %s161
      %p165 = scmp.eq.s32.totalorder %s38, 0
      %p166 = por %p164, %p165
      %p167 = scmp.ne.s32.totalorder %s159, %s161
      %p168 = scmp.eq.s32.totalorder %s43, 3
      %p169 = por %p167, %p168
      %p170 = scmp.ne.s32.totalorder %s161, %s162
      %p171 = scmp.eq.s32.totalorder %s43, 0
      %p172 = por %p170, %p171
      %p173 = scmp.ne.s32.totalorder %s161, %s162
      %p174 = scmp.eq.s32.totalorder %s44, 3
      %p175 = por %p173, %p174
      %p177 = scmp.ne.s32.totalorder %s162, %s176
      %p178 = scmp.eq.s32.totalorder %s44, 0
      %p179 = por %p177, %p178
      %s181 = sadd.s32 %s180, 1
      %p184 = scmp.eq.s32.totalorder %s38, 3
      %p185 = scmp.ne.s32.totalorder %s180, %s182
      %p186 = scmp.eq.s32.totalorder %s38, 0
      %p187 = por %p185, %p186
      %p188 = scmp.ne.s32.totalorder %s180, %s182
      %p189 = scmp.eq.s32.totalorder %s43, 3
      %p190 = por %p188, %p189
      %p191 = scmp.ne.s32.totalorder %s182, %s183
      %p192 = scmp.eq.s32.totalorder %s43, 0
      %p193 = por %p191, %p192
      %p194 = scmp.ne.s32.totalorder %s182, %s183
      %p195 = scmp.eq.s32.totalorder %s44, 3
      %p196 = por %p194, %p195
      %p198 = scmp.ne.s32.totalorder %s183, %s197
      %p199 = scmp.eq.s32.totalorder %s44, 0
      %p200 = por %p198, %p199
      %s202 = sadd.s32 %s201, 1
      %p205 = scmp.eq.s32.totalorder %s38, 3
      %p206 = scmp.ne.s32.totalorder %s201, %s203
      %p207 = scmp.eq.s32.totalorder %s38, 0
      %p208 = por %p206, %p207
      %p209 = scmp.ne.s32.totalorder %s201, %s203
      %p210 = scmp.eq.s32.totalorder %s43, 3
      %p211 = por %p209, %p210
      %p212 = scmp.ne.s32.totalorder %s203, %s204
      %p213 = scmp.eq.s32.totalorder %s43, 0
      %p214 = por %p212, %p213
      %p215 = scmp.ne.s32.totalorder %s203, %s204
      %p216 = scmp.eq.s32.totalorder %s44, 3
      %p217 = por %p215, %p216
      %p219 = scmp.ne.s32.totalorder %s204, %s218
      %p220 = scmp.eq.s32.totalorder %s44, 0
      %p221 = por %p219, %p220
      %s223 = sadd.s32 %s222, 1
      %p226 = scmp.eq.s32.totalorder %s38, 3
      %p227 = scmp.ne.s32.totalorder %s222, %s224
      %p228 = scmp.eq.s32.totalorder %s38, 0
      %p229 = por %p227, %p228
      %p230 = scmp.ne.s32.totalorder %s222, %s224
      %p231 = scmp.eq.s32.totalorder %s43, 3
      %p232 = por %p230, %p231
      %p233 = scmp.ne.s32.totalorder %s224, %s225
      %p234 = scmp.eq.s32.totalorder %s43, 0
      %p235 = por %p233, %p234
      %p236 = scmp.ne.s32.totalorder %s224, %s225
      %p237 = scmp.eq.s32.totalorder %s44, 3
      %p238 = por %p236, %p237
      %p240 = scmp.ne.s32.totalorder %s225, %s239
      %p241 = scmp.eq.s32.totalorder %s44, 0
      %p242 = por %p240, %p241
      %s243 = ssub.s32 %s45, %s57
      %p244 = scmp.eq.s32.totalorder %s243, 0
      %s246 = sadd.s32 %s245, 1
      %s247 = scalar_select %p244, %s245, %s246
      %p250 = pneg %p244
      %p251 = scmp.eq.s32.totalorder %s38, 3
      %p252 = por %p250, %p251
      %p253 = scmp.ne.s32.totalorder %s245, %s248
      %p254 = scmp.eq.s32.totalorder %s38, 0
      %p255 = por %p253, %p254
      %p256 = scmp.ne.s32.totalorder %s245, %s248
      %p257 = scmp.eq.s32.totalorder %s43, 3
      %p258 = por %p256, %p257
      %p259 = scmp.ne.s32.totalorder %s248, %s249
      %p260 = scmp.eq.s32.totalorder %s43, 0
      %p261 = por %p259, %p260
      %p262 = scmp.ne.s32.totalorder %s248, %s249
      %p263 = scmp.eq.s32.totalorder %s44, 3
      %p264 = por %p262, %p263
      %p266 = scmp.ne.s32.totalorder %s249, %s265
      %p267 = scmp.eq.s32.totalorder %s44, 0
      %p268 = por %p266, %p267
      %s269 = ssub.s32 %s45, %s57
      %p270 = scmp.eq.s32.totalorder %s269, 0
      %s272 = sadd.s32 %s271, 1
      %s273 = scalar_select %p270, %s271, %s272
      %p276 = pneg %p270
      %p277 = scmp.eq.s32.totalorder %s38, 3
      %p278 = por %p276, %p277
      %p279 = scmp.ne.s32.totalorder %s271, %s274
      %p280 = scmp.eq.s32.totalorder %s38, 0
      %p281 = por %p279, %p280
      %p282 = scmp.ne.s32.totalorder %s271, %s274
      %p283 = scmp.eq.s32.totalorder %s43, 3
      %p284 = por %p282, %p283
      %p285 = scmp.ne.s32.totalorder %s274, %s275
      %p286 = scmp.eq.s32.totalorder %s43, 0
      %p287 = por %p285, %p286
      %p288 = scmp.ne.s32.totalorder %s274, %s275
      %p289 = scmp.eq.s32.totalorder %s44, 3
      %p290 = por %p288, %p289
      %p292 = scmp.ne.s32.totalorder %s275, %s291
      %p293 = scmp.eq.s32.totalorder %s44, 0
      %p294 = por %p292, %p293
      %s295 = ssub.s32 %s45, %s57
      %p296 = scmp.eq.s32.totalorder %s295, 0
      %s298 = sadd.s32 %s297, 1
      %s299 = scalar_select %p296, %s297, %s298
      %p302 = pneg %p296
      %p303 = scmp.eq.s32.totalorder %s38, 3
      %p304 = por %p302, %p303
      %p305 = scmp.ne.s32.totalorder %s297, %s300
      %p306 = scmp.eq.s32.totalorder %s38, 0
      %p307 = por %p305, %p306
      %p308 = scmp.ne.s32.totalorder %s297, %s300
      %p309 = scmp.eq.s32.totalorder %s43, 3
      %p310 = por %p308, %p309
      %p311 = scmp.ne.s32.totalorder %s300, %s301
      %p312 = scmp.eq.s32.totalorder %s43, 0
      %p313 = por %p311, %p312
      %p314 = scmp.ne.s32.totalorder %s300, %s301
      %p315 = scmp.eq.s32.totalorder %s44, 3
      %p316 = por %p314, %p315
      %p318 = scmp.ne.s32.totalorder %s301, %s317
      %p319 = scmp.eq.s32.totalorder %s44, 0
      %p320 = por %p318, %p319
      %s321 = ssub.s32 %s45, %s57
      %p322 = scmp.eq.s32.totalorder %s321, 0
      %s324 = sadd.s32 %s323, 1
      %s325 = scalar_select %p322, %s323, %s324
      %p328 = pneg %p322
      %p329 = scmp.eq.s32.totalorder %s38, 3
      %p330 = por %p328, %p329
      %p331 = scmp.ne.s32.totalorder %s323, %s326
      %p332 = scmp.eq.s32.totalorder %s38, 0
      %p333 = por %p331, %p332
      %p334 = scmp.ne.s32.totalorder %s323, %s326
      %p335 = scmp.eq.s32.totalorder %s43, 3
      %p336 = por %p334, %p335
      %p337 = scmp.ne.s32.totalorder %s326, %s327
      %p338 = scmp.eq.s32.totalorder %s43, 0
      %p339 = por %p337, %p338
      %p340 = scmp.ne.s32.totalorder %s326, %s327
      %p341 = scmp.eq.s32.totalorder %s44, 3
      %p342 = por %p340, %p341
      %p344 = scmp.ne.s32.totalorder %s327, %s343
      %p345 = scmp.eq.s32.totalorder %s44, 0
      %p346 = por %p344, %p345
      %p347 = scmp.le.s32.totalorder 1, %s38
      %p348 = scmp.lt.s32.totalorder %s38, 5
      %p349 = pnand %p347, %p348
      %p350 = pneg %p349
      // Predicated region
      $region9: #{tpu_custom_call.1} parent=5 // pred_check
        _
      $region10: #{tpu_custom_call.1} parent=5 // pred_check_branch
        %352 = sbr.rel (%p349) target = $region12
      $region11: #{tpu_custom_call.1} parent=5 // pred_region
        %s353 = ssub.s32 %s38, 1
        // Predicated region
        $region13: #{tpu_custom_call.1} parent=11 // pred_check
          %p354 = pneg %p125
        $region14: #{tpu_custom_call.1} parent=11 // pred_check_branch
          %356 = sbr.rel (%p354) target = $region16
        $region15: #{tpu_custom_call.1} parent=11 // pred_region
          %s358 = ssub.s32 512, 512
          %359 = vsyncadd [#allocation7], %s358
          %s360 = sshll.u32 [#allocation8], 4
          %s361 = int_to_ptr.vmem [resolvable:$true] %s360
          %366 = dma.hbm_to_vmem [thread:$0]  %s2, 512, %s361, [#allocation7], 256, 256, 16
        $region16: #{tpu_custom_call.1} parent=11 // pred_fallthru
          _
        // Predicated region
        $region17: #{tpu_custom_call.1} parent=11 // pred_check
          %p367 = pneg %p172
        $region18: #{tpu_custom_call.1} parent=11 // pred_check_branch
          %369 = sbr.rel (%p367) target = $region20
        $region19: #{tpu_custom_call.1} parent=11 // pred_region
          %s371 = ssub.s32 512, 512
          %372 = vsyncadd [#allocation10], %s371
          %s373 = sshll.u32 [#allocation11], 4
          %s374 = int_to_ptr.vmem [resolvable:$true] %s373
          %379 = dma.hbm_to_vmem [thread:$0]  %s4, 512, %s374, [#allocation10], 128, 128, 8
        $region20: #{tpu_custom_call.1} parent=11 // pred_fallthru
          _
        // Predicated region
        $region21: #{tpu_custom_call.1} parent=11 // pred_check
          %p380 = pneg %p193
        $region22: #{tpu_custom_call.1} parent=11 // pred_check_branch
          %382 = sbr.rel (%p380) target = $region24
        $region23: #{tpu_custom_call.1} parent=11 // pred_region
          %s384 = ssub.s32 64, 64
          %385 = vsyncadd [#allocation13], %s384
          %s387 = sshll.u32 [#allocation12], 4
          %s388 = int_to_ptr.vmem [resolvable:$true] %s387
          %390 = dma.hbm_to_vmem [thread:$0]  %s5, 64, %s388, [#allocation13]
        $region24: #{tpu_custom_call.1} parent=11 // pred_fallthru
          _
        // Predicated region
        $region25: #{tpu_custom_call.1} parent=11 // pred_check
          %p391 = pneg %p214
        $region26: #{tpu_custom_call.1} parent=11 // pred_check_branch
          %393 = sbr.rel (%p391) target = $region28
        $region27: #{tpu_custom_call.1} parent=11 // pred_region
          %s395 = ssub.s32 64, 64
          %396 = vsyncadd [#allocation13], %s395
          %s398 = sshll.u32 [#allocation14], 4
          %s399 = int_to_ptr.vmem [resolvable:$true] %s398
          %401 = dma.hbm_to_vmem [thread:$0]  %s6, 64, %s399, [#allocation13]
        $region28: #{tpu_custom_call.1} parent=11 // pred_fallthru
          _
        // Predicated region
        $region29: #{tpu_custom_call.1} parent=11 // pred_check
          %p402 = pneg %p235
        $region30: #{tpu_custom_call.1} parent=11 // pred_check_branch
          %404 = sbr.rel (%p402) target = $region32
        $region31: #{tpu_custom_call.1} parent=11 // pred_region
          %s406 = ssub.s32 64, 64
          %407 = vsyncadd [#allocation16], %s406
          %s409 = sshll.u32 [#allocation15], 4
          %s410 = int_to_ptr.vmem [resolvable:$true] %s409
          %412 = dma.hbm_to_vmem [thread:$0]  %s7, 64, %s410, [#allocation16]
        $region32: #{tpu_custom_call.1} parent=11 // pred_fallthru
          _
      $region12: #{tpu_custom_call.1} parent=5 // pred_fallthru
        _
      %p413 = scmp.lt.s32.totalorder %s38, 4
      // Predicated region
      $region33: #{tpu_custom_call.1} parent=5 // pred_check
        %p414 = pneg %p413
      $region34: #{tpu_custom_call.1} parent=5 // pred_check_branch
        %416 = sbr.rel (%p414) target = $region36
      $region35: #{tpu_custom_call.1} parent=5 // pred_region
        // Predicated region
        $region37: #{tpu_custom_call.1} parent=35 // pred_check
          %p417 = pneg %p72
        $region38: #{tpu_custom_call.1} parent=35 // pred_check_branch
          %419 = sbr.rel (%p417) target = $region40
        $region39: #{tpu_custom_call.1} parent=35 // pred_region
          %s420 = sand.u32 %s62, 1
          %s421 = scalar_lea.sflag [#allocation4], %s420
          %s422 = sand.u32 %s62, 1
          %s423 = smul.addr %s422, 32
          %s424 = scalar_lea.vmem [#allocation3], %s423
          %s425 = smul.u32 2, %s46
          %s427 = ssub.s32 512, 512
          %428 = vsyncadd %s421, %s427
          %s429 = smul.addr %s425, 2
          %s430 = smul.addr %s45, 8
          %s431 = sadd.s32 %s429, %s430
          %s432 = smul.addr %s431, 128
          %s433 = scalar_lea.hbm %s0, %s432
          %s434 = sshll.u32 %s424, 4
          %s435 = int_to_ptr.vmem [resolvable:$true] %s434
          %440 = dma.hbm_to_vmem [thread:$0]  %s433, 512, %s435, %s421, 256, 256, 16
        $region40: #{tpu_custom_call.1} parent=35 // pred_fallthru
          _
        // Predicated region
        $region41: #{tpu_custom_call.1} parent=35 // pred_check
          %p441 = pneg %p98
        $region42: #{tpu_custom_call.1} parent=35 // pred_check_branch
          %443 = sbr.rel (%p441) target = $region44
        $region43: #{tpu_custom_call.1} parent=35 // pred_region
          %s444 = sand.u32 %s38, 1
          %s445 = scalar_lea.sflag [#allocation7], %s444
          %s446 = sand.u32 %s88, 1
          %s447 = smul.addr %s446, 512
          %s448 = scalar_lea.vmem [#allocation6], %s447
          %s450 = ssub.s32 8192, 8192
          %451 = vsyncadd %s445, %s450
          %s452 = smul.addr %s45, 64
          %s453 = smul.addr %s452, 128
          %s454 = scalar_lea.hbm %s1, %s453
          %s455 = sshll.u32 %s448, 4
          %s456 = int_to_ptr.vmem [resolvable:$true] %s455
          %461 = dma.hbm_to_vmem [thread:$0]  %s454, 8192, %s456, %s445, 256, 256, 16
        $region44: #{tpu_custom_call.1} parent=35 // pred_fallthru
          _
        // Predicated region
        $region45: #{tpu_custom_call.1} parent=35 // pred_check
          %p462 = pneg %p145
        $region46: #{tpu_custom_call.1} parent=35 // pred_check_branch
          %464 = sbr.rel (%p462) target = $region48
        $region47: #{tpu_custom_call.1} parent=35 // pred_region
          %s465 = sand.u32 %s38, 1
          %s466 = scalar_lea.sflag [#allocation10], %s465
          %s467 = sand.u32 %s135, 1
          %s468 = smul.addr %s467, 144
          %s469 = scalar_lea.vmem [#allocation9], %s468
          %s471 = ssub.s32 2304, 2304
          %472 = vsyncadd %s466, %s471
          %s473 = smul.addr %s46, 36
          %s474 = smul.addr %s473, 64
          %s475 = scalar_lea.hbm %s3, %s474
          %s476 = sshll.u32 %s469, 4
          %s477 = int_to_ptr.vmem [resolvable:$true] %s476
          %482 = dma.hbm_to_vmem [thread:$0]  %s475, 2304, %s477, %s466, 64, 64, 4
        $region48: #{tpu_custom_call.1} parent=35 // pred_fallthru
          _
      $region36: #{tpu_custom_call.1} parent=5 // pred_fallthru
        _
      %p483 = scmp.le.s32.totalorder 1, %s38
      %p484 = scmp.lt.s32.totalorder %s38, 5
      %p485 = pnand %p483, %p484
      %p486 = pneg %p485
      // Predicated region
      $region49: #{tpu_custom_call.1} parent=5 // pred_check
        _
      $region50: #{tpu_custom_call.1} parent=5 // pred_check_branch
        %488 = sbr.rel (%p485) target = $region52
      $region51: #{tpu_custom_call.1} parent=5 // pred_region
        %s489 = ssub.s32 %s38, 1
        %s490 = sand.u32 %s65, 1
        %s491 = scalar_lea.sflag [#allocation4], %s490
        %s492 = sand.u32 %s65, 1
        %s493 = smul.addr %s492, 32
        %s494 = scalar_lea.vmem [#allocation3], %s493
        // Predicated region
        $region53: #{tpu_custom_call.1} parent=51 // pred_check
          %p495 = pneg %p78
        $region54: #{tpu_custom_call.1} parent=51 // pred_check_branch
          %497 = sbr.rel (%p495) target = $region56
        $region55: #{tpu_custom_call.1} parent=51 // pred_region
          %498 = dma.done %s491, 512
        $region56: #{tpu_custom_call.1} parent=51 // pred_fallthru
          _
        %s499 = sand.u32 %s43, 1
        %s500 = scalar_lea.sflag [#allocation7], %s499
        %s501 = sand.u32 %s91, 1
        %s502 = smul.addr %s501, 512
        %s503 = scalar_lea.vmem [#allocation6], %s502
        // Predicated region
        $region57: #{tpu_custom_call.1} parent=51 // pred_check
          %p504 = pneg %p104
        $region58: #{tpu_custom_call.1} parent=51 // pred_check_branch
          %506 = sbr.rel (%p504) target = $region60
        $region59: #{tpu_custom_call.1} parent=51 // pred_region
          %507 = dma.done %s500, 8192
        $region60: #{tpu_custom_call.1} parent=51 // pred_fallthru
          _
        // Predicated region
        $region61: #{tpu_custom_call.1} parent=51 // pred_check
          %p508 = pneg %p125
        $region62: #{tpu_custom_call.1} parent=51 // pred_check_branch
          %510 = sbr.rel (%p508) target = $region64
        $region63: #{tpu_custom_call.1} parent=51 // pred_region
          %511 = dma.done [#allocation7], 512
        $region64: #{tpu_custom_call.1} parent=51 // pred_fallthru
          _
        %s512 = sand.u32 %s43, 1
        %s513 = scalar_lea.sflag [#allocation10], %s512
        %s514 = sand.u32 %s138, 1
        %s515 = smul.addr %s514, 144
        %s516 = scalar_lea.vmem [#allocation9], %s515
        // Predicated region
        $region65: #{tpu_custom_call.1} parent=51 // pred_check
          %p517 = pneg %p151
        $region66: #{tpu_custom_call.1} parent=51 // pred_check_branch
          %519 = sbr.rel (%p517) target = $region68
        $region67: #{tpu_custom_call.1} parent=51 // pred_region
          %520 = dma.done %s513, 2304
        $region68: #{tpu_custom_call.1} parent=51 // pred_fallthru
          _
        // Predicated region
        $region69: #{tpu_custom_call.1} parent=51 // pred_check
          %p521 = pneg %p172
        $region70: #{tpu_custom_call.1} parent=51 // pred_check_branch
          %523 = sbr.rel (%p521) target = $region72
        $region71: #{tpu_custom_call.1} parent=51 // pred_region
          %524 = dma.done [#allocation10], 512
        $region72: #{tpu_custom_call.1} parent=51 // pred_fallthru
          _
        // Predicated region
        $region73: #{tpu_custom_call.1} parent=51 // pred_check
          %p525 = pneg %p193
        $region74: #{tpu_custom_call.1} parent=51 // pred_check_branch
          %527 = sbr.rel (%p525) target = $region76
        $region75: #{tpu_custom_call.1} parent=51 // pred_region
          %528 = dma.done [#allocation13], 64
        $region76: #{tpu_custom_call.1} parent=51 // pred_fallthru
          _
        // Predicated region
        $region77: #{tpu_custom_call.1} parent=51 // pred_check
          %p529 = pneg %p214
        $region78: #{tpu_custom_call.1} parent=51 // pred_check_branch
          %531 = sbr.rel (%p529) target = $region80
        $region79: #{tpu_custom_call.1} parent=51 // pred_region
          %532 = dma.done [#allocation13], 64
        $region80: #{tpu_custom_call.1} parent=51 // pred_fallthru
          _
        // Predicated region
        $region81: #{tpu_custom_call.1} parent=51 // pred_check
          %p533 = pneg %p235
        $region82: #{tpu_custom_call.1} parent=51 // pred_check_branch
          %535 = sbr.rel (%p533) target = $region84
        $region83: #{tpu_custom_call.1} parent=51 // pred_region
          %536 = dma.done [#allocation16], 64
        $region84: #{tpu_custom_call.1} parent=51 // pred_fallthru
          _
        %s537 = sand.u32 %s65, 1
        %s538 = scalar_lea.sflag [#allocation4], %s537
        %s539 = sand.u32 %s65, 1
        %s540 = smul.addr %s539, 32
        %s541 = scalar_lea.vmem [#allocation3], %s540
        %p542 = pneg %p78
        %p543 = pneg %p75
        %s544 = sand.u32 %s43, 1
        %s545 = scalar_lea.sflag [#allocation7], %s544
        %s546 = sand.u32 %s91, 1
        %s547 = smul.addr %s546, 512
        %s548 = scalar_lea.vmem [#allocation6], %s547
        %p549 = pneg %p104
        %p550 = pneg %p101
        %p551 = pneg %p125
        %p552 = pneg %p122
        %s553 = sand.u32 %s43, 1
        %s554 = scalar_lea.sflag [#allocation10], %s553
        %s555 = sand.u32 %s138, 1
        %s556 = smul.addr %s555, 144
        %s557 = scalar_lea.vmem [#allocation9], %s556
        %p558 = pneg %p151
        %p559 = pneg %p148
        %p560 = pneg %p172
        %p561 = pneg %p169
        %p562 = pneg %p193
        %p563 = pneg %p190
        %p564 = pneg %p214
        %p565 = pneg %p211
        %p566 = pneg %p235
        %p567 = pneg %p232
        %p568 = pneg %p261
        %p569 = pneg %p258
        %s570 = sand.u32 %s248, 1
        %s571 = scalar_lea.sflag [#allocation5], %s570
        %s572 = sand.u32 %s248, 1
        %s573 = smul.addr %s572, 4
        %s574 = scalar_lea.vmem [#allocation17], %s573
        %p575 = pneg %p287
        %p576 = pneg %p284
        %s577 = sand.u32 %s43, 1
        %s578 = scalar_lea.sflag [#allocation19], %s577
        %s579 = sand.u32 %s274, 1
        %s580 = smul.addr %s579, 8
        %s581 = scalar_lea.vmem [#allocation18], %s580
        %p582 = pneg %p313
        %p583 = pneg %p310
        %s584 = sand.u32 %s43, 1
        %s585 = scalar_lea.sflag [#allocation19], %s584
        %s586 = sand.u32 %s300, 1
        %s587 = smul.addr %s586, 8
        %s588 = scalar_lea.vmem [#allocation20], %s587
        %p589 = pneg %p339
        %p590 = pneg %p336
        %s591 = sand.u32 %s326, 1
        %s592 = scalar_lea.sflag [#allocation22], %s591
        %s593 = sand.u32 %s326, 1
        %s594 = smul.addr %s593, 8
        %s595 = scalar_lea.vmem [#allocation21], %s594
        %s596 = smul.u32 2, %s48
        %v598 = vld [vmem:[%s494] sm:$0xff]
        %v599 = vld [vmem:[%s494 + $0x8] sm:$0xff]
        %v600 = vld [vmem:[%s494 + $0x10] sm:$0xff]
        %v601 = vld [vmem:[%s494 + $0x18] sm:$0xff]
        %602 = vrot.lane.b32.xlu0 %v598, 34
        %v603 = vpop.permute.xlu0 %602
        %604 = vrot.lane.b32.xlu0 %v600, 34
        %v605 = vpop.permute.xlu0 %604
        %606 = vrot.lane.b32.xlu0 %v599, 34
        %v607 = vpop.permute.xlu0 %606
        %608 = vrot.lane.b32.xlu0 %v601, 34
        %v609 = vpop.permute.xlu0 %608
        %v610 = vlaneseq
        %v611 = vand.u32 %v610, 127
        %vm612 = vcmp.lt.s32.totalorder %v611, 34
        %v613 = vsel %vm612, %v603, %v607
        %v614 = vsel %vm612, %v605, %v609
        %v615 = vsel %vm612, %v607, %v603
        %v616 = vsel %vm612, %v609, %v605
        %v617 = vld [vmem:[#allocation8] ss:$8 sm:$0x3]
        %v619 = vlaneseq
        %v620 = vshrl.u32 %v619, 7
        %v621 = vsub.s32 0, %v620
        %v622 = vrot.slane %v617, %v621
        %v623 = vlaneseq
        %v624 = vshrl.u32 %v623, 7
        %v625 = vsub.s32 1, %v624
        %v626 = vrot.slane %v617, %v625
        %v629 = vmul.f32 %v615, %v622
        %v630 = vmul.f32 %v613, %v626
        %v631 = vmul.f32 %v616, %v622
        %v632 = vmul.f32 %v614, %v626
        %v633 = vld [vmem:[%s516] sm:$0xf]
        %v634 = vld [vmem:[%s516 + $0x4] sm:$0xf]
        %v635 = vld [vmem:[%s516 + $0x8] sm:$0xf]
        %v636 = vld [vmem:[%s516 + $0xc] sm:$0xf]
        %v637 = vpack.c.bf16 %v631, %v629
        %v638 = vpack.c.bf16 %v632, %v630
        %639 = vrot.lane.b32.xlu0 %v598, 32
        %v640 = vpop.permute.xlu0 %639
        %641 = vrot.lane.b32.xlu0 %v600, 32
        %v642 = vpop.permute.xlu0 %641
        %643 = vrot.lane.b32.xlu0 %v599, 32
        %v644 = vpop.permute.xlu0 %643
        %645 = vrot.lane.b32.xlu0 %v601, 32
        %v646 = vpop.permute.xlu0 %645
        %vm647 = vcmp.lt.s32.totalorder %v611, 32
        %v648 = vsel %vm647, %v640, %v644
        %v649 = vsel %vm647, %v642, %v646
        %v650 = vsel %vm647, %v644, %v640
        %v651 = vsel %vm647, %v646, %v642
        %s652 = scalar_lea.vmem [#allocation8], 1
        %v653 = vld [vmem:[%s652] ss:$8 sm:$0x3]
        %v655 = vlaneseq
        %v656 = vshrl.u32 %v655, 7
        %v657 = vsub.s32 0, %v656
        %v658 = vrot.slane %v653, %v657
        %v659 = vlaneseq
        %v660 = vshrl.u32 %v659, 7
        %v661 = vsub.s32 1, %v660
        %v662 = vrot.slane %v653, %v661
        %v665 = vmul.f32 %v650, %v658
        %v666 = vmul.f32 %v648, %v662
        %v667 = vmul.f32 %v651, %v658
        %v668 = vmul.f32 %v649, %v662
        %s669 = scalar_lea.vmem %s516, 16 [#allocation9]
        %v670 = vld [vmem:[%s669] sm:$0xf]
        %v671 = vld [vmem:[%s669 + $0x4] sm:$0xf]
        %v672 = vld [vmem:[%s669 + $0x8] sm:$0xf]
        %v673 = vld [vmem:[%s669 + $0xc] sm:$0xf]
        %v674 = vpack.c.bf16 %v667, %v665
        %v675 = vpack.c.bf16 %v668, %v666
        %v680 = vunpack.c.l.b16 %v670
        %v681 = vunpack.c.l.b16 %v671
        %v682 = vunpack.c.l.b16 %v672
        %v683 = vunpack.c.l.b16 %v673
        %v684 = vpack.c.b16 %v681, %v680
        %v685 = vpack.c.b16 %v683, %v682
        %vm686 = vcmask 130048
        %v688 = vsel %vm686, %v684, 0
        %v691 = vsel %vm686, %v685, 0
        %693 = vmatprep.subr.bf16.mxu0 %v675
        %694 = vmatpush1.bf16.msra.mxu0 %v674
        %695 = vmatprep.subr.bf16.mxu0 0
        %696 = vmatpush1.bf16.msra.mxu0 0
        %697 = vmatprep.subr.bf16.mxu0 0
        %698 = vmatpush1.bf16.msra.mxu0 0
        %699 = vmatprep.subr.bf16.mxu0 0
        %700 = vmatpush1.bf16.msra.mxu0 0
        %701 = vmatprep.subr.bf16.mxu0 0
        %702 = vmatpush1.bf16.msra.mxu0 0
        %703 = vmatprep.subr.bf16.mxu0 0
        %704 = vmatpush1.bf16.msra.mxu0 0
        %705 = vmatprep.subr.bf16.mxu0 0
        %706 = vmatpush1.bf16.msra.mxu0 0
        %707 = vmatprep.subr.bf16.mxu0 0
        %708 = vmatpush1.bf16.msra.mxu0 0
        %709 = vmatprep.subr.bf16.mxu0 0
        %710 = vmatpush1.bf16.msra.mxu0 0
        %711 = vmatprep.subr.bf16.mxu0 0
        %712 = vmatpush1.bf16.msra.mxu0 0
        %713 = vmatprep.subr.bf16.mxu0 0
        %714 = vmatpush1.bf16.msra.mxu0 0
        %715 = vmatprep.subr.bf16.mxu0 0
        %716 = vmatpush1.bf16.msra.mxu0 0
        %717 = vmatprep.subr.bf16.mxu0 0
        %718 = vmatpush1.bf16.msra.mxu0 0
        %719 = vmatprep.subr.bf16.mxu0 0
        %720 = vmatpush1.bf16.msra.mxu0 0
        %721 = vmatprep.subr.bf16.mxu0 0
        %722 = vmatpush1.bf16.msra.mxu0 0
        %723 = vmatprep.subr.bf16.mxu0 0
        %724 = vmatpush1.bf16.msra.mxu0 0
        %725 = vmatprep.mubr.bf16.mxu0 0
        %726 = vmatmul.mubr.bf16.gmra.mrb[0].mxu0 %v688
        %v727 = vpop.f32.mrb[0].mxu0
        %v728 = vadd.f32 0.0, %v727
        %v729 = vpop.f32.mrb[0].mxu0
        %v730 = vadd.f32 0.0, %v729
        %v731 = vpop.f32.mrb[0].mxu0
        %v732 = vadd.f32 0.0, %v731
        %v733 = vpop.f32.mrb[0].mxu0
        %v734 = vadd.f32 0.0, %v733
        %735 = vmatprep.mubr.bf16.mxu0 0
        %736 = vmatmul.mubr.bf16.gmra.mrb[0].mxu0 %v691
        %v737 = vpop.f32.mrb[0].mxu0
        %v738 = vadd.f32 0.0, %v737
        %v739 = vpop.f32.mrb[0].mxu0
        %v740 = vadd.f32 0.0, %v739
        %v741 = vpop.f32.mrb[0].mxu0
        %v742 = vadd.f32 0.0, %v741
        %v743 = vpop.f32.mrb[0].mxu0
        %v744 = vadd.f32 0.0, %v743
        %745 = vdwg.mxu0
        %v750 = vunpack.c.l.b16 %v633
        %v751 = vunpack.c.l.b16 %v634
        %v752 = vunpack.c.l.b16 %v635
        %v753 = vunpack.c.l.b16 %v636
        %v754 = vpack.c.b16 %v751, %v750
        %v755 = vpack.c.b16 %v753, %v752
        %v757 = vsel %vm686, %v754, 0
        %v760 = vsel %vm686, %v755, 0
        %762 = vmatprep.subr.bf16.mxu0 %v638
        %763 = vmatpush1.bf16.msra.mxu0 %v637
        %764 = vmatprep.subr.bf16.mxu0 0
        %765 = vmatpush1.bf16.msra.mxu0 0
        %766 = vmatprep.subr.bf16.mxu0 0
        %767 = vmatpush1.bf16.msra.mxu0 0
        %768 = vmatprep.subr.bf16.mxu0 0
        %769 = vmatpush1.bf16.msra.mxu0 0
        %770 = vmatprep.subr.bf16.mxu0 0
        %771 = vmatpush1.bf16.msra.mxu0 0
        %772 = vmatprep.subr.bf16.mxu0 0
        %773 = vmatpush1.bf16.msra.mxu0 0
        %774 = vmatprep.subr.bf16.mxu0 0
        %775 = vmatpush1.bf16.msra.mxu0 0
        %776 = vmatprep.subr.bf16.mxu0 0
        %777 = vmatpush1.bf16.msra.mxu0 0
        %778 = vmatprep.subr.bf16.mxu0 0
        %779 = vmatpush1.bf16.msra.mxu0 0
        %780 = vmatprep.subr.bf16.mxu0 0
        %781 = vmatpush1.bf16.msra.mxu0 0
        %782 = vmatprep.subr.bf16.mxu0 0
        %783 = vmatpush1.bf16.msra.mxu0 0
        %784 = vmatprep.subr.bf16.mxu0 0
        %785 = vmatpush1.bf16.msra.mxu0 0
        %786 = vmatprep.subr.bf16.mxu0 0
        %787 = vmatpush1.bf16.msra.mxu0 0
        %788 = vmatprep.subr.bf16.mxu0 0
        %789 = vmatpush1.bf16.msra.mxu0 0
        %790 = vmatprep.subr.bf16.mxu0 0
        %791 = vmatpush1.bf16.msra.mxu0 0
        %792 = vmatprep.subr.bf16.mxu0 0
        %793 = vmatpush1.bf16.msra.mxu0 0
        %794 = vmatprep.mubr.bf16.mxu0 0
        %795 = vmatmul.mubr.bf16.gmra.mrb[0].mxu0 %v757
        %v796 = vpop.f32.mrb[0].mxu0
        %v797 = vadd.f32 %v728, %v796
        %v798 = vpop.f32.mrb[0].mxu0
        %v799 = vadd.f32 %v730, %v798
        %v800 = vpop.f32.mrb[0].mxu0
        %v801 = vadd.f32 %v732, %v800
        %v802 = vpop.f32.mrb[0].mxu0
        %v803 = vadd.f32 %v734, %v802
        %804 = vmatprep.mubr.bf16.mxu0 0
        %805 = vmatmul.mubr.bf16.gmra.mrb[0].mxu0 %v760
        %v806 = vpop.f32.mrb[0].mxu0
        %v807 = vadd.f32 %v738, %v806
        %v808 = vpop.f32.mrb[0].mxu0
        %v809 = vadd.f32 %v740, %v808
        %v810 = vpop.f32.mrb[0].mxu0
        %v811 = vadd.f32 %v742, %v810
        %v812 = vpop.f32.mrb[0].mxu0
        %v813 = vadd.f32 %v744, %v812
        %814 = vdwg.mxu0
        %815 = vrot.lane.b32.xlu0 %v598, 30
        %v816 = vpop.permute.xlu0 %815
        %817 = vrot.lane.b32.xlu0 %v600, 30
        %v818 = vpop.permute.xlu0 %817
        %819 = vrot.lane.b32.xlu0 %v599, 30
        %v820 = vpop.permute.xlu0 %819
        %821 = vrot.lane.b32.xlu0 %v601, 30
        %v822 = vpop.permute.xlu0 %821
        %vm823 = vcmp.lt.s32.totalorder %v611, 30
        %v824 = vsel %vm823, %v816, %v820
        %v825 = vsel %vm823, %v818, %v822
        %v826 = vsel %vm823, %v820, %v816
        %v827 = vsel %vm823, %v822, %v818
        %s828 = scalar_lea.vmem [#allocation8], 2
        %v829 = vld [vmem:[%s828] ss:$8 sm:$0x3]
        %v831 = vlaneseq
        %v832 = vshrl.u32 %v831, 7
        %v833 = vsub.s32 0, %v832
        %v834 = vrot.slane %v829, %v833
        %v835 = vlaneseq
        %v836 = vshrl.u32 %v835, 7
        %v837 = vsub.s32 1, %v836
        %v838 = vrot.slane %v829, %v837
        %v841 = vmul.f32 %v826, %v834
        %v842 = vmul.f32 %v824, %v838
        %v843 = vmul.f32 %v827, %v834
        %v844 = vmul.f32 %v825, %v838
        %s845 = scalar_lea.vmem %s516, 32 [#allocation9]
        %v846 = vld [vmem:[%s845] sm:$0xf]
        %v847 = vld [vmem:[%s845 + $0x4] sm:$0xf]
        %v848 = vld [vmem:[%s845 + $0x8] sm:$0xf]
        %v849 = vld [vmem:[%s845 + $0xc] sm:$0xf]
        %v850 = vpack.c.bf16 %v843, %v841
        %v851 = vpack.c.bf16 %v844, %v842
        %v856 = vunpack.c.l.b16 %v846
        %v857 = vunpack.c.l.b16 %v847
        %v858 = vunpack.c.l.b16 %v848
        %v859 = vunpack.c.l.b16 %v849
        %v860 = vpack.c.b16 %v857, %v856
        %v861 = vpack.c.b16 %v859, %v858
        %v863 = vsel %vm686, %v860, 0
        %v866 = vsel %vm686, %v861, 0
        %868 = vmatprep.subr.bf16.mxu0 %v851
        %869 = vmatpush1.bf16.msra.mxu0 %v850
        %870 = vmatprep.subr.bf16.mxu0 0
        %871 = vmatpush1.bf16.msra.mxu0 0
        %872 = vmatprep.subr.bf16.mxu0 0
        %873 = vmatpush1.bf16.msra.mxu0 0
        %874 = vmatprep.subr.bf16.mxu0 0
        %875 = vmatpush1.bf16.msra.mxu0 0
        %876 = vmatprep.subr.bf16.mxu0 0
        %877 = vmatpush1.bf16.msra.mxu0 0
        %878 = vmatprep.subr.bf16.mxu0 0
        %879 = vmatpush1.bf16.msra.mxu0 0
        %880 = vmatprep.subr.bf16.mxu0 0
        %881 = vmatpush1.bf16.msra.mxu0 0
        %882 = vmatprep.subr.bf16.mxu0 0
        %883 = vmatpush1.bf16.msra.mxu0 0
        %884 = vmatprep.subr.bf16.mxu0 0
        %885 = vmatpush1.bf16.msra.mxu0 0
        %886 = vmatprep.subr.bf16.mxu0 0
        %887 = vmatpush1.bf16.msra.mxu0 0
        %888 = vmatprep.subr.bf16.mxu0 0
        %889 = vmatpush1.bf16.msra.mxu0 0
        %890 = vmatprep.subr.bf16.mxu0 0
        %891 = vmatpush1.bf16.msra.mxu0 0
        %892 = vmatprep.subr.bf16.mxu0 0
        %893 = vmatpush1.bf16.msra.mxu0 0
        %894 = vmatprep.subr.bf16.mxu0 0
        %895 = vmatpush1.bf16.msra.mxu0 0
        %896 = vmatprep.subr.bf16.mxu0 0
        %897 = vmatpush1.bf16.msra.mxu0 0
        %898 = vmatprep.subr.bf16.mxu0 0
        %899 = vmatpush1.bf16.msra.mxu0 0
        %900 = vmatprep.mubr.bf16.mxu0 0
        %901 = vmatmul.mubr.bf16.gmra.mrb[0].mxu0 %v863
        %v902 = vpop.f32.mrb[0].mxu0
        %v903 = vadd.f32 0.0, %v902
        %v904 = vpop.f32.mrb[0].mxu0
        %v905 = vadd.f32 0.0, %v904
        %v906 = vpop.f32.mrb[0].mxu0
        %v907 = vadd.f32 0.0, %v906
        %v908 = vpop.f32.mrb[0].mxu0
        %v909 = vadd.f32 0.0, %v908
        %910 = vmatprep.mubr.bf16.mxu0 0
        %911 = vmatmul.mubr.bf16.gmra.mrb[0].mxu0 %v866
        %v912 = vpop.f32.mrb[0].mxu0
        %v913 = vadd.f32 0.0, %v912
        %v914 = vpop.f32.mrb[0].mxu0
        %v915 = vadd.f32 0.0, %v914
        %v916 = vpop.f32.mrb[0].mxu0
        %v917 = vadd.f32 0.0, %v916
        %v918 = vpop.f32.mrb[0].mxu0
        %v919 = vadd.f32 0.0, %v918
        %920 = vdwg.mxu0
        %v921 = vadd.f32 %v797, %v903
        %v922 = vadd.f32 %v799, %v905
        %v923 = vadd.f32 %v801, %v907
        %v924 = vadd.f32 %v803, %v909
        %v925 = vadd.f32 %v807, %v913
        %v926 = vadd.f32 %v809, %v915
        %v927 = vadd.f32 %v811, %v917
        %v928 = vadd.f32 %v813, %v919
        %929 = vrot.lane.b32.xlu0 %v598, 2
        %v930 = vpop.permute.xlu0 %929
        %931 = vrot.lane.b32.xlu0 %v600, 2
        %v932 = vpop.permute.xlu0 %931
        %933 = vrot.lane.b32.xlu0 %v599, 2
        %v934 = vpop.permute.xlu0 %933
        %935 = vrot.lane.b32.xlu0 %v601, 2
        %v936 = vpop.permute.xlu0 %935
        %vm937 = vcmp.lt.s32.totalorder %v611, 2
        %v938 = vsel %vm937, %v930, %v934
        %v939 = vsel %vm937, %v932, %v936
        %v940 = vsel %vm937, %v934, %v930
        %v941 = vsel %vm937, %v936, %v932
        %s942 = scalar_lea.vmem [#allocation8], 3
        %v943 = vld [vmem:[%s942] ss:$8 sm:$0x3]
        %v945 = vlaneseq
        %v946 = vshrl.u32 %v945, 7
        %v947 = vsub.s32 0, %v946
        %v948 = vrot.slane %v943, %v947
        %v949 = vlaneseq
        %v950 = vshrl.u32 %v949, 7
        %v951 = vsub.s32 1, %v950
        %v952 = vrot.slane %v943, %v951
        %v955 = vmul.f32 %v940, %v948
        %v956 = vmul.f32 %v938, %v952
        %v957 = vmul.f32 %v941, %v948
        %v958 = vmul.f32 %v939, %v952
        %s959 = scalar_lea.vmem %s516, 48 [#allocation9]
        %v960 = vld [vmem:[%s959] sm:$0xf]
        %v961 = vld [vmem:[%s959 + $0x4] sm:$0xf]
        %v962 = vld [vmem:[%s959 + $0x8] sm:$0xf]
        %v963 = vld [vmem:[%s959 + $0xc] sm:$0xf]
        %v964 = vpack.c.bf16 %v957, %v955
        %v965 = vpack.c.bf16 %v958, %v956
        %v970 = vunpack.c.l.b16 %v960
        %v971 = vunpack.c.l.b16 %v961
        %v972 = vunpack.c.l.b16 %v962
        %v973 = vunpack.c.l.b16 %v963
        %v974 = vpack.c.b16 %v971, %v970
        %v975 = vpack.c.b16 %v973, %v972
        %v977 = vsel %vm686, %v974, 0
        %v980 = vsel %vm686, %v975, 0
        %982 = vmatprep.subr.bf16.mxu0 %v965
        %983 = vmatpush1.bf16.msra.mxu0 %v964
        %984 = vmatprep.subr.bf16.mxu0 0
        %985 = vmatpush1.bf16.msra.mxu0 0
        %986 = vmatprep.subr.bf16.mxu0 0
        %987 = vmatpush1.bf16.msra.mxu0 0
        %988 = vmatprep.subr.bf16.mxu0 0
        %989 = vmatpush1.bf16.msra.mxu0 0
        %990 = vmatprep.subr.bf16.mxu0 0
        %991 = vmatpush1.bf16.msra.mxu0 0
        %992 = vmatprep.subr.bf16.mxu0 0
        %993 = vmatpush1.bf16.msra.mxu0 0
        %994 = vmatprep.subr.bf16.mxu0 0
        %995 = vmatpush1.bf16.msra.mxu0 0
        %996 = vmatprep.subr.bf16.mxu0 0
        %997 = vmatpush1.bf16.msra.mxu0 0
        %998 = vmatprep.subr.bf16.mxu0 0
        %999 = vmatpush1.bf16.msra.mxu0 0
        %1000 = vmatprep.subr.bf16.mxu0 0
        %1001 = vmatpush1.bf16.msra.mxu0 0
        %1002 = vmatprep.subr.bf16.mxu0 0
        %1003 = vmatpush1.bf16.msra.mxu0 0
        %1004 = vmatprep.subr.bf16.mxu0 0
        %1005 = vmatpush1.bf16.msra.mxu0 0
        %1006 = vmatprep.subr.bf16.mxu0 0
        %1007 = vmatpush1.bf16.msra.mxu0 0
        %1008 = vmatprep.subr.bf16.mxu0 0
        %1009 = vmatpush1.bf16.msra.mxu0 0
        %1010 = vmatprep.subr.bf16.mxu0 0
        %1011 = vmatpush1.bf16.msra.mxu0 0
        %1012 = vmatprep.subr.bf16.mxu0 0
        %1013 = vmatpush1.bf16.msra.mxu0 0
        %1014 = vmatprep.mubr.bf16.mxu0 0
        %1015 = vmatmul.mubr.bf16.gmra.mrb[0].mxu0 %v977
        %v1016 = vpop.f32.mrb[0].mxu0
        %v1017 = vadd.f32 0.0, %v1016
        %v1018 = vpop.f32.mrb[0].mxu0
        %v1019 = vadd.f32 0.0, %v1018
        %v1020 = vpop.f32.mrb[0].mxu0
        %v1021 = vadd.f32 0.0, %v1020
        %v1022 = vpop.f32.mrb[0].mxu0
        %v1023 = vadd.f32 0.0, %v1022
        %1024 = vmatprep.mubr.bf16.mxu0 0
        %1025 = vmatmul.mubr.bf16.gmra.mrb[0].mxu0 %v980
        %v1026 = vpop.f32.mrb[0].mxu0
        %v1027 = vadd.f32 0.0, %v1026
        %v1028 = vpop.f32.mrb[0].mxu0
        %v1029 = vadd.f32 0.0, %v1028
        %v1030 = vpop.f32.mrb[0].mxu0
        %v1031 = vadd.f32 0.0, %v1030
        %v1032 = vpop.f32.mrb[0].mxu0
        %v1033 = vadd.f32 0.0, %v1032
        %1034 = vdwg.mxu0
        %v1035 = vadd.f32 %v921, %v1017
        %v1036 = vadd.f32 %v922, %v1019
        %v1037 = vadd.f32 %v923, %v1021
        %v1038 = vadd.f32 %v924, %v1023
        %v1039 = vadd.f32 %v925, %v1027
        %v1040 = vadd.f32 %v926, %v1029
        %v1041 = vadd.f32 %v927, %v1031
        %v1042 = vadd.f32 %v928, %v1033
        %s1043 = scalar_lea.vmem %s516, 64 [#allocation9]
        %v1044 = vld [vmem:[%s1043] sm:$0xf]
        %v1045 = vld [vmem:[%s1043 + $0x4] sm:$0xf]
        %v1046 = vld [vmem:[%s1043 + $0x8] sm:$0xf]
        %v1047 = vld [vmem:[%s1043 + $0xc] sm:$0xf]
        %v1048 = vpack.c.bf16 %v600, %v598
        %v1049 = vpack.c.bf16 %v601, %v599
        %v1054 = vunpack.c.l.b16 %v1044
        %v1055 = vunpack.c.l.b16 %v1045
        %v1056 = vunpack.c.l.b16 %v1046
        %v1057 = vunpack.c.l.b16 %v1047
        %v1058 = vpack.c.b16 %v1055, %v1054
        %v1059 = vpack.c.b16 %v1057, %v1056
        %v1061 = vsel %vm686, %v1058, 0
        %v1064 = vsel %vm686, %v1059, 0
        %1066 = vmatprep.subr.bf16.mxu0 %v1049
        %1067 = vmatpush1.bf16.msra.mxu0 %v1048
        %1068 = vmatprep.subr.bf16.mxu0 0
        %1069 = vmatpush1.bf16.msra.mxu0 0
        %1070 = vmatprep.subr.bf16.mxu0 0
        %1071 = vmatpush1.bf16.msra.mxu0 0
        %1072 = vmatprep.subr.bf16.mxu0 0
        %1073 = vmatpush1.bf16.msra.mxu0 0
        %1074 = vmatprep.subr.bf16.mxu0 0
        %1075 = vmatpush1.bf16.msra.mxu0 0
        %1076 = vmatprep.subr.bf16.mxu0 0
        %1077 = vmatpush1.bf16.msra.mxu0 0
        %1078 = vmatprep.subr.bf16.mxu0 0
        %1079 = vmatpush1.bf16.msra.mxu0 0
        %1080 = vmatprep.subr.bf16.mxu0 0
        %1081 = vmatpush1.bf16.msra.mxu0 0
        %1082 = vmatprep.subr.bf16.mxu0 0
        %1083 = vmatpush1.bf16.msra.mxu0 0
        %1084 = vmatprep.subr.bf16.mxu0 0
        %1085 = vmatpush1.bf16.msra.mxu0 0
        %1086 = vmatprep.subr.bf16.mxu0 0
        %1087 = vmatpush1.bf16.msra.mxu0 0
        %1088 = vmatprep.subr.bf16.mxu0 0
        %1089 = vmatpush1.bf16.msra.mxu0 0
        %1090 = vmatprep.subr.bf16.mxu0 0
        %1091 = vmatpush1.bf16.msra.mxu0 0
        %1092 = vmatprep.subr.bf16.mxu0 0
        %1093 = vmatpush1.bf16.msra.mxu0 0
        %1094 = vmatprep.subr.bf16.mxu0 0
        %1095 = vmatpush1.bf16.msra.mxu0 0
        %1096 = vmatprep.subr.bf16.mxu0 0
        %1097 = vmatpush1.bf16.msra.mxu0 0
        %1098 = vmatprep.mubr.bf16.mxu0 0
        %1099 = vmatmul.mubr.bf16.gmra.mrb[0].mxu0 %v1061
        %v1100 = vpop.f32.mrb[0].mxu0
        %v1101 = vadd.f32 0.0, %v1100
        %v1102 = vpop.f32.mrb[0].mxu0
        %v1103 = vadd.f32 0.0, %v1102
        %v1104 = vpop.f32.mrb[0].mxu0
        %v1105 = vadd.f32 0.0, %v1104
        %v1106 = vpop.f32.mrb[0].mxu0
        %v1107 = vadd.f32 0.0, %v1106
        %1108 = vmatprep.mubr.bf16.mxu0 0
        %1109 = vmatmul.mubr.bf16.gmra.mrb[0].mxu0 %v1064
        %v1110 = vpop.f32.mrb[0].mxu0
        %v1111 = vadd.f32 0.0, %v1110
        %v1112 = vpop.f32.mrb[0].mxu0
        %v1113 = vadd.f32 0.0, %v1112
        %v1114 = vpop.f32.mrb[0].mxu0
        %v1115 = vadd.f32 0.0, %v1114
        %v1116 = vpop.f32.mrb[0].mxu0
        %v1117 = vadd.f32 0.0, %v1116
        %1118 = vdwg.mxu0
        %v1119 = vadd.f32 %v1035, %v1101
        %v1120 = vadd.f32 %v1036, %v1103
        %v1121 = vadd.f32 %v1037, %v1105
        %v1122 = vadd.f32 %v1038, %v1107
        %v1123 = vadd.f32 %v1039, %v1111
        %v1124 = vadd.f32 %v1040, %v1113
        %v1125 = vadd.f32 %v1041, %v1115
        %v1126 = vadd.f32 %v1042, %v1117
        %1127 = vrot.lane.b32.xlu0 %v598, 126
        %v1128 = vpop.permute.xlu0 %1127
        %1129 = vrot.lane.b32.xlu0 %v600, 126
        %v1130 = vpop.permute.xlu0 %1129
        %1131 = vrot.lane.b32.xlu0 %v599, 126
        %v1132 = vpop.permute.xlu0 %1131
        %1133 = vrot.lane.b32.xlu0 %v601, 126
        %v1134 = vpop.permute.xlu0 %1133
        %vm1135 = vcmp.lt.s32.totalorder %v611, 126
        %v1136 = vsel %vm1135, %v1128, %v1132
        %v1137 = vsel %vm1135, %v1130, %v1134
        %v1138 = vsel %vm1135, %v1132, %v1128
        %v1139 = vsel %vm1135, %v1134, %v1130
        %s1140 = scalar_lea.vmem [#allocation8], 5
        %v1141 = vld [vmem:[%s1140] ss:$8 sm:$0x3]
        %v1143 = vlaneseq
        %v1144 = vshrl.u32 %v1143, 7
        %v1145 = vsub.s32 0, %v1144
        %v1146 = vrot.slane %v1141, %v1145
        %v1147 = vlaneseq
        %v1148 = vshrl.u32 %v1147, 7
        %v1149 = vsub.s32 1, %v1148
        %v1150 = vrot.slane %v1141, %v1149
        %v1153 = vmul.f32 %v1136, %v1146
        %v1154 = vmul.f32 %v1138, %v1150
        %v1155 = vmul.f32 %v1137, %v1146
        %v1156 = vmul.f32 %v1139, %v1150
        %s1157 = scalar_lea.vmem %s516, 80 [#allocation9]
        %v1158 = vld [vmem:[%s1157] sm:$0xf]
        %v1159 = vld [vmem:[%s1157 + $0x4] sm:$0xf]
        %v1160 = vld [vmem:[%s1157 + $0x8] sm:$0xf]
        %v1161 = vld [vmem:[%s1157 + $0xc] sm:$0xf]
        %v1162 = vpack.c.bf16 %v1155, %v1153
        %v1163 = vpack.c.bf16 %v1156, %v1154
        %v1168 = vunpack.c.l.b16 %v1158
        %v1169 = vunpack.c.l.b16 %v1159
        %v1170 = vunpack.c.l.b16 %v1160
        %v1171 = vunpack.c.l.b16 %v1161
        %v1172 = vpack.c.b16 %v1169, %v1168
        %v1173 = vpack.c.b16 %v1171, %v1170
        %v1175 = vsel %vm686, %v1172, 0
        %v1178 = vsel %vm686, %v1173, 0
        %1180 = vmatprep.subr.bf16.mxu0 %v1163
        %1181 = vmatpush1.bf16.msra.mxu0 %v1162
        %1182 = vmatprep.subr.bf16.mxu0 0
        %1183 = vmatpush1.bf16.msra.mxu0 0
        %1184 = vmatprep.subr.bf16.mxu0 0
        %1185 = vmatpush1.bf16.msra.mxu0 0
        %1186 = vmatprep.subr.bf16.mxu0 0
        %1187 = vmatpush1.bf16.msra.mxu0 0
        %1188 = vmatprep.subr.bf16.mxu0 0
        %1189 = vmatpush1.bf16.msra.mxu0 0
        %1190 = vmatprep.subr.bf16.mxu0 0
        %1191 = vmatpush1.bf16.msra.mxu0 0
        %1192 = vmatprep.subr.bf16.mxu0 0
        %1193 = vmatpush1.bf16.msra.mxu0 0
        %1194 = vmatprep.subr.bf16.mxu0 0
        %1195 = vmatpush1.bf16.msra.mxu0 0
        %1196 = vmatprep.subr.bf16.mxu0 0
        %1197 = vmatpush1.bf16.msra.mxu0 0
        %1198 = vmatprep.subr.bf16.mxu0 0
        %1199 = vmatpush1.bf16.msra.mxu0 0
        %1200 = vmatprep.subr.bf16.mxu0 0
        %1201 = vmatpush1.bf16.msra.mxu0 0
        %1202 = vmatprep.subr.bf16.mxu0 0
        %1203 = vmatpush1.bf16.msra.mxu0 0
        %1204 = vmatprep.subr.bf16.mxu0 0
        %1205 = vmatpush1.bf16.msra.mxu0 0
        %1206 = vmatprep.subr.bf16.mxu0 0
        %1207 = vmatpush1.bf16.msra.mxu0 0
        %1208 = vmatprep.subr.bf16.mxu0 0
        %1209 = vmatpush1.bf16.msra.mxu0 0
        %1210 = vmatprep.subr.bf16.mxu0 0
        %1211 = vmatpush1.bf16.msra.mxu0 0
        %1212 = vmatprep.mubr.bf16.mxu0 0
        %1213 = vmatmul.mubr.bf16.gmra.mrb[0].mxu0 %v1175
        %v1214 = vpop.f32.mrb[0].mxu0
        %v1215 = vadd.f32 0.0, %v1214
        %v1216 = vpop.f32.mrb[0].mxu0
        %v1217 = vadd.f32 0.0, %v1216
        %v1218 = vpop.f32.mrb[0].mxu0
        %v1219 = vadd.f32 0.0, %v1218
        %v1220 = vpop.f32.mrb[0].mxu0
        %v1221 = vadd.f32 0.0, %v1220
        %1222 = vmatprep.mubr.bf16.mxu0 0
        %1223 = vmatmul.mubr.bf16.gmra.mrb[0].mxu0 %v1178
        %v1224 = vpop.f32.mrb[0].mxu0
        %v1225 = vadd.f32 0.0, %v1224
        %v1226 = vpop.f32.mrb[0].mxu0
        %v1227 = vadd.f32 0.0, %v1226
        %v1228 = vpop.f32.mrb[0].mxu0
        %v1229 = vadd.f32 0.0, %v1228
        %v1230 = vpop.f32.mrb[0].mxu0
        %v1231 = vadd.f32 0.0, %v1230
        %1232 = vdwg.mxu0
        %v1233 = vadd.f32 %v1119, %v1215
        %v1234 = vadd.f32 %v1120, %v1217
        %v1235 = vadd.f32 %v1121, %v1219
        %v1236 = vadd.f32 %v1122, %v1221
        %v1237 = vadd.f32 %v1123, %v1225
        %v1238 = vadd.f32 %v1124, %v1227
        %v1239 = vadd.f32 %v1125, %v1229
        %v1240 = vadd.f32 %v1126, %v1231
        %1241 = vrot.lane.b32.xlu0 %v598, 98
        %v1242 = vpop.permute.xlu0 %1241
        %1243 = vrot.lane.b32.xlu0 %v600, 98
        %v1244 = vpop.permute.xlu0 %1243
        %1245 = vrot.lane.b32.xlu0 %v599, 98
        %v1246 = vpop.permute.xlu0 %1245
        %1247 = vrot.lane.b32.xlu0 %v601, 98
        %v1248 = vpop.permute.xlu0 %1247
        %vm1249 = vcmp.lt.s32.totalorder %v611, 98
        %v1250 = vsel %vm1249, %v1242, %v1246
        %v1251 = vsel %vm1249, %v1244, %v1248
        %v1252 = vsel %vm1249, %v1246, %v1242
        %v1253 = vsel %vm1249, %v1248, %v1244
        %s1254 = scalar_lea.vmem [#allocation8], 6
        %v1255 = vld [vmem:[%s1254] ss:$8 sm:$0x3]
        %v1257 = vlaneseq
        %v1258 = vshrl.u32 %v1257, 7
        %v1259 = vsub.s32 0, %v1258
        %v1260 = vrot.slane %v1255, %v1259
        %v1261 = vlaneseq
        %v1262 = vshrl.u32 %v1261, 7
        %v1263 = vsub.s32 1, %v1262
        %v1264 = vrot.slane %v1255, %v1263
        %v1267 = vmul.f32 %v1250, %v1260
        %v1268 = vmul.f32 %v1252, %v1264
        %v1269 = vmul.f32 %v1251, %v1260
        %v1270 = vmul.f32 %v1253, %v1264
        %s1271 = scalar_lea.vmem %s516, 96 [#allocation9]
        %v1272 = vld [vmem:[%s1271] sm:$0xf]
        %v1273 = vld [vmem:[%s1271 + $0x4] sm:$0xf]
        %v1274 = vld [vmem:[%s1271 + $0x8] sm:$0xf]
        %v1275 = vld [vmem:[%s1271 + $0xc] sm:$0xf]
        %v1276 = vpack.c.bf16 %v1269, %v1267
        %v1277 = vpack.c.bf16 %v1270, %v1268
        %v1282 = vunpack.c.l.b16 %v1272
        %v1283 = vunpack.c.l.b16 %v1273
        %v1284 = vunpack.c.l.b16 %v1274
        %v1285 = vunpack.c.l.b16 %v1275
        %v1286 = vpack.c.b16 %v1283, %v1282
        %v1287 = vpack.c.b16 %v1285, %v1284
        %v1289 = vsel %vm686, %v1286, 0
        %v1292 = vsel %vm686, %v1287, 0
        %1294 = vmatprep.subr.bf16.mxu0 %v1277
        %1295 = vmatpush1.bf16.msra.mxu0 %v1276
        %1296 = vmatprep.subr.bf16.mxu0 0
        %1297 = vmatpush1.bf16.msra.mxu0 0
        %1298 = vmatprep.subr.bf16.mxu0 0
        %1299 = vmatpush1.bf16.msra.mxu0 0
        %1300 = vmatprep.subr.bf16.mxu0 0
        %1301 = vmatpush1.bf16.msra.mxu0 0
        %1302 = vmatprep.subr.bf16.mxu0 0
        %1303 = vmatpush1.bf16.msra.mxu0 0
        %1304 = vmatprep.subr.bf16.mxu0 0
        %1305 = vmatpush1.bf16.msra.mxu0 0
        %1306 = vmatprep.subr.bf16.mxu0 0
        %1307 = vmatpush1.bf16.msra.mxu0 0
        %1308 = vmatprep.subr.bf16.mxu0 0
        %1309 = vmatpush1.bf16.msra.mxu0 0
        %1310 = vmatprep.subr.bf16.mxu0 0
        %1311 = vmatpush1.bf16.msra.mxu0 0
        %1312 = vmatprep.subr.bf16.mxu0 0
        %1313 = vmatpush1.bf16.msra.mxu0 0
        %1314 = vmatprep.subr.bf16.mxu0 0
        %1315 = vmatpush1.bf16.msra.mxu0 0
        %1316 = vmatprep.subr.bf16.mxu0 0
        %1317 = vmatpush1.bf16.msra.mxu0 0
        %1318 = vmatprep.subr.bf16.mxu0 0
        %1319 = vmatpush1.bf16.msra.mxu0 0
        %1320 = vmatprep.subr.bf16.mxu0 0
        %1321 = vmatpush1.bf16.msra.mxu0 0
        %1322 = vmatprep.subr.bf16.mxu0 0
        %1323 = vmatpush1.bf16.msra.mxu0 0
        %1324 = vmatprep.subr.bf16.mxu0 0
        %1325 = vmatpush1.bf16.msra.mxu0 0
        %1326 = vmatprep.mubr.bf16.mxu0 0
        %1327 = vmatmul.mubr.bf16.gmra.mrb[0].mxu0 %v1289
        %v1328 = vpop.f32.mrb[0].mxu0
        %v1329 = vadd.f32 0.0, %v1328
        %v1330 = vpop.f32.mrb[0].mxu0
        %v1331 = vadd.f32 0.0, %v1330
        %v1332 = vpop.f32.mrb[0].mxu0
        %v1333 = vadd.f32 0.0, %v1332
        %v1334 = vpop.f32.mrb[0].mxu0
        %v1335 = vadd.f32 0.0, %v1334
        %1336 = vmatprep.mubr.bf16.mxu0 0
        %1337 = vmatmul.mubr.bf16.gmra.mrb[0].mxu0 %v1292
        %v1338 = vpop.f32.mrb[0].mxu0
        %v1339 = vadd.f32 0.0, %v1338
        %v1340 = vpop.f32.mrb[0].mxu0
        %v1341 = vadd.f32 0.0, %v1340
        %v1342 = vpop.f32.mrb[0].mxu0
        %v1343 = vadd.f32 0.0, %v1342
        %v1344 = vpop.f32.mrb[0].mxu0
        %v1345 = vadd.f32 0.0, %v1344
        %1346 = vdwg.mxu0
        %v1347 = vadd.f32 %v1233, %v1329
        %v1348 = vadd.f32 %v1234, %v1331
        %v1349 = vadd.f32 %v1235, %v1333
        %v1350 = vadd.f32 %v1236, %v1335
        %v1351 = vadd.f32 %v1237, %v1339
        %v1352 = vadd.f32 %v1238, %v1341
        %v1353 = vadd.f32 %v1239, %v1343
        %v1354 = vadd.f32 %v1240, %v1345
        %1355 = vrot.lane.b32.xlu0 %v598, 96
        %v1356 = vpop.permute.xlu0 %1355
        %1357 = vrot.lane.b32.xlu0 %v600, 96
        %v1358 = vpop.permute.xlu0 %1357
        %1359 = vrot.lane.b32.xlu0 %v599, 96
        %v1360 = vpop.permute.xlu0 %1359
        %1361 = vrot.lane.b32.xlu0 %v601, 96
        %v1362 = vpop.permute.xlu0 %1361
        %vm1363 = vcmp.lt.s32.totalorder %v611, 96
        %v1364 = vsel %vm1363, %v1356, %v1360
        %v1365 = vsel %vm1363, %v1358, %v1362
        %v1366 = vsel %vm1363, %v1360, %v1356
        %v1367 = vsel %vm1363, %v1362, %v1358
        %s1368 = scalar_lea.vmem [#allocation8], 7
        %v1369 = vld [vmem:[%s1368] ss:$8 sm:$0x3]
        %v1371 = vlaneseq
        %v1372 = vshrl.u32 %v1371, 7
        %v1373 = vsub.s32 0, %v1372
        %v1374 = vrot.slane %v1369, %v1373
        %v1375 = vlaneseq
        %v1376 = vshrl.u32 %v1375, 7
        %v1377 = vsub.s32 1, %v1376
        %v1378 = vrot.slane %v1369, %v1377
        %v1381 = vmul.f32 %v1364, %v1374
        %v1382 = vmul.f32 %v1366, %v1378
        %v1383 = vmul.f32 %v1365, %v1374
        %v1384 = vmul.f32 %v1367, %v1378
        %s1385 = scalar_lea.vmem %s516, 112 [#allocation9]
        %v1386 = vld [vmem:[%s1385] sm:$0xf]
        %v1387 = vld [vmem:[%s1385 + $0x4] sm:$0xf]
        %v1388 = vld [vmem:[%s1385 + $0x8] sm:$0xf]
        %v1389 = vld [vmem:[%s1385 + $0xc] sm:$0xf]
        %v1390 = vpack.c.bf16 %v1383, %v1381
        %v1391 = vpack.c.bf16 %v1384, %v1382
        %v1396 = vunpack.c.l.b16 %v1386
        %v1397 = vunpack.c.l.b16 %v1387
        %v1398 = vunpack.c.l.b16 %v1388
        %v1399 = vunpack.c.l.b16 %v1389
        %v1400 = vpack.c.b16 %v1397, %v1396
        %v1401 = vpack.c.b16 %v1399, %v1398
        %v1403 = vsel %vm686, %v1400, 0
        %v1406 = vsel %vm686, %v1401, 0
        %1408 = vmatprep.subr.bf16.mxu0 %v1391
        %1409 = vmatpush1.bf16.msra.mxu0 %v1390
        %1410 = vmatprep.subr.bf16.mxu0 0
        %1411 = vmatpush1.bf16.msra.mxu0 0
        %1412 = vmatprep.subr.bf16.mxu0 0
        %1413 = vmatpush1.bf16.msra.mxu0 0
        %1414 = vmatprep.subr.bf16.mxu0 0
        %1415 = vmatpush1.bf16.msra.mxu0 0
        %1416 = vmatprep.subr.bf16.mxu0 0
        %1417 = vmatpush1.bf16.msra.mxu0 0
        %1418 = vmatprep.subr.bf16.mxu0 0
        %1419 = vmatpush1.bf16.msra.mxu0 0
        %1420 = vmatprep.subr.bf16.mxu0 0
        %1421 = vmatpush1.bf16.msra.mxu0 0
        %1422 = vmatprep.subr.bf16.mxu0 0
        %1423 = vmatpush1.bf16.msra.mxu0 0
        %1424 = vmatprep.subr.bf16.mxu0 0
        %1425 = vmatpush1.bf16.msra.mxu0 0
        %1426 = vmatprep.subr.bf16.mxu0 0
        %1427 = vmatpush1.bf16.msra.mxu0 0
        %1428 = vmatprep.subr.bf16.mxu0 0
        %1429 = vmatpush1.bf16.msra.mxu0 0
        %1430 = vmatprep.subr.bf16.mxu0 0
        %1431 = vmatpush1.bf16.msra.mxu0 0
        %1432 = vmatprep.subr.bf16.mxu0 0
        %1433 = vmatpush1.bf16.msra.mxu0 0
        %1434 = vmatprep.subr.bf16.mxu0 0
        %1435 = vmatpush1.bf16.msra.mxu0 0
        %1436 = vmatprep.subr.bf16.mxu0 0
        %1437 = vmatpush1.bf16.msra.mxu0 0
        %1438 = vmatprep.subr.bf16.mxu0 0
        %1439 = vmatpush1.bf16.msra.mxu0 0
        %1440 = vmatprep.mubr.bf16.mxu0 0
        %1441 = vmatmul.mubr.bf16.gmra.mrb[0].mxu0 %v1403
        %v1442 = vpop.f32.mrb[0].mxu0
        %v1443 = vadd.f32 0.0, %v1442
        %v1444 = vpop.f32.mrb[0].mxu0
        %v1445 = vadd.f32 0.0, %v1444
        %v1446 = vpop.f32.mrb[0].mxu0
        %v1447 = vadd.f32 0.0, %v1446
        %v1448 = vpop.f32.mrb[0].mxu0
        %v1449 = vadd.f32 0.0, %v1448
        %1450 = vmatprep.mubr.bf16.mxu0 0
        %1451 = vmatmul.mubr.bf16.gmra.mrb[0].mxu0 %v1406
        %v1452 = vpop.f32.mrb[0].mxu0
        %v1453 = vadd.f32 0.0, %v1452
        %v1454 = vpop.f32.mrb[0].mxu0
        %v1455 = vadd.f32 0.0, %v1454
        %v1456 = vpop.f32.mrb[0].mxu0
        %v1457 = vadd.f32 0.0, %v1456
        %v1458 = vpop.f32.mrb[0].mxu0
        %v1459 = vadd.f32 0.0, %v1458
        %1460 = vdwg.mxu0
        %v1461 = vadd.f32 %v1347, %v1443
        %v1462 = vadd.f32 %v1348, %v1445
        %v1463 = vadd.f32 %v1349, %v1447
        %v1464 = vadd.f32 %v1350, %v1449
        %v1465 = vadd.f32 %v1351, %v1453
        %v1466 = vadd.f32 %v1352, %v1455
        %v1467 = vadd.f32 %v1353, %v1457
        %v1468 = vadd.f32 %v1354, %v1459
        %1469 = vrot.lane.b32.xlu0 %v598, 94
        %v1470 = vpop.permute.xlu0 %1469
        %1471 = vrot.lane.b32.xlu0 %v600, 94
        %v1472 = vpop.permute.xlu0 %1471
        %1473 = vrot.lane.b32.xlu0 %v599, 94
        %v1474 = vpop.permute.xlu0 %1473
        %1475 = vrot.lane.b32.xlu0 %v601, 94
        %v1476 = vpop.permute.xlu0 %1475
        %vm1477 = vcmp.lt.s32.totalorder %v611, 94
        %v1478 = vsel %vm1477, %v1470, %v1474
        %v1479 = vsel %vm1477, %v1472, %v1476
        %v1480 = vsel %vm1477, %v1474, %v1470
        %v1481 = vsel %vm1477, %v1476, %v1472
        %s1482 = scalar_lea.vmem [#allocation8], 16
        %v1483 = vld [vmem:[%s1482] ss:$8 sm:$0x3]
        %v1485 = vlaneseq
        %v1486 = vshrl.u32 %v1485, 7
        %v1487 = vsub.s32 0, %v1486
        %v1488 = vrot.slane %v1483, %v1487
        %v1489 = vlaneseq
        %v1490 = vshrl.u32 %v1489, 7
        %v1491 = vsub.s32 1, %v1490
        %v1492 = vrot.slane %v1483, %v1491
        %v1495 = vmul.f32 %v1478, %v1488
        %v1496 = vmul.f32 %v1480, %v1492
        %v1497 = vmul.f32 %v1479, %v1488
        %v1498 = vmul.f32 %v1481, %v1492
        %s1499 = scalar_lea.vmem %s516, 128 [#allocation9]
        %v1500 = vld [vmem:[%s1499] sm:$0xf]
        %v1501 = vld [vmem:[%s1499 + $0x4] sm:$0xf]
        %v1502 = vld [vmem:[%s1499 + $0x8] sm:$0xf]
        %v1503 = vld [vmem:[%s1499 + $0xc] sm:$0xf]
        %v1504 = vpack.c.bf16 %v1497, %v1495
        %v1505 = vpack.c.bf16 %v1498, %v1496
        %v1510 = vunpack.c.l.b16 %v1500
        %v1511 = vunpack.c.l.b16 %v1501
        %v1512 = vunpack.c.l.b16 %v1502
        %v1513 = vunpack.c.l.b16 %v1503
        %v1514 = vpack.c.b16 %v1511, %v1510
        %v1515 = vpack.c.b16 %v1513, %v1512
        %v1517 = vsel %vm686, %v1514, 0
        %v1520 = vsel %vm686, %v1515, 0
        %1522 = vmatprep.subr.bf16.mxu0 %v1505
        %1523 = vmatpush1.bf16.msra.mxu0 %v1504
        %1524 = vmatprep.subr.bf16.mxu0 0
        %1525 = vmatpush1.bf16.msra.mxu0 0
        %1526 = vmatprep.subr.bf16.mxu0 0
        %1527 = vmatpush1.bf16.msra.mxu0 0
        %1528 = vmatprep.subr.bf16.mxu0 0
        %1529 = vmatpush1.bf16.msra.mxu0 0
        %1530 = vmatprep.subr.bf16.mxu0 0
        %1531 = vmatpush1.bf16.msra.mxu0 0
        %1532 = vmatprep.subr.bf16.mxu0 0
        %1533 = vmatpush1.bf16.msra.mxu0 0
        %1534 = vmatprep.subr.bf16.mxu0 0
        %1535 = vmatpush1.bf16.msra.mxu0 0
        %1536 = vmatprep.subr.bf16.mxu0 0
        %1537 = vmatpush1.bf16.msra.mxu0 0
        %1538 = vmatprep.subr.bf16.mxu0 0
        %1539 = vmatpush1.bf16.msra.mxu0 0
        %1540 = vmatprep.subr.bf16.mxu0 0
        %1541 = vmatpush1.bf16.msra.mxu0 0
        %1542 = vmatprep.subr.bf16.mxu0 0
        %1543 = vmatpush1.bf16.msra.mxu0 0
        %1544 = vmatprep.subr.bf16.mxu0 0
        %1545 = vmatpush1.bf16.msra.mxu0 0
        %1546 = vmatprep.subr.bf16.mxu0 0
        %1547 = vmatpush1.bf16.msra.mxu0 0
        %1548 = vmatprep.subr.bf16.mxu0 0
        %1549 = vmatpush1.bf16.msra.mxu0 0
        %1550 = vmatprep.subr.bf16.mxu0 0
        %1551 = vmatpush1.bf16.msra.mxu0 0
        %1552 = vmatprep.subr.bf16.mxu0 0
        %1553 = vmatpush1.bf16.msra.mxu0 0
        %1554 = vmatprep.mubr.bf16.mxu0 0
        %1555 = vmatmul.mubr.bf16.gmra.mrb[0].mxu0 %v1517
        %v1556 = vpop.f32.mrb[0].mxu0
        %v1557 = vadd.f32 0.0, %v1556
        %v1558 = vpop.f32.mrb[0].mxu0
        %v1559 = vadd.f32 0.0, %v1558
        %v1560 = vpop.f32.mrb[0].mxu0
        %v1561 = vadd.f32 0.0, %v1560
        %v1562 = vpop.f32.mrb[0].mxu0
        %v1563 = vadd.f32 0.0, %v1562
        %1564 = vmatprep.mubr.bf16.mxu0 0
        %1565 = vmatmul.mubr.bf16.gmra.mrb[0].mxu0 %v1520
        %v1566 = vpop.f32.mrb[0].mxu0
        %v1567 = vadd.f32 0.0, %v1566
        %v1568 = vpop.f32.mrb[0].mxu0
        %v1569 = vadd.f32 0.0, %v1568
        %v1570 = vpop.f32.mrb[0].mxu0
        %v1571 = vadd.f32 0.0, %v1570
        %v1572 = vpop.f32.mrb[0].mxu0
        %v1573 = vadd.f32 0.0, %v1572
        %1574 = vdwg.mxu0
        %v1575 = vadd.f32 %v1461, %v1557
        %v1576 = vadd.f32 %v1462, %v1559
        %v1577 = vadd.f32 %v1463, %v1561
        %v1578 = vadd.f32 %v1464, %v1563
        %v1579 = vadd.f32 %v1465, %v1567
        %v1580 = vadd.f32 %v1466, %v1569
        %v1581 = vadd.f32 %v1467, %v1571
        %v1582 = vadd.f32 %v1468, %v1573
        %p1583 = scmp.eq.s32.totalorder %s48, 0
        // Predicated region
        $region85: #{tpu_custom_call.1} parent=51 // pred_check
          %p1584 = pneg %p1583
        $region86: #{tpu_custom_call.1} parent=51 // pred_check_branch
          %1586 = sbr.rel (%p1584) target = $region88
        $region87: #{tpu_custom_call.1} parent=51 // pred_region
          %1587 = vst [vmem:[#allocation2] sm:$0xff] %v1575
          %1588 = vst [vmem:[#allocation2 + $0x8] sm:$0xff] %v1576
          %1589 = vst [vmem:[#allocation2 + $0x10] sm:$0xff] %v1577
          %1590 = vst [vmem:[#allocation2 + $0x18] sm:$0xff] %v1578
          %1591 = vst [vmem:[#allocation2 + $0x20] sm:$0xff] %v1579
          %1592 = vst [vmem:[#allocation2 + $0x28] sm:$0xff] %v1580
          %1593 = vst [vmem:[#allocation2 + $0x30] sm:$0xff] %v1581
          %1594 = vst [vmem:[#allocation2 + $0x38] sm:$0xff] %v1582
        $region88: #{tpu_custom_call.1} parent=51 // pred_fallthru
          _
        %p1595 = scmp.ne.s32.totalorder %s48, 0
        // Predicated region
        $region89: #{tpu_custom_call.1} parent=51 // pred_check
          %p1596 = pneg %p1595
        $region90: #{tpu_custom_call.1} parent=51 // pred_check_branch
          %1598 = sbr.rel (%p1596) target = $region92
        $region91: #{tpu_custom_call.1} parent=51 // pred_region
          %v1599 = vld [vmem:[#allocation2] sm:$0xff]
          %v1600 = vld [vmem:[#allocation2 + $0x8] sm:$0xff]
          %v1601 = vld [vmem:[#allocation2 + $0x10] sm:$0xff]
          %v1602 = vld [vmem:[#allocation2 + $0x18] sm:$0xff]
          %v1603 = vld [vmem:[#allocation2 + $0x20] sm:$0xff]
          %v1604 = vld [vmem:[#allocation2 + $0x28] sm:$0xff]
          %v1605 = vld [vmem:[#allocation2 + $0x30] sm:$0xff]
          %v1606 = vld [vmem:[#allocation2 + $0x38] sm:$0xff]
          %v1607 = vadd.f32 %v1599, %v1575
          %v1608 = vadd.f32 %v1600, %v1576
          %v1609 = vadd.f32 %v1601, %v1577
          %v1610 = vadd.f32 %v1602, %v1578
          %v1611 = vadd.f32 %v1603, %v1579
          %v1612 = vadd.f32 %v1604, %v1580
          %v1613 = vadd.f32 %v1605, %v1581
          %v1614 = vadd.f32 %v1606, %v1582
          %1615 = vst [vmem:[#allocation2] sm:$0xff] %v1607
          %1616 = vst [vmem:[#allocation2 + $0x8] sm:$0xff] %v1608
          %1617 = vst [vmem:[#allocation2 + $0x10] sm:$0xff] %v1609
          %1618 = vst [vmem:[#allocation2 + $0x18] sm:$0xff] %v1610
          %1619 = vst [vmem:[#allocation2 + $0x20] sm:$0xff] %v1611
          %1620 = vst [vmem:[#allocation2 + $0x28] sm:$0xff] %v1612
          %1621 = vst [vmem:[#allocation2 + $0x30] sm:$0xff] %v1613
          %1622 = vst [vmem:[#allocation2 + $0x38] sm:$0xff] %v1614
        $region92: #{tpu_custom_call.1} parent=51 // pred_fallthru
          _
        %p1623 = scmp.eq.s32.totalorder %s48, 1
        // Predicated region
        $region93: #{tpu_custom_call.1} parent=51 // pred_check
          %p1624 = pneg %p1623
        $region94: #{tpu_custom_call.1} parent=51 // pred_check_branch
          %1626 = sbr.rel (%p1624) target = $region96
        $region95: #{tpu_custom_call.1} parent=51 // pred_region
          %v1627 = vld [vmem:[#allocation2] sm:$0xff]
          %v1628 = vld [vmem:[#allocation2 + $0x8] sm:$0xff]
          %v1629 = vld [vmem:[#allocation2 + $0x10] sm:$0xff]
          %v1630 = vld [vmem:[#allocation2 + $0x18] sm:$0xff]
          %v1631 = vld [vmem:[#allocation2 + $0x20] sm:$0xff]
          %v1632 = vld [vmem:[#allocation2 + $0x28] sm:$0xff]
          %v1633 = vld [vmem:[#allocation2 + $0x30] sm:$0xff]
          %v1634 = vld [vmem:[#allocation2 + $0x38] sm:$0xff]
          %v1635 = vld [vmem:[#allocation11] sm:$0xff]
          %v1636 = vld [vmem:[#allocation11 + $0x8] sm:$0xff]
          %v1637 = vld [vmem:[#allocation11 + $0x10] sm:$0xff]
          %v1638 = vld [vmem:[#allocation11 + $0x18] sm:$0xff]
          %1640 = vset.pattern.permute.xlu0 0
          %1641 = vperm.xlu0 %1640, %v1635
          %v1642 = vpop.permute.xlu0 %1641
          %1645 = vset.pattern.permute.xlu0 0
          %1646 = vperm.xlu0 %1645, %v1636
          %v1647 = vpop.permute.xlu0 %1646
          %1650 = vset.pattern.permute.xlu0 0
          %1651 = vperm.xlu0 %1650, %v1637
          %v1652 = vpop.permute.xlu0 %1651
          %1655 = vset.pattern.permute.xlu0 0
          %1656 = vperm.xlu0 %1655, %v1638
          %v1657 = vpop.permute.xlu0 %1656
          %v1659 = vadd.f32 %v1627, %v1642
          %v1660 = vadd.f32 %v1628, %v1642
          %v1661 = vadd.f32 %v1629, %v1647
          %v1662 = vadd.f32 %v1630, %v1647
          %v1663 = vadd.f32 %v1631, %v1652
          %v1664 = vadd.f32 %v1632, %v1652
          %v1665 = vadd.f32 %v1633, %v1657
          %v1666 = vadd.f32 %v1634, %v1657
          %v1667 = vld [vmem:[#allocation12] sm:$0xf]
          %vm1668 = vcmask 261120
          %v1670 = vsel %vm1668, %v1667, 0
          %1672 = vmatprep.subr.mxu0 %v1660
          %1673 = vmatpush1.msra.mxu0 %v1659
          %1674 = vmatprep.subr.mxu0 %v1662
          %1675 = vmatpush1.msra.mxu0 %v1661
          %1676 = vmatprep.subr.mxu0 %v1664
          %1677 = vmatpush1.msra.mxu0 %v1663
          %1678 = vmatprep.subr.mxu0 %v1666
          %1679 = vmatpush1.msra.mxu0 %v1665
          %1680 = vmatprep.subr.mxu0 0.0
          %1681 = vmatpush1.msra.mxu0 0.0
          %1682 = vmatprep.subr.mxu0 0.0
          %1683 = vmatpush1.msra.mxu0 0.0
          %1684 = vmatprep.subr.mxu0 0.0
          %1685 = vmatpush1.msra.mxu0 0.0
          %1686 = vmatprep.subr.mxu0 0.0
          %1687 = vmatpush1.msra.mxu0 0.0
          %1688 = vmatprep.subr.mxu0 0.0
          %1689 = vmatpush1.msra.mxu0 0.0
          %1690 = vmatprep.subr.mxu0 0.0
          %1691 = vmatpush1.msra.mxu0 0.0
          %1692 = vmatprep.subr.mxu0 0.0
          %1693 = vmatpush1.msra.mxu0 0.0
          %1694 = vmatprep.subr.mxu0 0.0
          %1695 = vmatpush1.msra.mxu0 0.0
          %1696 = vmatprep.subr.mxu0 0.0
          %1697 = vmatpush1.msra.mxu0 0.0
          %1698 = vmatprep.subr.mxu0 0.0
          %1699 = vmatpush1.msra.mxu0 0.0
          %1700 = vmatprep.subr.mxu0 0.0
          %1701 = vmatpush1.msra.mxu0 0.0
          %1702 = vmatprep.subr.mxu0 0.0
          %1703 = vmatpush1.msra.mxu0 0.0
          %1704 = vmatprep.subr.mxu0 0.0
          %1705 = vmatpush1.msra.mxu0 0.0
          %1706 = vmatprep.subr.mxu0 0.0
          %1707 = vmatpush1.msra.mxu0 0.0
          %1708 = vmatprep.subr.mxu0 0.0
          %1709 = vmatpush1.msra.mxu0 0.0
          %1710 = vmatprep.subr.mxu0 0.0
          %1711 = vmatpush1.msra.mxu0 0.0
          %1712 = vmatprep.subr.mxu0 0.0
          %1713 = vmatpush1.msra.mxu0 0.0
          %1714 = vmatprep.subr.mxu0 0.0
          %1715 = vmatpush1.msra.mxu0 0.0
          %1716 = vmatprep.subr.mxu0 0.0
          %1717 = vmatpush1.msra.mxu0 0.0
          %1718 = vmatprep.subr.mxu0 0.0
          %1719 = vmatpush1.msra.mxu0 0.0
          %1720 = vmatprep.subr.mxu0 0.0
          %1721 = vmatpush1.msra.mxu0 0.0
          %1722 = vmatprep.subr.mxu0 0.0
          %1723 = vmatpush1.msra.mxu0 0.0
          %1724 = vmatprep.subr.mxu0 0.0
          %1725 = vmatpush1.msra.mxu0 0.0
          %1726 = vmatprep.subr.mxu0 0.0
          %1727 = vmatpush1.msra.mxu0 0.0
          %1728 = vmatprep.subr.mxu0 0.0
          %1729 = vmatpush1.msra.mxu0 0.0
          %1730 = vmatprep.subr.mxu0 0.0
          %1731 = vmatpush1.msra.mxu0 0.0
          %1732 = vmatprep.subr.mxu0 0.0
          %1733 = vmatpush1.msra.mxu0 0.0
          %1734 = vmatprep.subr.mxu0 0.0
          %1735 = vmatpush1.msra.mxu0 0.0
          %1736 = vmatprep.mubr.f32.mxu0 0.0
          %1737 = vmatmul.mubr.f32.gmra.mrb[0].mxu0 %v1670
          %v1738 = vpop.f32.mrb[0].mxu0
          %v1739 = vadd.f32 0.0, %v1738
          %v1740 = vpop.f32.mrb[0].mxu0
          %v1741 = vadd.f32 0.0, %v1740
          %1742 = vdwg.mxu0
          %v1743 = vld [vmem:[#allocation14] sm:$0xf]
          %v1744 = vld [vmem:[%s503] sm:$0xff]
          %v1745 = vld [vmem:[%s503 + $0x8] sm:$0xff]
          %v1746 = vld [vmem:[%s503 + $0x10] sm:$0xff]
          %v1747 = vld [vmem:[%s503 + $0x18] sm:$0xff]
          %v1748 = vld [vmem:[%s503 + $0x20] sm:$0xff]
          %v1749 = vld [vmem:[%s503 + $0x28] sm:$0xff]
          %v1750 = vld [vmem:[%s503 + $0x30] sm:$0xff]
          %v1751 = vld [vmem:[%s503 + $0x38] sm:$0xff]
          %v1752 = vld [vmem:[%s503 + $0x40] sm:$0xff]
          %v1753 = vld [vmem:[%s503 + $0x48] sm:$0xff]
          %v1754 = vld [vmem:[%s503 + $0x50] sm:$0xff]
          %v1755 = vld [vmem:[%s503 + $0x58] sm:$0xff]
          %v1756 = vld [vmem:[%s503 + $0x60] sm:$0xff]
          %v1757 = vld [vmem:[%s503 + $0x68] sm:$0xff]
          %v1758 = vld [vmem:[%s503 + $0x70] sm:$0xff]
          %v1759 = vld [vmem:[%s503 + $0x78] sm:$0xff]
          %v1760 = vld [vmem:[%s503 + $0x80] sm:$0xff]
          %v1761 = vld [vmem:[%s503 + $0x88] sm:$0xff]
          %v1762 = vld [vmem:[%s503 + $0x90] sm:$0xff]
          %v1763 = vld [vmem:[%s503 + $0x98] sm:$0xff]
          %v1764 = vld [vmem:[%s503 + $0xa0] sm:$0xff]
          %v1765 = vld [vmem:[%s503 + $0xa8] sm:$0xff]
          %v1766 = vld [vmem:[%s503 + $0xb0] sm:$0xff]
          %v1767 = vld [vmem:[%s503 + $0xb8] sm:$0xff]
          %v1768 = vld [vmem:[%s503 + $0xc0] sm:$0xff]
          %v1769 = vld [vmem:[%s503 + $0xc8] sm:$0xff]
          %v1770 = vld [vmem:[%s503 + $0xd0] sm:$0xff]
          %v1771 = vld [vmem:[%s503 + $0xd8] sm:$0xff]
          %v1772 = vld [vmem:[%s503 + $0xe0] sm:$0xff]
          %v1773 = vld [vmem:[%s503 + $0xe8] sm:$0xff]
          %v1774 = vld [vmem:[%s503 + $0xf0] sm:$0xff]
          %v1775 = vld [vmem:[%s503 + $0xf8] sm:$0xff]
          %v1776 = vld [vmem:[%s503 + $0x100] sm:$0xff]
          %v1777 = vld [vmem:[%s503 + $0x108] sm:$0xff]
          %v1778 = vld [vmem:[%s503 + $0x110] sm:$0xff]
          %v1779 = vld [vmem:[%s503 + $0x118] sm:$0xff]
          %v1780 = vld [vmem:[%s503 + $0x120] sm:$0xff]
          %v1781 = vld [vmem:[%s503 + $0x128] sm:$0xff]
          %v1782 = vld [vmem:[%s503 + $0x130] sm:$0xff]
          %v1783 = vld [vmem:[%s503 + $0x138] sm:$0xff]
          %v1784 = vld [vmem:[%s503 + $0x140] sm:$0xff]
          %v1785 = vld [vmem:[%s503 + $0x148] sm:$0xff]
          %v1786 = vld [vmem:[%s503 + $0x150] sm:$0xff]
          %v1787 = vld [vmem:[%s503 + $0x158] sm:$0xff]
          %v1788 = vld [vmem:[%s503 + $0x160] sm:$0xff]
          %v1789 = vld [vmem:[%s503 + $0x168] sm:$0xff]
          %v1790 = vld [vmem:[%s503 + $0x170] sm:$0xff]
          %v1791 = vld [vmem:[%s503 + $0x178] sm:$0xff]
          %v1792 = vld [vmem:[%s503 + $0x180] sm:$0xff]
          %v1793 = vld [vmem:[%s503 + $0x188] sm:$0xff]
          %v1794 = vld [vmem:[%s503 + $0x190] sm:$0xff]
          %v1795 = vld [vmem:[%s503 + $0x198] sm:$0xff]
          %v1796 = vld [vmem:[%s503 + $0x1a0] sm:$0xff]
          %v1797 = vld [vmem:[%s503 + $0x1a8] sm:$0xff]
          %v1798 = vld [vmem:[%s503 + $0x1b0] sm:$0xff]
          %v1799 = vld [vmem:[%s503 + $0x1b8] sm:$0xff]
          %v1800 = vld [vmem:[%s503 + $0x1c0] sm:$0xff]
          %v1801 = vld [vmem:[%s503 + $0x1c8] sm:$0xff]
          %v1802 = vld [vmem:[%s503 + $0x1d0] sm:$0xff]
          %v1803 = vld [vmem:[%s503 + $0x1d8] sm:$0xff]
          %v1804 = vld [vmem:[%s503 + $0x1e0] sm:$0xff]
          %v1805 = vld [vmem:[%s503 + $0x1e8] sm:$0xff]
          %v1806 = vld [vmem:[%s503 + $0x1f0] sm:$0xff]
          %v1807 = vld [vmem:[%s503 + $0x1f8] sm:$0xff]
          %v1808 = vlog2.pop %v1744
          %v1809 = vmul.f32 %v1808, 0.6931472
          %v1810 = vlog2.pop %v1745
          %v1811 = vmul.f32 %v1810, 0.6931472
          %v1812 = vlog2.pop %v1746
          %v1813 = vmul.f32 %v1812, 0.6931472
          %v1814 = vlog2.pop %v1747
          %v1815 = vmul.f32 %v1814, 0.6931472
          %v1816 = vlog2.pop %v1748
          %v1817 = vmul.f32 %v1816, 0.6931472
          %v1818 = vlog2.pop %v1749
          %v1819 = vmul.f32 %v1818, 0.6931472
          %v1820 = vlog2.pop %v1750
          %v1821 = vmul.f32 %v1820, 0.6931472
          %v1822 = vlog2.pop %v1751
          %v1823 = vmul.f32 %v1822, 0.6931472
          %v1824 = vlog2.pop %v1752
          %v1825 = vmul.f32 %v1824, 0.6931472
          %v1826 = vlog2.pop %v1753
          %v1827 = vmul.f32 %v1826, 0.6931472
          %v1828 = vlog2.pop %v1754
          %v1829 = vmul.f32 %v1828, 0.6931472
          %v1830 = vlog2.pop %v1755
          %v1831 = vmul.f32 %v1830, 0.6931472
          %v1832 = vlog2.pop %v1756
          %v1833 = vmul.f32 %v1832, 0.6931472
          %v1834 = vlog2.pop %v1757
          %v1835 = vmul.f32 %v1834, 0.6931472
          %v1836 = vlog2.pop %v1758
          %v1837 = vmul.f32 %v1836, 0.6931472
          %v1838 = vlog2.pop %v1759
          %v1839 = vmul.f32 %v1838, 0.6931472
          %v1840 = vlog2.pop %v1760
          %v1841 = vmul.f32 %v1840, 0.6931472
          %v1842 = vlog2.pop %v1761
          %v1843 = vmul.f32 %v1842, 0.6931472
          %v1844 = vlog2.pop %v1762
          %v1845 = vmul.f32 %v1844, 0.6931472
          %v1846 = vlog2.pop %v1763
          %v1847 = vmul.f32 %v1846, 0.6931472
          %v1848 = vlog2.pop %v1764
          %v1849 = vmul.f32 %v1848, 0.6931472
          %v1850 = vlog2.pop %v1765
          %v1851 = vmul.f32 %v1850, 0.6931472
          %v1852 = vlog2.pop %v1766
          %v1853 = vmul.f32 %v1852, 0.6931472
          %v1854 = vlog2.pop %v1767
          %v1855 = vmul.f32 %v1854, 0.6931472
          %v1856 = vlog2.pop %v1768
          %v1857 = vmul.f32 %v1856, 0.6931472
          %v1858 = vlog2.pop %v1769
          %v1859 = vmul.f32 %v1858, 0.6931472
          %v1860 = vlog2.pop %v1770
          %v1861 = vmul.f32 %v1860, 0.6931472
          %v1862 = vlog2.pop %v1771
          %v1863 = vmul.f32 %v1862, 0.6931472
          %v1864 = vlog2.pop %v1772
          %v1865 = vmul.f32 %v1864, 0.6931472
          %v1866 = vlog2.pop %v1773
          %v1867 = vmul.f32 %v1866, 0.6931472
          %v1868 = vlog2.pop %v1774
          %v1869 = vmul.f32 %v1868, 0.6931472
          %v1870 = vlog2.pop %v1775
          %v1871 = vmul.f32 %v1870, 0.6931472
          %v1872 = vlog2.pop %v1776
          %v1873 = vmul.f32 %v1872, 0.6931472
          %v1874 = vlog2.pop %v1777
          %v1875 = vmul.f32 %v1874, 0.6931472
          %v1876 = vlog2.pop %v1778
          %v1877 = vmul.f32 %v1876, 0.6931472
          %v1878 = vlog2.pop %v1779
          %v1879 = vmul.f32 %v1878, 0.6931472
          %v1880 = vlog2.pop %v1780
          %v1881 = vmul.f32 %v1880, 0.6931472
          %v1882 = vlog2.pop %v1781
          %v1883 = vmul.f32 %v1882, 0.6931472
          %v1884 = vlog2.pop %v1782
          %v1885 = vmul.f32 %v1884, 0.6931472
          %v1886 = vlog2.pop %v1783
          %v1887 = vmul.f32 %v1886, 0.6931472
          %v1888 = vlog2.pop %v1784
          %v1889 = vmul.f32 %v1888, 0.6931472
          %v1890 = vlog2.pop %v1785
          %v1891 = vmul.f32 %v1890, 0.6931472
          %v1892 = vlog2.pop %v1786
          %v1893 = vmul.f32 %v1892, 0.6931472
          %v1894 = vlog2.pop %v1787
          %v1895 = vmul.f32 %v1894, 0.6931472
          %v1896 = vlog2.pop %v1788
          %v1897 = vmul.f32 %v1896, 0.6931472
          %v1898 = vlog2.pop %v1789
          %v1899 = vmul.f32 %v1898, 0.6931472
          %v1900 = vlog2.pop %v1790
          %v1901 = vmul.f32 %v1900, 0.6931472
          %v1902 = vlog2.pop %v1791
          %v1903 = vmul.f32 %v1902, 0.6931472
          %v1904 = vlog2.pop %v1792
          %v1905 = vmul.f32 %v1904, 0.6931472
          %v1906 = vlog2.pop %v1793
          %v1907 = vmul.f32 %v1906, 0.6931472
          %v1908 = vlog2.pop %v1794
          %v1909 = vmul.f32 %v1908, 0.6931472
          %v1910 = vlog2.pop %v1795
          %v1911 = vmul.f32 %v1910, 0.6931472
          %v1912 = vlog2.pop %v1796
          %v1913 = vmul.f32 %v1912, 0.6931472
          %v1914 = vlog2.pop %v1797
          %v1915 = vmul.f32 %v1914, 0.6931472
          %v1916 = vlog2.pop %v1798
          %v1917 = vmul.f32 %v1916, 0.6931472
          %v1918 = vlog2.pop %v1799
          %v1919 = vmul.f32 %v1918, 0.6931472
          %v1920 = vlog2.pop %v1800
          %v1921 = vmul.f32 %v1920, 0.6931472
          %v1922 = vlog2.pop %v1801
          %v1923 = vmul.f32 %v1922, 0.6931472
          %v1924 = vlog2.pop %v1802
          %v1925 = vmul.f32 %v1924, 0.6931472
          %v1926 = vlog2.pop %v1803
          %v1927 = vmul.f32 %v1926, 0.6931472
          %v1928 = vlog2.pop %v1804
          %v1929 = vmul.f32 %v1928, 0.6931472
          %v1930 = vlog2.pop %v1805
          %v1931 = vmul.f32 %v1930, 0.6931472
          %v1932 = vlog2.pop %v1806
          %v1933 = vmul.f32 %v1932, 0.6931472
          %v1934 = vlog2.pop %v1807
          %v1935 = vmul.f32 %v1934, 0.6931472
          %v1936 = vmul.f32 %v1809, 0.1
          %v1937 = vmul.f32 %v1811, 0.1
          %v1938 = vmul.f32 %v1813, 0.1
          %v1939 = vmul.f32 %v1815, 0.1
          %v1940 = vmul.f32 %v1817, 0.1
          %v1941 = vmul.f32 %v1819, 0.1
          %v1942 = vmul.f32 %v1821, 0.1
          %v1943 = vmul.f32 %v1823, 0.1
          %v1944 = vmul.f32 %v1825, 0.1
          %v1945 = vmul.f32 %v1827, 0.1
          %v1946 = vmul.f32 %v1829, 0.1
          %v1947 = vmul.f32 %v1831, 0.1
          %v1948 = vmul.f32 %v1833, 0.1
          %v1949 = vmul.f32 %v1835, 0.1
          %v1950 = vmul.f32 %v1837, 0.1
          %v1951 = vmul.f32 %v1839, 0.1
          %v1952 = vmul.f32 %v1841, 0.1
          %v1953 = vmul.f32 %v1843, 0.1
          %v1954 = vmul.f32 %v1845, 0.1
          %v1955 = vmul.f32 %v1847, 0.1
          %v1956 = vmul.f32 %v1849, 0.1
          %v1957 = vmul.f32 %v1851, 0.1
          %v1958 = vmul.f32 %v1853, 0.1
          %v1959 = vmul.f32 %v1855, 0.1
          %v1960 = vmul.f32 %v1857, 0.1
          %v1961 = vmul.f32 %v1859, 0.1
          %v1962 = vmul.f32 %v1861, 0.1
          %v1963 = vmul.f32 %v1863, 0.1
          %v1964 = vmul.f32 %v1865, 0.1
          %v1965 = vmul.f32 %v1867, 0.1
          %v1966 = vmul.f32 %v1869, 0.1
          %v1967 = vmul.f32 %v1871, 0.1
          %v1968 = vmul.f32 %v1873, 0.1
          %v1969 = vmul.f32 %v1875, 0.1
          %v1970 = vmul.f32 %v1877, 0.1
          %v1971 = vmul.f32 %v1879, 0.1
          %v1972 = vmul.f32 %v1881, 0.1
          %v1973 = vmul.f32 %v1883, 0.1
          %v1974 = vmul.f32 %v1885, 0.1
          %v1975 = vmul.f32 %v1887, 0.1
          %v1976 = vmul.f32 %v1889, 0.1
          %v1977 = vmul.f32 %v1891, 0.1
          %v1978 = vmul.f32 %v1893, 0.1
          %v1979 = vmul.f32 %v1895, 0.1
          %v1980 = vmul.f32 %v1897, 0.1
          %v1981 = vmul.f32 %v1899, 0.1
          %v1982 = vmul.f32 %v1901, 0.1
          %v1983 = vmul.f32 %v1903, 0.1
          %v1984 = vmul.f32 %v1905, 0.1
          %v1985 = vmul.f32 %v1907, 0.1
          %v1986 = vmul.f32 %v1909, 0.1
          %v1987 = vmul.f32 %v1911, 0.1
          %v1988 = vmul.f32 %v1913, 0.1
          %v1989 = vmul.f32 %v1915, 0.1
          %v1990 = vmul.f32 %v1917, 0.1
          %v1991 = vmul.f32 %v1919, 0.1
          %v1992 = vmul.f32 %v1921, 0.1
          %v1993 = vmul.f32 %v1923, 0.1
          %v1994 = vmul.f32 %v1925, 0.1
          %v1995 = vmul.f32 %v1927, 0.1
          %v1996 = vmul.f32 %v1929, 0.1
          %v1997 = vmul.f32 %v1931, 0.1
          %v1998 = vmul.f32 %v1933, 0.1
          %v1999 = vmul.f32 %v1935, 0.1
          %v2000 = vmul.f32 %v1936, 1.442695
          %v2001 = vpow.pop %v2000
          %v2002 = vmul.f32 %v1937, 1.442695
          %v2003 = vpow.pop %v2002
          %v2004 = vmul.f32 %v1938, 1.442695
          %v2005 = vpow.pop %v2004
          %v2006 = vmul.f32 %v1939, 1.442695
          %v2007 = vpow.pop %v2006
          %v2008 = vmul.f32 %v1940, 1.442695
          %v2009 = vpow.pop %v2008
          %v2010 = vmul.f32 %v1941, 1.442695
          %v2011 = vpow.pop %v2010
          %v2012 = vmul.f32 %v1942, 1.442695
          %v2013 = vpow.pop %v2012
          %v2014 = vmul.f32 %v1943, 1.442695
          %v2015 = vpow.pop %v2014
          %v2016 = vmul.f32 %v1944, 1.442695
          %v2017 = vpow.pop %v2016
          %v2018 = vmul.f32 %v1945, 1.442695
          %v2019 = vpow.pop %v2018
          %v2020 = vmul.f32 %v1946, 1.442695
          %v2021 = vpow.pop %v2020
          %v2022 = vmul.f32 %v1947, 1.442695
          %v2023 = vpow.pop %v2022
          %v2024 = vmul.f32 %v1948, 1.442695
          %v2025 = vpow.pop %v2024
          %v2026 = vmul.f32 %v1949, 1.442695
          %v2027 = vpow.pop %v2026
          %v2028 = vmul.f32 %v1950, 1.442695
          %v2029 = vpow.pop %v2028
          %v2030 = vmul.f32 %v1951, 1.442695
          %v2031 = vpow.pop %v2030
          %v2032 = vmul.f32 %v1952, 1.442695
          %v2033 = vpow.pop %v2032
          %v2034 = vmul.f32 %v1953, 1.442695
          %v2035 = vpow.pop %v2034
          %v2036 = vmul.f32 %v1954, 1.442695
          %v2037 = vpow.pop %v2036
          %v2038 = vmul.f32 %v1955, 1.442695
          %v2039 = vpow.pop %v2038
          %v2040 = vmul.f32 %v1956, 1.442695
          %v2041 = vpow.pop %v2040
          %v2042 = vmul.f32 %v1957, 1.442695
          %v2043 = vpow.pop %v2042
          %v2044 = vmul.f32 %v1958, 1.442695
          %v2045 = vpow.pop %v2044
          %v2046 = vmul.f32 %v1959, 1.442695
          %v2047 = vpow.pop %v2046
          %v2048 = vmul.f32 %v1960, 1.442695
          %v2049 = vpow.pop %v2048
          %v2050 = vmul.f32 %v1961, 1.442695
          %v2051 = vpow.pop %v2050
          %v2052 = vmul.f32 %v1962, 1.442695
          %v2053 = vpow.pop %v2052
          %v2054 = vmul.f32 %v1963, 1.442695
          %v2055 = vpow.pop %v2054
          %v2056 = vmul.f32 %v1964, 1.442695
          %v2057 = vpow.pop %v2056
          %v2058 = vmul.f32 %v1965, 1.442695
          %v2059 = vpow.pop %v2058
          %v2060 = vmul.f32 %v1966, 1.442695
          %v2061 = vpow.pop %v2060
          %v2062 = vmul.f32 %v1967, 1.442695
          %v2063 = vpow.pop %v2062
          %v2064 = vmul.f32 %v1968, 1.442695
          %v2065 = vpow.pop %v2064
          %v2066 = vmul.f32 %v1969, 1.442695
          %v2067 = vpow.pop %v2066
          %v2068 = vmul.f32 %v1970, 1.442695
          %v2069 = vpow.pop %v2068
          %v2070 = vmul.f32 %v1971, 1.442695
          %v2071 = vpow.pop %v2070
          %v2072 = vmul.f32 %v1972, 1.442695
          %v2073 = vpow.pop %v2072
          %v2074 = vmul.f32 %v1973, 1.442695
          %v2075 = vpow.pop %v2074
          %v2076 = vmul.f32 %v1974, 1.442695
          %v2077 = vpow.pop %v2076
          %v2078 = vmul.f32 %v1975, 1.442695
          %v2079 = vpow.pop %v2078
          %v2080 = vmul.f32 %v1976, 1.442695
          %v2081 = vpow.pop %v2080
          %v2082 = vmul.f32 %v1977, 1.442695
          %v2083 = vpow.pop %v2082
          %v2084 = vmul.f32 %v1978, 1.442695
          %v2085 = vpow.pop %v2084
          %v2086 = vmul.f32 %v1979, 1.442695
          %v2087 = vpow.pop %v2086
          %v2088 = vmul.f32 %v1980, 1.442695
          %v2089 = vpow.pop %v2088
          %v2090 = vmul.f32 %v1981, 1.442695
          %v2091 = vpow.pop %v2090
          %v2092 = vmul.f32 %v1982, 1.442695
          %v2093 = vpow.pop %v2092
          %v2094 = vmul.f32 %v1983, 1.442695
          %v2095 = vpow.pop %v2094
          %v2096 = vmul.f32 %v1984, 1.442695
          %v2097 = vpow.pop %v2096
          %v2098 = vmul.f32 %v1985, 1.442695
          %v2099 = vpow.pop %v2098
          %v2100 = vmul.f32 %v1986, 1.442695
          %v2101 = vpow.pop %v2100
          %v2102 = vmul.f32 %v1987, 1.442695
          %v2103 = vpow.pop %v2102
          %v2104 = vmul.f32 %v1988, 1.442695
          %v2105 = vpow.pop %v2104
          %v2106 = vmul.f32 %v1989, 1.442695
          %v2107 = vpow.pop %v2106
          %v2108 = vmul.f32 %v1990, 1.442695
          %v2109 = vpow.pop %v2108
          %v2110 = vmul.f32 %v1991, 1.442695
          %v2111 = vpow.pop %v2110
          %v2112 = vmul.f32 %v1992, 1.442695
          %v2113 = vpow.pop %v2112
          %v2114 = vmul.f32 %v1993, 1.442695
          %v2115 = vpow.pop %v2114
          %v2116 = vmul.f32 %v1994, 1.442695
          %v2117 = vpow.pop %v2116
          %v2118 = vmul.f32 %v1995, 1.442695
          %v2119 = vpow.pop %v2118
          %v2120 = vmul.f32 %v1996, 1.442695
          %v2121 = vpow.pop %v2120
          %v2122 = vmul.f32 %v1997, 1.442695
          %v2123 = vpow.pop %v2122
          %v2124 = vmul.f32 %v1998, 1.442695
          %v2125 = vpow.pop %v2124
          %v2126 = vmul.f32 %v1999, 1.442695
          %v2127 = vpow.pop %v2126
          %vm2128 = vcmp.gt.f32.partialorder %v2001, 0.8
          %vm2129 = vcmp.gt.f32.partialorder %v2003, 0.8
          %vm2130 = vcmp.gt.f32.partialorder %v2005, 0.8
          %vm2131 = vcmp.gt.f32.partialorder %v2007, 0.8
          %vm2132 = vcmp.gt.f32.partialorder %v2009, 0.8
          %vm2133 = vcmp.gt.f32.partialorder %v2011, 0.8
          %vm2134 = vcmp.gt.f32.partialorder %v2013, 0.8
          %vm2135 = vcmp.gt.f32.partialorder %v2015, 0.8
          %vm2136 = vcmp.gt.f32.partialorder %v2017, 0.8
          %vm2137 = vcmp.gt.f32.partialorder %v2019, 0.8
          %vm2138 = vcmp.gt.f32.partialorder %v2021, 0.8
          %vm2139 = vcmp.gt.f32.partialorder %v2023, 0.8
          %vm2140 = vcmp.gt.f32.partialorder %v2025, 0.8
          %vm2141 = vcmp.gt.f32.partialorder %v2027, 0.8
          %vm2142 = vcmp.gt.f32.partialorder %v2029, 0.8
          %vm2143 = vcmp.gt.f32.partialorder %v2031, 0.8
          %vm2144 = vcmp.gt.f32.partialorder %v2033, 0.8
          %vm2145 = vcmp.gt.f32.partialorder %v2035, 0.8
          %vm2146 = vcmp.gt.f32.partialorder %v2037, 0.8
          %vm2147 = vcmp.gt.f32.partialorder %v2039, 0.8
          %vm2148 = vcmp.gt.f32.partialorder %v2041, 0.8
          %vm2149 = vcmp.gt.f32.partialorder %v2043, 0.8
          %vm2150 = vcmp.gt.f32.partialorder %v2045, 0.8
          %vm2151 = vcmp.gt.f32.partialorder %v2047, 0.8
          %vm2152 = vcmp.gt.f32.partialorder %v2049, 0.8
          %vm2153 = vcmp.gt.f32.partialorder %v2051, 0.8
          %vm2154 = vcmp.gt.f32.partialorder %v2053, 0.8
          %vm2155 = vcmp.gt.f32.partialorder %v2055, 0.8
          %vm2156 = vcmp.gt.f32.partialorder %v2057, 0.8
          %vm2157 = vcmp.gt.f32.partialorder %v2059, 0.8
          %vm2158 = vcmp.gt.f32.partialorder %v2061, 0.8
          %vm2159 = vcmp.gt.f32.partialorder %v2063, 0.8
          %vm2160 = vcmp.gt.f32.partialorder %v2065, 0.8
          %vm2161 = vcmp.gt.f32.partialorder %v2067, 0.8
          %vm2162 = vcmp.gt.f32.partialorder %v2069, 0.8
          %vm2163 = vcmp.gt.f32.partialorder %v2071, 0.8
          %vm2164 = vcmp.gt.f32.partialorder %v2073, 0.8
          %vm2165 = vcmp.gt.f32.partialorder %v2075, 0.8
          %vm2166 = vcmp.gt.f32.partialorder %v2077, 0.8
          %vm2167 = vcmp.gt.f32.partialorder %v2079, 0.8
          %vm2168 = vcmp.gt.f32.partialorder %v2081, 0.8
          %vm2169 = vcmp.gt.f32.partialorder %v2083, 0.8
          %vm2170 = vcmp.gt.f32.partialorder %v2085, 0.8
          %vm2171 = vcmp.gt.f32.partialorder %v2087, 0.8
          %vm2172 = vcmp.gt.f32.partialorder %v2089, 0.8
          %vm2173 = vcmp.gt.f32.partialorder %v2091, 0.8
          %vm2174 = vcmp.gt.f32.partialorder %v2093, 0.8
          %vm2175 = vcmp.gt.f32.partialorder %v2095, 0.8
          %vm2176 = vcmp.gt.f32.partialorder %v2097, 0.8
          %vm2177 = vcmp.gt.f32.partialorder %v2099, 0.8
          %vm2178 = vcmp.gt.f32.partialorder %v2101, 0.8
          %vm2179 = vcmp.gt.f32.partialorder %v2103, 0.8
          %vm2180 = vcmp.gt.f32.partialorder %v2105, 0.8
          %vm2181 = vcmp.gt.f32.partialorder %v2107, 0.8
          %vm2182 = vcmp.gt.f32.partialorder %v2109, 0.8
          %vm2183 = vcmp.gt.f32.partialorder %v2111, 0.8
          %vm2184 = vcmp.gt.f32.partialorder %v2113, 0.8
          %vm2185 = vcmp.gt.f32.partialorder %v2115, 0.8
          %vm2186 = vcmp.gt.f32.partialorder %v2117, 0.8
          %vm2187 = vcmp.gt.f32.partialorder %v2119, 0.8
          %vm2188 = vcmp.gt.f32.partialorder %v2121, 0.8
          %vm2189 = vcmp.gt.f32.partialorder %v2123, 0.8
          %vm2190 = vcmp.gt.f32.partialorder %v2125, 0.8
          %vm2191 = vcmp.gt.f32.partialorder %v2127, 0.8
          %v2192 = vsel %vm2128, %v2001, 0.0
          %v2193 = vsel %vm2129, %v2003, 0.0
          %v2194 = vsel %vm2130, %v2005, 0.0
          %v2195 = vsel %vm2131, %v2007, 0.0
          %v2196 = vsel %vm2132, %v2009, 0.0
          %v2197 = vsel %vm2133, %v2011, 0.0
          %v2198 = vsel %vm2134, %v2013, 0.0
          %v2199 = vsel %vm2135, %v2015, 0.0
          %v2200 = vsel %vm2136, %v2017, 0.0
          %v2201 = vsel %vm2137, %v2019, 0.0
          %v2202 = vsel %vm2138, %v2021, 0.0
          %v2203 = vsel %vm2139, %v2023, 0.0
          %v2204 = vsel %vm2140, %v2025, 0.0
          %v2205 = vsel %vm2141, %v2027, 0.0
          %v2206 = vsel %vm2142, %v2029, 0.0
          %v2207 = vsel %vm2143, %v2031, 0.0
          %v2208 = vsel %vm2144, %v2033, 0.0
          %v2209 = vsel %vm2145, %v2035, 0.0
          %v2210 = vsel %vm2146, %v2037, 0.0
          %v2211 = vsel %vm2147, %v2039, 0.0
          %v2212 = vsel %vm2148, %v2041, 0.0
          %v2213 = vsel %vm2149, %v2043, 0.0
          %v2214 = vsel %vm2150, %v2045, 0.0
          %v2215 = vsel %vm2151, %v2047, 0.0
          %v2216 = vsel %vm2152, %v2049, 0.0
          %v2217 = vsel %vm2153, %v2051, 0.0
          %v2218 = vsel %vm2154, %v2053, 0.0
          %v2219 = vsel %vm2155, %v2055, 0.0
          %v2220 = vsel %vm2156, %v2057, 0.0
          %v2221 = vsel %vm2157, %v2059, 0.0
          %v2222 = vsel %vm2158, %v2061, 0.0
          %v2223 = vsel %vm2159, %v2063, 0.0
          %v2224 = vsel %vm2160, %v2065, 0.0
          %v2225 = vsel %vm2161, %v2067, 0.0
          %v2226 = vsel %vm2162, %v2069, 0.0
          %v2227 = vsel %vm2163, %v2071, 0.0
          %v2228 = vsel %vm2164, %v2073, 0.0
          %v2229 = vsel %vm2165, %v2075, 0.0
          %v2230 = vsel %vm2166, %v2077, 0.0
          %v2231 = vsel %vm2167, %v2079, 0.0
          %v2232 = vsel %vm2168, %v2081, 0.0
          %v2233 = vsel %vm2169, %v2083, 0.0
          %v2234 = vsel %vm2170, %v2085, 0.0
          %v2235 = vsel %vm2171, %v2087, 0.0
          %v2236 = vsel %vm2172, %v2089, 0.0
          %v2237 = vsel %vm2173, %v2091, 0.0
          %v2238 = vsel %vm2174, %v2093, 0.0
          %v2239 = vsel %vm2175, %v2095, 0.0
          %v2240 = vsel %vm2176, %v2097, 0.0
          %v2241 = vsel %vm2177, %v2099, 0.0
          %v2242 = vsel %vm2178, %v2101, 0.0
          %v2243 = vsel %vm2179, %v2103, 0.0
          %v2244 = vsel %vm2180, %v2105, 0.0
          %v2245 = vsel %vm2181, %v2107, 0.0
          %v2246 = vsel %vm2182, %v2109, 0.0
          %v2247 = vsel %vm2183, %v2111, 0.0
          %v2248 = vsel %vm2184, %v2113, 0.0
          %v2249 = vsel %vm2185, %v2115, 0.0
          %v2250 = vsel %vm2186, %v2117, 0.0
          %v2251 = vsel %vm2187, %v2119, 0.0
          %v2252 = vsel %vm2188, %v2121, 0.0
          %v2253 = vsel %vm2189, %v2123, 0.0
          %v2254 = vsel %vm2190, %v2125, 0.0
          %v2255 = vsel %vm2191, %v2127, 0.0
          %v2256 = vadd.f32 %v2192, %v2194
          %v2257 = vadd.f32 %v2256, %v2196
          %v2258 = vadd.f32 %v2257, %v2198
          %v2259 = vadd.f32 %v2258, %v2200
          %v2260 = vadd.f32 %v2259, %v2202
          %v2261 = vadd.f32 %v2260, %v2204
          %v2262 = vadd.f32 %v2261, %v2206
          %v2263 = vadd.f32 %v2262, %v2208
          %v2264 = vadd.f32 %v2263, %v2210
          %v2265 = vadd.f32 %v2264, %v2212
          %v2266 = vadd.f32 %v2265, %v2214
          %v2267 = vadd.f32 %v2266, %v2216
          %v2268 = vadd.f32 %v2267, %v2218
          %v2269 = vadd.f32 %v2268, %v2220
          %v2270 = vadd.f32 %v2269, %v2222
          %v2271 = vadd.f32 %v2270, %v2224
          %v2272 = vadd.f32 %v2271, %v2226
          %v2273 = vadd.f32 %v2272, %v2228
          %v2274 = vadd.f32 %v2273, %v2230
          %v2275 = vadd.f32 %v2274, %v2232
          %v2276 = vadd.f32 %v2275, %v2234
          %v2277 = vadd.f32 %v2276, %v2236
          %v2278 = vadd.f32 %v2277, %v2238
          %v2279 = vadd.f32 %v2278, %v2240
          %v2280 = vadd.f32 %v2279, %v2242
          %v2281 = vadd.f32 %v2280, %v2244
          %v2282 = vadd.f32 %v2281, %v2246
          %v2283 = vadd.f32 %v2282, %v2248
          %v2284 = vadd.f32 %v2283, %v2250
          %v2285 = vadd.f32 %v2284, %v2252
          %v2286 = vadd.f32 %v2285, %v2254
          %v2287 = vrot.slane %v2286, 4
          %v2288 = vadd.f32 %v2286, %v2287
          %v2289 = vrot.slane %v2288, 2
          %v2290 = vadd.f32 %v2288, %v2289
          %v2291 = vrot.slane %v2290, 1
          %v2292 = vadd.f32 %v2290, %v2291
          %v2293 = vadd.f32 %v2193, %v2195
          %v2294 = vadd.f32 %v2293, %v2197
          %v2295 = vadd.f32 %v2294, %v2199
          %v2296 = vadd.f32 %v2295, %v2201
          %v2297 = vadd.f32 %v2296, %v2203
          %v2298 = vadd.f32 %v2297, %v2205
          %v2299 = vadd.f32 %v2298, %v2207
          %v2300 = vadd.f32 %v2299, %v2209
          %v2301 = vadd.f32 %v2300, %v2211
          %v2302 = vadd.f32 %v2301, %v2213
          %v2303 = vadd.f32 %v2302, %v2215
          %v2304 = vadd.f32 %v2303, %v2217
          %v2305 = vadd.f32 %v2304, %v2219
          %v2306 = vadd.f32 %v2305, %v2221
          %v2307 = vadd.f32 %v2306, %v2223
          %v2308 = vadd.f32 %v2307, %v2225
          %v2309 = vadd.f32 %v2308, %v2227
          %v2310 = vadd.f32 %v2309, %v2229
          %v2311 = vadd.f32 %v2310, %v2231
          %v2312 = vadd.f32 %v2311, %v2233
          %v2313 = vadd.f32 %v2312, %v2235
          %v2314 = vadd.f32 %v2313, %v2237
          %v2315 = vadd.f32 %v2314, %v2239
          %v2316 = vadd.f32 %v2315, %v2241
          %v2317 = vadd.f32 %v2316, %v2243
          %v2318 = vadd.f32 %v2317, %v2245
          %v2319 = vadd.f32 %v2318, %v2247
          %v2320 = vadd.f32 %v2319, %v2249
          %v2321 = vadd.f32 %v2320, %v2251
          %v2322 = vadd.f32 %v2321, %v2253
          %v2323 = vadd.f32 %v2322, %v2255
          %v2324 = vrot.slane %v2323, 4
          %v2325 = vadd.f32 %v2323, %v2324
          %v2326 = vrot.slane %v2325, 2
          %v2327 = vadd.f32 %v2325, %v2326
          %v2328 = vrot.slane %v2327, 1
          %v2329 = vadd.f32 %v2327, %v2328
          %v2330 = vrcp.pop %v2292
          %v2331 = vrcp.pop %v2329
          %2332 = vmatprep.subr.mxu0 %v2193
          %2333 = vmatpush1.msra.mxu0 %v2192
          %2334 = vmatprep.subr.mxu0 %v2195
          %2335 = vmatpush1.msra.mxu0 %v2194
          %2336 = vmatprep.subr.mxu0 %v2197
          %2337 = vmatpush1.msra.mxu0 %v2196
          %2338 = vmatprep.subr.mxu0 %v2199
          %2339 = vmatpush1.msra.mxu0 %v2198
          %2340 = vmatprep.subr.mxu0 %v2201
          %2341 = vmatpush1.msra.mxu0 %v2200
          %2342 = vmatprep.subr.mxu0 %v2203
          %2343 = vmatpush1.msra.mxu0 %v2202
          %2344 = vmatprep.subr.mxu0 %v2205
          %2345 = vmatpush1.msra.mxu0 %v2204
          %2346 = vmatprep.subr.mxu0 %v2207
          %2347 = vmatpush1.msra.mxu0 %v2206
          %2348 = vmatprep.subr.mxu0 %v2209
          %2349 = vmatpush1.msra.mxu0 %v2208
          %2350 = vmatprep.subr.mxu0 %v2211
          %2351 = vmatpush1.msra.mxu0 %v2210
          %2352 = vmatprep.subr.mxu0 %v2213
          %2353 = vmatpush1.msra.mxu0 %v2212
          %2354 = vmatprep.subr.mxu0 %v2215
          %2355 = vmatpush1.msra.mxu0 %v2214
          %2356 = vmatprep.subr.mxu0 %v2217
          %2357 = vmatpush1.msra.mxu0 %v2216
          %2358 = vmatprep.subr.mxu0 %v2219
          %2359 = vmatpush1.msra.mxu0 %v2218
          %2360 = vmatprep.subr.mxu0 %v2221
          %2361 = vmatpush1.msra.mxu0 %v2220
          %2362 = vmatprep.subr.mxu0 %v2223
          %2363 = vmatpush1.msra.mxu0 %v2222
          %2364 = vmatprep.subr.mxu0 %v2225
          %2365 = vmatpush1.msra.mxu0 %v2224
          %2366 = vmatprep.subr.mxu0 %v2227
          %2367 = vmatpush1.msra.mxu0 %v2226
          %2368 = vmatprep.subr.mxu0 %v2229
          %2369 = vmatpush1.msra.mxu0 %v2228
          %2370 = vmatprep.subr.mxu0 %v2231
          %2371 = vmatpush1.msra.mxu0 %v2230
          %2372 = vmatprep.subr.mxu0 %v2233
          %2373 = vmatpush1.msra.mxu0 %v2232
          %2374 = vmatprep.subr.mxu0 %v2235
          %2375 = vmatpush1.msra.mxu0 %v2234
          %2376 = vmatprep.subr.mxu0 %v2237
          %2377 = vmatpush1.msra.mxu0 %v2236
          %2378 = vmatprep.subr.mxu0 %v2239
          %2379 = vmatpush1.msra.mxu0 %v2238
          %2380 = vmatprep.subr.mxu0 %v2241
          %2381 = vmatpush1.msra.mxu0 %v2240
          %2382 = vmatprep.subr.mxu0 %v2243
          %2383 = vmatpush1.msra.mxu0 %v2242
          %2384 = vmatprep.subr.mxu0 %v2245
          %2385 = vmatpush1.msra.mxu0 %v2244
          %2386 = vmatprep.subr.mxu0 %v2247
          %2387 = vmatpush1.msra.mxu0 %v2246
          %2388 = vmatprep.subr.mxu0 %v2249
          %2389 = vmatpush1.msra.mxu0 %v2248
          %2390 = vmatprep.subr.mxu0 %v2251
          %2391 = vmatpush1.msra.mxu0 %v2250
          %2392 = vmatprep.subr.mxu0 %v2253
          %2393 = vmatpush1.msra.mxu0 %v2252
          %2394 = vmatprep.subr.mxu0 %v2255
          %2395 = vmatpush1.msra.mxu0 %v2254
          %2396 = vmatprep.mubr.f32.mxu0 %v1741
          %2397 = vmatmul.mubr.f32.gmra.mrb[0].mxu0 %v1739
          %v2398 = vpop.f32.mrb[0].mxu0
          %v2399 = vadd.f32 0.0, %v2398
          %v2400 = vpop.f32.mrb[0].mxu0
          %v2401 = vadd.f32 0.0, %v2400
          %2402 = vdwg.mxu0
          %v2403 = vmul.f32 %v2399, %v2330
          %v2404 = vmul.f32 %v2401, %v2331
          %2406 = vset.pattern.permute.xlu0 0
          %2407 = vperm.xlu0 %2406, %v1743
          %v2408 = vpop.permute.xlu0 %2407
          %v2410 = vadd.f32 %v2403, %v2408
          %v2411 = vadd.f32 %v2404, %v2408
          %vm2412 = vcmp.gt.f32.partialorder %v1744, 0.8
          %vm2413 = vcmp.gt.f32.partialorder %v1745, 0.8
          %vm2414 = vcmp.gt.f32.partialorder %v1746, 0.8
          %vm2415 = vcmp.gt.f32.partialorder %v1747, 0.8
          %vm2416 = vcmp.gt.f32.partialorder %v1748, 0.8
          %vm2417 = vcmp.gt.f32.partialorder %v1749, 0.8
          %vm2418 = vcmp.gt.f32.partialorder %v1750, 0.8
          %vm2419 = vcmp.gt.f32.partialorder %v1751, 0.8
          %vm2420 = vcmp.gt.f32.partialorder %v1752, 0.8
          %vm2421 = vcmp.gt.f32.partialorder %v1753, 0.8
          %vm2422 = vcmp.gt.f32.partialorder %v1754, 0.8
          %vm2423 = vcmp.gt.f32.partialorder %v1755, 0.8
          %vm2424 = vcmp.gt.f32.partialorder %v1756, 0.8
          %vm2425 = vcmp.gt.f32.partialorder %v1757, 0.8
          %vm2426 = vcmp.gt.f32.partialorder %v1758, 0.8
          %vm2427 = vcmp.gt.f32.partialorder %v1759, 0.8
          %vm2428 = vcmp.gt.f32.partialorder %v1760, 0.8
          %vm2429 = vcmp.gt.f32.partialorder %v1761, 0.8
          %vm2430 = vcmp.gt.f32.partialorder %v1762, 0.8
          %vm2431 = vcmp.gt.f32.partialorder %v1763, 0.8
          %vm2432 = vcmp.gt.f32.partialorder %v1764, 0.8
          %vm2433 = vcmp.gt.f32.partialorder %v1765, 0.8
          %vm2434 = vcmp.gt.f32.partialorder %v1766, 0.8
          %vm2435 = vcmp.gt.f32.partialorder %v1767, 0.8
          %vm2436 = vcmp.gt.f32.partialorder %v1768, 0.8
          %vm2437 = vcmp.gt.f32.partialorder %v1769, 0.8
          %vm2438 = vcmp.gt.f32.partialorder %v1770, 0.8
          %vm2439 = vcmp.gt.f32.partialorder %v1771, 0.8
          %vm2440 = vcmp.gt.f32.partialorder %v1772, 0.8
          %vm2441 = vcmp.gt.f32.partialorder %v1773, 0.8
          %vm2442 = vcmp.gt.f32.partialorder %v1774, 0.8
          %vm2443 = vcmp.gt.f32.partialorder %v1775, 0.8
          %vm2444 = vcmp.gt.f32.partialorder %v1776, 0.8
          %vm2445 = vcmp.gt.f32.partialorder %v1777, 0.8
          %vm2446 = vcmp.gt.f32.partialorder %v1778, 0.8
          %vm2447 = vcmp.gt.f32.partialorder %v1779, 0.8
          %vm2448 = vcmp.gt.f32.partialorder %v1780, 0.8
          %vm2449 = vcmp.gt.f32.partialorder %v1781, 0.8
          %vm2450 = vcmp.gt.f32.partialorder %v1782, 0.8
          %vm2451 = vcmp.gt.f32.partialorder %v1783, 0.8
          %vm2452 = vcmp.gt.f32.partialorder %v1784, 0.8
          %vm2453 = vcmp.gt.f32.partialorder %v1785, 0.8
          %vm2454 = vcmp.gt.f32.partialorder %v1786, 0.8
          %vm2455 = vcmp.gt.f32.partialorder %v1787, 0.8
          %vm2456 = vcmp.gt.f32.partialorder %v1788, 0.8
          %vm2457 = vcmp.gt.f32.partialorder %v1789, 0.8
          %vm2458 = vcmp.gt.f32.partialorder %v1790, 0.8
          %vm2459 = vcmp.gt.f32.partialorder %v1791, 0.8
          %vm2460 = vcmp.gt.f32.partialorder %v1792, 0.8
          %vm2461 = vcmp.gt.f32.partialorder %v1793, 0.8
          %vm2462 = vcmp.gt.f32.partialorder %v1794, 0.8
          %vm2463 = vcmp.gt.f32.partialorder %v1795, 0.8
          %vm2464 = vcmp.gt.f32.partialorder %v1796, 0.8
          %vm2465 = vcmp.gt.f32.partialorder %v1797, 0.8
          %vm2466 = vcmp.gt.f32.partialorder %v1798, 0.8
          %vm2467 = vcmp.gt.f32.partialorder %v1799, 0.8
          %vm2468 = vcmp.gt.f32.partialorder %v1800, 0.8
          %vm2469 = vcmp.gt.f32.partialorder %v1801, 0.8
          %vm2470 = vcmp.gt.f32.partialorder %v1802, 0.8
          %vm2471 = vcmp.gt.f32.partialorder %v1803, 0.8
          %vm2472 = vcmp.gt.f32.partialorder %v1804, 0.8
          %vm2473 = vcmp.gt.f32.partialorder %v1805, 0.8
          %vm2474 = vcmp.gt.f32.partialorder %v1806, 0.8
          %vm2475 = vcmp.gt.f32.partialorder %v1807, 0.8
          %v2476 = vsel %vm2412, %v1744, 0.0
          %v2477 = vsel %vm2413, %v1745, 0.0
          %v2478 = vsel %vm2414, %v1746, 0.0
          %v2479 = vsel %vm2415, %v1747, 0.0
          %v2480 = vsel %vm2416, %v1748, 0.0
          %v2481 = vsel %vm2417, %v1749, 0.0
          %v2482 = vsel %vm2418, %v1750, 0.0
          %v2483 = vsel %vm2419, %v1751, 0.0
          %v2484 = vsel %vm2420, %v1752, 0.0
          %v2485 = vsel %vm2421, %v1753, 0.0
          %v2486 = vsel %vm2422, %v1754, 0.0
          %v2487 = vsel %vm2423, %v1755, 0.0
          %v2488 = vsel %vm2424, %v1756, 0.0
          %v2489 = vsel %vm2425, %v1757, 0.0
          %v2490 = vsel %vm2426, %v1758, 0.0
          %v2491 = vsel %vm2427, %v1759, 0.0
          %v2492 = vsel %vm2428, %v1760, 0.0
          %v2493 = vsel %vm2429, %v1761, 0.0
          %v2494 = vsel %vm2430, %v1762, 0.0
          %v2495 = vsel %vm2431, %v1763, 0.0
          %v2496 = vsel %vm2432, %v1764, 0.0
          %v2497 = vsel %vm2433, %v1765, 0.0
          %v2498 = vsel %vm2434, %v1766, 0.0
          %v2499 = vsel %vm2435, %v1767, 0.0
          %v2500 = vsel %vm2436, %v1768, 0.0
          %v2501 = vsel %vm2437, %v1769, 0.0
          %v2502 = vsel %vm2438, %v1770, 0.0
          %v2503 = vsel %vm2439, %v1771, 0.0
          %v2504 = vsel %vm2440, %v1772, 0.0
          %v2505 = vsel %vm2441, %v1773, 0.0
          %v2506 = vsel %vm2442, %v1774, 0.0
          %v2507 = vsel %vm2443, %v1775, 0.0
          %v2508 = vsel %vm2444, %v1776, 0.0
          %v2509 = vsel %vm2445, %v1777, 0.0
          %v2510 = vsel %vm2446, %v1778, 0.0
          %v2511 = vsel %vm2447, %v1779, 0.0
          %v2512 = vsel %vm2448, %v1780, 0.0
          %v2513 = vsel %vm2449, %v1781, 0.0
          %v2514 = vsel %vm2450, %v1782, 0.0
          %v2515 = vsel %vm2451, %v1783, 0.0
          %v2516 = vsel %vm2452, %v1784, 0.0
          %v2517 = vsel %vm2453, %v1785, 0.0
          %v2518 = vsel %vm2454, %v1786, 0.0
          %v2519 = vsel %vm2455, %v1787, 0.0
          %v2520 = vsel %vm2456, %v1788, 0.0
          %v2521 = vsel %vm2457, %v1789, 0.0
          %v2522 = vsel %vm2458, %v1790, 0.0
          %v2523 = vsel %vm2459, %v1791, 0.0
          %v2524 = vsel %vm2460, %v1792, 0.0
          %v2525 = vsel %vm2461, %v1793, 0.0
          %v2526 = vsel %vm2462, %v1794, 0.0
          %v2527 = vsel %vm2463, %v1795, 0.0
          %v2528 = vsel %vm2464, %v1796, 0.0
          %v2529 = vsel %vm2465, %v1797, 0.0
          %v2530 = vsel %vm2466, %v1798, 0.0
          %v2531 = vsel %vm2467, %v1799, 0.0
          %v2532 = vsel %vm2468, %v1800, 0.0
          %v2533 = vsel %vm2469, %v1801, 0.0
          %v2534 = vsel %vm2470, %v1802, 0.0
          %v2535 = vsel %vm2471, %v1803, 0.0
          %v2536 = vsel %vm2472, %v1804, 0.0
          %v2537 = vsel %vm2473, %v1805, 0.0
          %v2538 = vsel %vm2474, %v1806, 0.0
          %v2539 = vsel %vm2475, %v1807, 0.0
          %v2540 = vadd.f32 %v2476, %v2478
          %v2541 = vadd.f32 %v2540, %v2480
          %v2542 = vadd.f32 %v2541, %v2482
          %v2543 = vadd.f32 %v2542, %v2484
          %v2544 = vadd.f32 %v2543, %v2486
          %v2545 = vadd.f32 %v2544, %v2488
          %v2546 = vadd.f32 %v2545, %v2490
          %v2547 = vadd.f32 %v2546, %v2492
          %v2548 = vadd.f32 %v2547, %v2494
          %v2549 = vadd.f32 %v2548, %v2496
          %v2550 = vadd.f32 %v2549, %v2498
          %v2551 = vadd.f32 %v2550, %v2500
          %v2552 = vadd.f32 %v2551, %v2502
          %v2553 = vadd.f32 %v2552, %v2504
          %v2554 = vadd.f32 %v2553, %v2506
          %v2555 = vadd.f32 %v2554, %v2508
          %v2556 = vadd.f32 %v2555, %v2510
          %v2557 = vadd.f32 %v2556, %v2512
          %v2558 = vadd.f32 %v2557, %v2514
          %v2559 = vadd.f32 %v2558, %v2516
          %v2560 = vadd.f32 %v2559, %v2518
          %v2561 = vadd.f32 %v2560, %v2520
          %v2562 = vadd.f32 %v2561, %v2522
          %v2563 = vadd.f32 %v2562, %v2524
          %v2564 = vadd.f32 %v2563, %v2526
          %v2565 = vadd.f32 %v2564, %v2528
          %v2566 = vadd.f32 %v2565, %v2530
          %v2567 = vadd.f32 %v2566, %v2532
          %v2568 = vadd.f32 %v2567, %v2534
          %v2569 = vadd.f32 %v2568, %v2536
          %v2570 = vadd.f32 %v2569, %v2538
          %v2571 = vrot.slane %v2570, 4
          %v2572 = vadd.f32 %v2570, %v2571
          %v2573 = vrot.slane %v2572, 2
          %v2574 = vadd.f32 %v2572, %v2573
          %v2575 = vrot.slane %v2574, 1
          %v2576 = vadd.f32 %v2574, %v2575
          %v2577 = vadd.f32 %v2477, %v2479
          %v2578 = vadd.f32 %v2577, %v2481
          %v2579 = vadd.f32 %v2578, %v2483
          %v2580 = vadd.f32 %v2579, %v2485
          %v2581 = vadd.f32 %v2580, %v2487
          %v2582 = vadd.f32 %v2581, %v2489
          %v2583 = vadd.f32 %v2582, %v2491
          %v2584 = vadd.f32 %v2583, %v2493
          %v2585 = vadd.f32 %v2584, %v2495
          %v2586 = vadd.f32 %v2585, %v2497
          %v2587 = vadd.f32 %v2586, %v2499
          %v2588 = vadd.f32 %v2587, %v2501
          %v2589 = vadd.f32 %v2588, %v2503
          %v2590 = vadd.f32 %v2589, %v2505
          %v2591 = vadd.f32 %v2590, %v2507
          %v2592 = vadd.f32 %v2591, %v2509
          %v2593 = vadd.f32 %v2592, %v2511
          %v2594 = vadd.f32 %v2593, %v2513
          %v2595 = vadd.f32 %v2594, %v2515
          %v2596 = vadd.f32 %v2595, %v2517
          %v2597 = vadd.f32 %v2596, %v2519
          %v2598 = vadd.f32 %v2597, %v2521
          %v2599 = vadd.f32 %v2598, %v2523
          %v2600 = vadd.f32 %v2599, %v2525
          %v2601 = vadd.f32 %v2600, %v2527
          %v2602 = vadd.f32 %v2601, %v2529
          %v2603 = vadd.f32 %v2602, %v2531
          %v2604 = vadd.f32 %v2603, %v2533
          %v2605 = vadd.f32 %v2604, %v2535
          %v2606 = vadd.f32 %v2605, %v2537
          %v2607 = vadd.f32 %v2606, %v2539
          %v2608 = vrot.slane %v2607, 4
          %v2609 = vadd.f32 %v2607, %v2608
          %v2610 = vrot.slane %v2609, 2
          %v2611 = vadd.f32 %v2609, %v2610
          %v2612 = vrot.slane %v2611, 1
          %v2613 = vadd.f32 %v2611, %v2612
          %v2614 = vrcp.pop %v2576
          %v2615 = vrcp.pop %v2613
          %2616 = vmatprep.subr.mxu0 %v2477
          %2617 = vmatpush1.msra.mxu0 %v2476
          %2618 = vmatprep.subr.mxu0 %v2479
          %2619 = vmatpush1.msra.mxu0 %v2478
          %2620 = vmatprep.subr.mxu0 %v2481
          %2621 = vmatpush1.msra.mxu0 %v2480
          %2622 = vmatprep.subr.mxu0 %v2483
          %2623 = vmatpush1.msra.mxu0 %v2482
          %2624 = vmatprep.subr.mxu0 %v2485
          %2625 = vmatpush1.msra.mxu0 %v2484
          %2626 = vmatprep.subr.mxu0 %v2487
          %2627 = vmatpush1.msra.mxu0 %v2486
          %2628 = vmatprep.subr.mxu0 %v2489
          %2629 = vmatpush1.msra.mxu0 %v2488
          %2630 = vmatprep.subr.mxu0 %v2491
          %2631 = vmatpush1.msra.mxu0 %v2490
          %2632 = vmatprep.subr.mxu0 %v2493
          %2633 = vmatpush1.msra.mxu0 %v2492
          %2634 = vmatprep.subr.mxu0 %v2495
          %2635 = vmatpush1.msra.mxu0 %v2494
          %2636 = vmatprep.subr.mxu0 %v2497
          %2637 = vmatpush1.msra.mxu0 %v2496
          %2638 = vmatprep.subr.mxu0 %v2499
          %2639 = vmatpush1.msra.mxu0 %v2498
          %2640 = vmatprep.subr.mxu0 %v2501
          %2641 = vmatpush1.msra.mxu0 %v2500
          %2642 = vmatprep.subr.mxu0 %v2503
          %2643 = vmatpush1.msra.mxu0 %v2502
          %2644 = vmatprep.subr.mxu0 %v2505
          %2645 = vmatpush1.msra.mxu0 %v2504
          %2646 = vmatprep.subr.mxu0 %v2507
          %2647 = vmatpush1.msra.mxu0 %v2506
          %2648 = vmatprep.subr.mxu0 %v2509
          %2649 = vmatpush1.msra.mxu0 %v2508
          %2650 = vmatprep.subr.mxu0 %v2511
          %2651 = vmatpush1.msra.mxu0 %v2510
          %2652 = vmatprep.subr.mxu0 %v2513
          %2653 = vmatpush1.msra.mxu0 %v2512
          %2654 = vmatprep.subr.mxu0 %v2515
          %2655 = vmatpush1.msra.mxu0 %v2514
          %2656 = vmatprep.subr.mxu0 %v2517
          %2657 = vmatpush1.msra.mxu0 %v2516
          %2658 = vmatprep.subr.mxu0 %v2519
          %2659 = vmatpush1.msra.mxu0 %v2518
          %2660 = vmatprep.subr.mxu0 %v2521
          %2661 = vmatpush1.msra.mxu0 %v2520
          %2662 = vmatprep.subr.mxu0 %v2523
          %2663 = vmatpush1.msra.mxu0 %v2522
          %2664 = vmatprep.subr.mxu0 %v2525
          %2665 = vmatpush1.msra.mxu0 %v2524
          %2666 = vmatprep.subr.mxu0 %v2527
          %2667 = vmatpush1.msra.mxu0 %v2526
          %2668 = vmatprep.subr.mxu0 %v2529
          %2669 = vmatpush1.msra.mxu0 %v2528
          %2670 = vmatprep.subr.mxu0 %v2531
          %2671 = vmatpush1.msra.mxu0 %v2530
          %2672 = vmatprep.subr.mxu0 %v2533
          %2673 = vmatpush1.msra.mxu0 %v2532
          %2674 = vmatprep.subr.mxu0 %v2535
          %2675 = vmatpush1.msra.mxu0 %v2534
          %2676 = vmatprep.subr.mxu0 %v2537
          %2677 = vmatpush1.msra.mxu0 %v2536
          %2678 = vmatprep.subr.mxu0 %v2539
          %2679 = vmatpush1.msra.mxu0 %v2538
          %2680 = vmatprep.mubr.f32.mxu0 %v1741
          %2681 = vmatmul.mubr.f32.gmra.mrb[0].mxu0 %v1739
          %v2682 = vpop.f32.mrb[0].mxu0
          %v2683 = vadd.f32 0.0, %v2682
          %v2684 = vpop.f32.mrb[0].mxu0
          %v2685 = vadd.f32 0.0, %v2684
          %2686 = vdwg.mxu0
          %v2687 = vmul.f32 %v2683, %v2614
          %v2688 = vmul.f32 %v2685, %v2615
          %v2689 = vadd.f32 %v2687, %v2408
          %v2690 = vadd.f32 %v2688, %v2408
          %vm2691 = vcmp.gt.f32.partialorder %v2689, %v2410
          %vm2692 = vcmp.gt.f32.partialorder %v2690, %v2411
          %v2693 = vsel %vm2691, %v2689, %v2410
          %v2694 = vsel %vm2692, %v2690, %v2411
          %v2695 = vsel %vm2691, 1, 0
          %v2696 = vsel %vm2692, 1, 0
          %v2697 = vmul.f32 %v1744, %v1744
          %v2698 = vmul.f32 %v1745, %v1745
          %v2699 = vmul.f32 %v1746, %v1746
          %v2700 = vmul.f32 %v1747, %v1747
          %v2701 = vmul.f32 %v1748, %v1748
          %v2702 = vmul.f32 %v1749, %v1749
          %v2703 = vmul.f32 %v1750, %v1750
          %v2704 = vmul.f32 %v1751, %v1751
          %v2705 = vmul.f32 %v1752, %v1752
          %v2706 = vmul.f32 %v1753, %v1753
          %v2707 = vmul.f32 %v1754, %v1754
          %v2708 = vmul.f32 %v1755, %v1755
          %v2709 = vmul.f32 %v1756, %v1756
          %v2710 = vmul.f32 %v1757, %v1757
          %v2711 = vmul.f32 %v1758, %v1758
          %v2712 = vmul.f32 %v1759, %v1759
          %v2713 = vmul.f32 %v1760, %v1760
          %v2714 = vmul.f32 %v1761, %v1761
          %v2715 = vmul.f32 %v1762, %v1762
          %v2716 = vmul.f32 %v1763, %v1763
          %v2717 = vmul.f32 %v1764, %v1764
          %v2718 = vmul.f32 %v1765, %v1765
          %v2719 = vmul.f32 %v1766, %v1766
          %v2720 = vmul.f32 %v1767, %v1767
          %v2721 = vmul.f32 %v1768, %v1768
          %v2722 = vmul.f32 %v1769, %v1769
          %v2723 = vmul.f32 %v1770, %v1770
          %v2724 = vmul.f32 %v1771, %v1771
          %v2725 = vmul.f32 %v1772, %v1772
          %v2726 = vmul.f32 %v1773, %v1773
          %v2727 = vmul.f32 %v1774, %v1774
          %v2728 = vmul.f32 %v1775, %v1775
          %v2729 = vmul.f32 %v1776, %v1776
          %v2730 = vmul.f32 %v1777, %v1777
          %v2731 = vmul.f32 %v1778, %v1778
          %v2732 = vmul.f32 %v1779, %v1779
          %v2733 = vmul.f32 %v1780, %v1780
          %v2734 = vmul.f32 %v1781, %v1781
          %v2735 = vmul.f32 %v1782, %v1782
          %v2736 = vmul.f32 %v1783, %v1783
          %v2737 = vmul.f32 %v1784, %v1784
          %v2738 = vmul.f32 %v1785, %v1785
          %v2739 = vmul.f32 %v1786, %v1786
          %v2740 = vmul.f32 %v1787, %v1787
          %v2741 = vmul.f32 %v1788, %v1788
          %v2742 = vmul.f32 %v1789, %v1789
          %v2743 = vmul.f32 %v1790, %v1790
          %v2744 = vmul.f32 %v1791, %v1791
          %v2745 = vmul.f32 %v1792, %v1792
          %v2746 = vmul.f32 %v1793, %v1793
          %v2747 = vmul.f32 %v1794, %v1794
          %v2748 = vmul.f32 %v1795, %v1795
          %v2749 = vmul.f32 %v1796, %v1796
          %v2750 = vmul.f32 %v1797, %v1797
          %v2751 = vmul.f32 %v1798, %v1798
          %v2752 = vmul.f32 %v1799, %v1799
          %v2753 = vmul.f32 %v1800, %v1800
          %v2754 = vmul.f32 %v1801, %v1801
          %v2755 = vmul.f32 %v1802, %v1802
          %v2756 = vmul.f32 %v1803, %v1803
          %v2757 = vmul.f32 %v1804, %v1804
          %v2758 = vmul.f32 %v1805, %v1805
          %v2759 = vmul.f32 %v1806, %v1806
          %v2760 = vmul.f32 %v1807, %v1807
          %v2761 = vmul.f32 %v2697, %v2697
          %v2762 = vmul.f32 %v2698, %v2698
          %v2763 = vmul.f32 %v2699, %v2699
          %v2764 = vmul.f32 %v2700, %v2700
          %v2765 = vmul.f32 %v2701, %v2701
          %v2766 = vmul.f32 %v2702, %v2702
          %v2767 = vmul.f32 %v2703, %v2703
          %v2768 = vmul.f32 %v2704, %v2704
          %v2769 = vmul.f32 %v2705, %v2705
          %v2770 = vmul.f32 %v2706, %v2706
          %v2771 = vmul.f32 %v2707, %v2707
          %v2772 = vmul.f32 %v2708, %v2708
          %v2773 = vmul.f32 %v2709, %v2709
          %v2774 = vmul.f32 %v2710, %v2710
          %v2775 = vmul.f32 %v2711, %v2711
          %v2776 = vmul.f32 %v2712, %v2712
          %v2777 = vmul.f32 %v2713, %v2713
          %v2778 = vmul.f32 %v2714, %v2714
          %v2779 = vmul.f32 %v2715, %v2715
          %v2780 = vmul.f32 %v2716, %v2716
          %v2781 = vmul.f32 %v2717, %v2717
          %v2782 = vmul.f32 %v2718, %v2718
          %v2783 = vmul.f32 %v2719, %v2719
          %v2784 = vmul.f32 %v2720, %v2720
          %v2785 = vmul.f32 %v2721, %v2721
          %v2786 = vmul.f32 %v2722, %v2722
          %v2787 = vmul.f32 %v2723, %v2723
          %v2788 = vmul.f32 %v2724, %v2724
          %v2789 = vmul.f32 %v2725, %v2725
          %v2790 = vmul.f32 %v2726, %v2726
          %v2791 = vmul.f32 %v2727, %v2727
          %v2792 = vmul.f32 %v2728, %v2728
          %v2793 = vmul.f32 %v2729, %v2729
          %v2794 = vmul.f32 %v2730, %v2730
          %v2795 = vmul.f32 %v2731, %v2731
          %v2796 = vmul.f32 %v2732, %v2732
          %v2797 = vmul.f32 %v2733, %v2733
          %v2798 = vmul.f32 %v2734, %v2734
          %v2799 = vmul.f32 %v2735, %v2735
          %v2800 = vmul.f32 %v2736, %v2736
          %v2801 = vmul.f32 %v2737, %v2737
          %v2802 = vmul.f32 %v2738, %v2738
          %v2803 = vmul.f32 %v2739, %v2739
          %v2804 = vmul.f32 %v2740, %v2740
          %v2805 = vmul.f32 %v2741, %v2741
          %v2806 = vmul.f32 %v2742, %v2742
          %v2807 = vmul.f32 %v2743, %v2743
          %v2808 = vmul.f32 %v2744, %v2744
          %v2809 = vmul.f32 %v2745, %v2745
          %v2810 = vmul.f32 %v2746, %v2746
          %v2811 = vmul.f32 %v2747, %v2747
          %v2812 = vmul.f32 %v2748, %v2748
          %v2813 = vmul.f32 %v2749, %v2749
          %v2814 = vmul.f32 %v2750, %v2750
          %v2815 = vmul.f32 %v2751, %v2751
          %v2816 = vmul.f32 %v2752, %v2752
          %v2817 = vmul.f32 %v2753, %v2753
          %v2818 = vmul.f32 %v2754, %v2754
          %v2819 = vmul.f32 %v2755, %v2755
          %v2820 = vmul.f32 %v2756, %v2756
          %v2821 = vmul.f32 %v2757, %v2757
          %v2822 = vmul.f32 %v2758, %v2758
          %v2823 = vmul.f32 %v2759, %v2759
          %v2824 = vmul.f32 %v2760, %v2760
          %v2825 = vmul.f32 %v2761, %v1744
          %v2826 = vmul.f32 %v2762, %v1745
          %v2827 = vmul.f32 %v2763, %v1746
          %v2828 = vmul.f32 %v2764, %v1747
          %v2829 = vmul.f32 %v2765, %v1748
          %v2830 = vmul.f32 %v2766, %v1749
          %v2831 = vmul.f32 %v2767, %v1750
          %v2832 = vmul.f32 %v2768, %v1751
          %v2833 = vmul.f32 %v2769, %v1752
          %v2834 = vmul.f32 %v2770, %v1753
          %v2835 = vmul.f32 %v2771, %v1754
          %v2836 = vmul.f32 %v2772, %v1755
          %v2837 = vmul.f32 %v2773, %v1756
          %v2838 = vmul.f32 %v2774, %v1757
          %v2839 = vmul.f32 %v2775, %v1758
          %v2840 = vmul.f32 %v2776, %v1759
          %v2841 = vmul.f32 %v2777, %v1760
          %v2842 = vmul.f32 %v2778, %v1761
          %v2843 = vmul.f32 %v2779, %v1762
          %v2844 = vmul.f32 %v2780, %v1763
          %v2845 = vmul.f32 %v2781, %v1764
          %v2846 = vmul.f32 %v2782, %v1765
          %v2847 = vmul.f32 %v2783, %v1766
          %v2848 = vmul.f32 %v2784, %v1767
          %v2849 = vmul.f32 %v2785, %v1768
          %v2850 = vmul.f32 %v2786, %v1769
          %v2851 = vmul.f32 %v2787, %v1770
          %v2852 = vmul.f32 %v2788, %v1771
          %v2853 = vmul.f32 %v2789, %v1772
          %v2854 = vmul.f32 %v2790, %v1773
          %v2855 = vmul.f32 %v2791, %v1774
          %v2856 = vmul.f32 %v2792, %v1775
          %v2857 = vmul.f32 %v2793, %v1776
          %v2858 = vmul.f32 %v2794, %v1777
          %v2859 = vmul.f32 %v2795, %v1778
          %v2860 = vmul.f32 %v2796, %v1779
          %v2861 = vmul.f32 %v2797, %v1780
          %v2862 = vmul.f32 %v2798, %v1781
          %v2863 = vmul.f32 %v2799, %v1782
          %v2864 = vmul.f32 %v2800, %v1783
          %v2865 = vmul.f32 %v2801, %v1784
          %v2866 = vmul.f32 %v2802, %v1785
          %v2867 = vmul.f32 %v2803, %v1786
          %v2868 = vmul.f32 %v2804, %v1787
          %v2869 = vmul.f32 %v2805, %v1788
          %v2870 = vmul.f32 %v2806, %v1789
          %v2871 = vmul.f32 %v2807, %v1790
          %v2872 = vmul.f32 %v2808, %v1791
          %v2873 = vmul.f32 %v2809, %v1792
          %v2874 = vmul.f32 %v2810, %v1793
          %v2875 = vmul.f32 %v2811, %v1794
          %v2876 = vmul.f32 %v2812, %v1795
          %v2877 = vmul.f32 %v2813, %v1796
          %v2878 = vmul.f32 %v2814, %v1797
          %v2879 = vmul.f32 %v2815, %v1798
          %v2880 = vmul.f32 %v2816, %v1799
          %v2881 = vmul.f32 %v2817, %v1800
          %v2882 = vmul.f32 %v2818, %v1801
          %v2883 = vmul.f32 %v2819, %v1802
          %v2884 = vmul.f32 %v2820, %v1803
          %v2885 = vmul.f32 %v2821, %v1804
          %v2886 = vmul.f32 %v2822, %v1805
          %v2887 = vmul.f32 %v2823, %v1806
          %v2888 = vmul.f32 %v2824, %v1807
          %vm2889 = vcmp.gt.f32.partialorder %v2825, 0.8
          %vm2890 = vcmp.gt.f32.partialorder %v2826, 0.8
          %vm2891 = vcmp.gt.f32.partialorder %v2827, 0.8
          %vm2892 = vcmp.gt.f32.partialorder %v2828, 0.8
          %vm2893 = vcmp.gt.f32.partialorder %v2829, 0.8
          %vm2894 = vcmp.gt.f32.partialorder %v2830, 0.8
          %vm2895 = vcmp.gt.f32.partialorder %v2831, 0.8
          %vm2896 = vcmp.gt.f32.partialorder %v2832, 0.8
          %vm2897 = vcmp.gt.f32.partialorder %v2833, 0.8
          %vm2898 = vcmp.gt.f32.partialorder %v2834, 0.8
          %vm2899 = vcmp.gt.f32.partialorder %v2835, 0.8
          %vm2900 = vcmp.gt.f32.partialorder %v2836, 0.8
          %vm2901 = vcmp.gt.f32.partialorder %v2837, 0.8
          %vm2902 = vcmp.gt.f32.partialorder %v2838, 0.8
          %vm2903 = vcmp.gt.f32.partialorder %v2839, 0.8
          %vm2904 = vcmp.gt.f32.partialorder %v2840, 0.8
          %vm2905 = vcmp.gt.f32.partialorder %v2841, 0.8
          %vm2906 = vcmp.gt.f32.partialorder %v2842, 0.8
          %vm2907 = vcmp.gt.f32.partialorder %v2843, 0.8
          %vm2908 = vcmp.gt.f32.partialorder %v2844, 0.8
          %vm2909 = vcmp.gt.f32.partialorder %v2845, 0.8
          %vm2910 = vcmp.gt.f32.partialorder %v2846, 0.8
          %vm2911 = vcmp.gt.f32.partialorder %v2847, 0.8
          %vm2912 = vcmp.gt.f32.partialorder %v2848, 0.8
          %vm2913 = vcmp.gt.f32.partialorder %v2849, 0.8
          %vm2914 = vcmp.gt.f32.partialorder %v2850, 0.8
          %vm2915 = vcmp.gt.f32.partialorder %v2851, 0.8
          %vm2916 = vcmp.gt.f32.partialorder %v2852, 0.8
          %vm2917 = vcmp.gt.f32.partialorder %v2853, 0.8
          %vm2918 = vcmp.gt.f32.partialorder %v2854, 0.8
          %vm2919 = vcmp.gt.f32.partialorder %v2855, 0.8
          %vm2920 = vcmp.gt.f32.partialorder %v2856, 0.8
          %vm2921 = vcmp.gt.f32.partialorder %v2857, 0.8
          %vm2922 = vcmp.gt.f32.partialorder %v2858, 0.8
          %vm2923 = vcmp.gt.f32.partialorder %v2859, 0.8
          %vm2924 = vcmp.gt.f32.partialorder %v2860, 0.8
          %vm2925 = vcmp.gt.f32.partialorder %v2861, 0.8
          %vm2926 = vcmp.gt.f32.partialorder %v2862, 0.8
          %vm2927 = vcmp.gt.f32.partialorder %v2863, 0.8
          %vm2928 = vcmp.gt.f32.partialorder %v2864, 0.8
          %vm2929 = vcmp.gt.f32.partialorder %v2865, 0.8
          %vm2930 = vcmp.gt.f32.partialorder %v2866, 0.8
          %vm2931 = vcmp.gt.f32.partialorder %v2867, 0.8
          %vm2932 = vcmp.gt.f32.partialorder %v2868, 0.8
          %vm2933 = vcmp.gt.f32.partialorder %v2869, 0.8
          %vm2934 = vcmp.gt.f32.partialorder %v2870, 0.8
          %vm2935 = vcmp.gt.f32.partialorder %v2871, 0.8
          %vm2936 = vcmp.gt.f32.partialorder %v2872, 0.8
          %vm2937 = vcmp.gt.f32.partialorder %v2873, 0.8
          %vm2938 = vcmp.gt.f32.partialorder %v2874, 0.8
          %vm2939 = vcmp.gt.f32.partialorder %v2875, 0.8
          %vm2940 = vcmp.gt.f32.partialorder %v2876, 0.8
          %vm2941 = vcmp.gt.f32.partialorder %v2877, 0.8
          %vm2942 = vcmp.gt.f32.partialorder %v2878, 0.8
          %vm2943 = vcmp.gt.f32.partialorder %v2879, 0.8
          %vm2944 = vcmp.gt.f32.partialorder %v2880, 0.8
          %vm2945 = vcmp.gt.f32.partialorder %v2881, 0.8
          %vm2946 = vcmp.gt.f32.partialorder %v2882, 0.8
          %vm2947 = vcmp.gt.f32.partialorder %v2883, 0.8
          %vm2948 = vcmp.gt.f32.partialorder %v2884, 0.8
          %vm2949 = vcmp.gt.f32.partialorder %v2885, 0.8
          %vm2950 = vcmp.gt.f32.partialorder %v2886, 0.8
          %vm2951 = vcmp.gt.f32.partialorder %v2887, 0.8
          %vm2952 = vcmp.gt.f32.partialorder %v2888, 0.8
          %v2953 = vsel %vm2889, %v2825, 0.0
          %v2954 = vsel %vm2890, %v2826, 0.0
          %v2955 = vsel %vm2891, %v2827, 0.0
          %v2956 = vsel %vm2892, %v2828, 0.0
          %v2957 = vsel %vm2893, %v2829, 0.0
          %v2958 = vsel %vm2894, %v2830, 0.0
          %v2959 = vsel %vm2895, %v2831, 0.0
          %v2960 = vsel %vm2896, %v2832, 0.0
          %v2961 = vsel %vm2897, %v2833, 0.0
          %v2962 = vsel %vm2898, %v2834, 0.0
          %v2963 = vsel %vm2899, %v2835, 0.0
          %v2964 = vsel %vm2900, %v2836, 0.0
          %v2965 = vsel %vm2901, %v2837, 0.0
          %v2966 = vsel %vm2902, %v2838, 0.0
          %v2967 = vsel %vm2903, %v2839, 0.0
          %v2968 = vsel %vm2904, %v2840, 0.0
          %v2969 = vsel %vm2905, %v2841, 0.0
          %v2970 = vsel %vm2906, %v2842, 0.0
          %v2971 = vsel %vm2907, %v2843, 0.0
          %v2972 = vsel %vm2908, %v2844, 0.0
          %v2973 = vsel %vm2909, %v2845, 0.0
          %v2974 = vsel %vm2910, %v2846, 0.0
          %v2975 = vsel %vm2911, %v2847, 0.0
          %v2976 = vsel %vm2912, %v2848, 0.0
          %v2977 = vsel %vm2913, %v2849, 0.0
          %v2978 = vsel %vm2914, %v2850, 0.0
          %v2979 = vsel %vm2915, %v2851, 0.0
          %v2980 = vsel %vm2916, %v2852, 0.0
          %v2981 = vsel %vm2917, %v2853, 0.0
          %v2982 = vsel %vm2918, %v2854, 0.0
          %v2983 = vsel %vm2919, %v2855, 0.0
          %v2984 = vsel %vm2920, %v2856, 0.0
          %v2985 = vsel %vm2921, %v2857, 0.0
          %v2986 = vsel %vm2922, %v2858, 0.0
          %v2987 = vsel %vm2923, %v2859, 0.0
          %v2988 = vsel %vm2924, %v2860, 0.0
          %v2989 = vsel %vm2925, %v2861, 0.0
          %v2990 = vsel %vm2926, %v2862, 0.0
          %v2991 = vsel %vm2927, %v2863, 0.0
          %v2992 = vsel %vm2928, %v2864, 0.0
          %v2993 = vsel %vm2929, %v2865, 0.0
          %v2994 = vsel %vm2930, %v2866, 0.0
          %v2995 = vsel %vm2931, %v2867, 0.0
          %v2996 = vsel %vm2932, %v2868, 0.0
          %v2997 = vsel %vm2933, %v2869, 0.0
          %v2998 = vsel %vm2934, %v2870, 0.0
          %v2999 = vsel %vm2935, %v2871, 0.0
          %v3000 = vsel %vm2936, %v2872, 0.0
          %v3001 = vsel %vm2937, %v2873, 0.0
          %v3002 = vsel %vm2938, %v2874, 0.0
          %v3003 = vsel %vm2939, %v2875, 0.0
          %v3004 = vsel %vm2940, %v2876, 0.0
          %v3005 = vsel %vm2941, %v2877, 0.0
          %v3006 = vsel %vm2942, %v2878, 0.0
          %v3007 = vsel %vm2943, %v2879, 0.0
          %v3008 = vsel %vm2944, %v2880, 0.0
          %v3009 = vsel %vm2945, %v2881, 0.0
          %v3010 = vsel %vm2946, %v2882, 0.0
          %v3011 = vsel %vm2947, %v2883, 0.0
          %v3012 = vsel %vm2948, %v2884, 0.0
          %v3013 = vsel %vm2949, %v2885, 0.0
          %v3014 = vsel %vm2950, %v2886, 0.0
          %v3015 = vsel %vm2951, %v2887, 0.0
          %v3016 = vsel %vm2952, %v2888, 0.0
          %v3017 = vadd.f32 %v2953, %v2955
          %v3018 = vadd.f32 %v3017, %v2957
          %v3019 = vadd.f32 %v3018, %v2959
          %v3020 = vadd.f32 %v3019, %v2961
          %v3021 = vadd.f32 %v3020, %v2963
          %v3022 = vadd.f32 %v3021, %v2965
          %v3023 = vadd.f32 %v3022, %v2967
          %v3024 = vadd.f32 %v3023, %v2969
          %v3025 = vadd.f32 %v3024, %v2971
          %v3026 = vadd.f32 %v3025, %v2973
          %v3027 = vadd.f32 %v3026, %v2975
          %v3028 = vadd.f32 %v3027, %v2977
          %v3029 = vadd.f32 %v3028, %v2979
          %v3030 = vadd.f32 %v3029, %v2981
          %v3031 = vadd.f32 %v3030, %v2983
          %v3032 = vadd.f32 %v3031, %v2985
          %v3033 = vadd.f32 %v3032, %v2987
          %v3034 = vadd.f32 %v3033, %v2989
          %v3035 = vadd.f32 %v3034, %v2991
          %v3036 = vadd.f32 %v3035, %v2993
          %v3037 = vadd.f32 %v3036, %v2995
          %v3038 = vadd.f32 %v3037, %v2997
          %v3039 = vadd.f32 %v3038, %v2999
          %v3040 = vadd.f32 %v3039, %v3001
          %v3041 = vadd.f32 %v3040, %v3003
          %v3042 = vadd.f32 %v3041, %v3005
          %v3043 = vadd.f32 %v3042, %v3007
          %v3044 = vadd.f32 %v3043, %v3009
          %v3045 = vadd.f32 %v3044, %v3011
          %v3046 = vadd.f32 %v3045, %v3013
          %v3047 = vadd.f32 %v3046, %v3015
          %v3048 = vrot.slane %v3047, 4
          %v3049 = vadd.f32 %v3047, %v3048
          %v3050 = vrot.slane %v3049, 2
          %v3051 = vadd.f32 %v3049, %v3050
          %v3052 = vrot.slane %v3051, 1
          %v3053 = vadd.f32 %v3051, %v3052
          %v3054 = vadd.f32 %v2954, %v2956
          %v3055 = vadd.f32 %v3054, %v2958
          %v3056 = vadd.f32 %v3055, %v2960
          %v3057 = vadd.f32 %v3056, %v2962
          %v3058 = vadd.f32 %v3057, %v2964
          %v3059 = vadd.f32 %v3058, %v2966
          %v3060 = vadd.f32 %v3059, %v2968
          %v3061 = vadd.f32 %v3060, %v2970
          %v3062 = vadd.f32 %v3061, %v2972
          %v3063 = vadd.f32 %v3062, %v2974
          %v3064 = vadd.f32 %v3063, %v2976
          %v3065 = vadd.f32 %v3064, %v2978
          %v3066 = vadd.f32 %v3065, %v2980
          %v3067 = vadd.f32 %v3066, %v2982
          %v3068 = vadd.f32 %v3067, %v2984
          %v3069 = vadd.f32 %v3068, %v2986
          %v3070 = vadd.f32 %v3069, %v2988
          %v3071 = vadd.f32 %v3070, %v2990
          %v3072 = vadd.f32 %v3071, %v2992
          %v3073 = vadd.f32 %v3072, %v2994
          %v3074 = vadd.f32 %v3073, %v2996
          %v3075 = vadd.f32 %v3074, %v2998
          %v3076 = vadd.f32 %v3075, %v3000
          %v3077 = vadd.f32 %v3076, %v3002
          %v3078 = vadd.f32 %v3077, %v3004
          %v3079 = vadd.f32 %v3078, %v3006
          %v3080 = vadd.f32 %v3079, %v3008
          %v3081 = vadd.f32 %v3080, %v3010
          %v3082 = vadd.f32 %v3081, %v3012
          %v3083 = vadd.f32 %v3082, %v3014
          %v3084 = vadd.f32 %v3083, %v3016
          %v3085 = vrot.slane %v3084, 4
          %v3086 = vadd.f32 %v3084, %v3085
          %v3087 = vrot.slane %v3086, 2
          %v3088 = vadd.f32 %v3086, %v3087
          %v3089 = vrot.slane %v3088, 1
          %v3090 = vadd.f32 %v3088, %v3089
          %v3091 = vrcp.pop %v3053
          %v3092 = vrcp.pop %v3090
          %3093 = vmatprep.subr.mxu0 %v2954
          %3094 = vmatpush1.msra.mxu0 %v2953
          %3095 = vmatprep.subr.mxu0 %v2956
          %3096 = vmatpush1.msra.mxu0 %v2955
          %3097 = vmatprep.subr.mxu0 %v2958
          %3098 = vmatpush1.msra.mxu0 %v2957
          %3099 = vmatprep.subr.mxu0 %v2960
          %3100 = vmatpush1.msra.mxu0 %v2959
          %3101 = vmatprep.subr.mxu0 %v2962
          %3102 = vmatpush1.msra.mxu0 %v2961
          %3103 = vmatprep.subr.mxu0 %v2964
          %3104 = vmatpush1.msra.mxu0 %v2963
          %3105 = vmatprep.subr.mxu0 %v2966
          %3106 = vmatpush1.msra.mxu0 %v2965
          %3107 = vmatprep.subr.mxu0 %v2968
          %3108 = vmatpush1.msra.mxu0 %v2967
          %3109 = vmatprep.subr.mxu0 %v2970
          %3110 = vmatpush1.msra.mxu0 %v2969
          %3111 = vmatprep.subr.mxu0 %v2972
          %3112 = vmatpush1.msra.mxu0 %v2971
          %3113 = vmatprep.subr.mxu0 %v2974
          %3114 = vmatpush1.msra.mxu0 %v2973
          %3115 = vmatprep.subr.mxu0 %v2976
          %3116 = vmatpush1.msra.mxu0 %v2975
          %3117 = vmatprep.subr.mxu0 %v2978
          %3118 = vmatpush1.msra.mxu0 %v2977
          %3119 = vmatprep.subr.mxu0 %v2980
          %3120 = vmatpush1.msra.mxu0 %v2979
          %3121 = vmatprep.subr.mxu0 %v2982
          %3122 = vmatpush1.msra.mxu0 %v2981
          %3123 = vmatprep.subr.mxu0 %v2984
          %3124 = vmatpush1.msra.mxu0 %v2983
          %3125 = vmatprep.subr.mxu0 %v2986
          %3126 = vmatpush1.msra.mxu0 %v2985
          %3127 = vmatprep.subr.mxu0 %v2988
          %3128 = vmatpush1.msra.mxu0 %v2987
          %3129 = vmatprep.subr.mxu0 %v2990
          %3130 = vmatpush1.msra.mxu0 %v2989
          %3131 = vmatprep.subr.mxu0 %v2992
          %3132 = vmatpush1.msra.mxu0 %v2991
          %3133 = vmatprep.subr.mxu0 %v2994
          %3134 = vmatpush1.msra.mxu0 %v2993
          %3135 = vmatprep.subr.mxu0 %v2996
          %3136 = vmatpush1.msra.mxu0 %v2995
          %3137 = vmatprep.subr.mxu0 %v2998
          %3138 = vmatpush1.msra.mxu0 %v2997
          %3139 = vmatprep.subr.mxu0 %v3000
          %3140 = vmatpush1.msra.mxu0 %v2999
          %3141 = vmatprep.subr.mxu0 %v3002
          %3142 = vmatpush1.msra.mxu0 %v3001
          %3143 = vmatprep.subr.mxu0 %v3004
          %3144 = vmatpush1.msra.mxu0 %v3003
          %3145 = vmatprep.subr.mxu0 %v3006
          %3146 = vmatpush1.msra.mxu0 %v3005
          %3147 = vmatprep.subr.mxu0 %v3008
          %3148 = vmatpush1.msra.mxu0 %v3007
          %3149 = vmatprep.subr.mxu0 %v3010
          %3150 = vmatpush1.msra.mxu0 %v3009
          %3151 = vmatprep.subr.mxu0 %v3012
          %3152 = vmatpush1.msra.mxu0 %v3011
          %3153 = vmatprep.subr.mxu0 %v3014
          %3154 = vmatpush1.msra.mxu0 %v3013
          %3155 = vmatprep.subr.mxu0 %v3016
          %3156 = vmatpush1.msra.mxu0 %v3015
          %3157 = vmatprep.mubr.f32.mxu0 %v1741
          %3158 = vmatmul.mubr.f32.gmra.mrb[0].mxu0 %v1739
          %v3159 = vpop.f32.mrb[0].mxu0
          %v3160 = vadd.f32 0.0, %v3159
          %v3161 = vpop.f32.mrb[0].mxu0
          %v3162 = vadd.f32 0.0, %v3161
          %3163 = vdwg.mxu0
          %v3164 = vmul.f32 %v3160, %v3091
          %v3165 = vmul.f32 %v3162, %v3092
          %v3166 = vadd.f32 %v3164, %v2408
          %v3167 = vadd.f32 %v3165, %v2408
          %vm3168 = vcmp.gt.f32.partialorder %v3166, %v2693
          %vm3169 = vcmp.gt.f32.partialorder %v3167, %v2694
          %v3170 = vsel %vm3168, %v3166, %v2693
          %v3171 = vsel %vm3169, %v3167, %v2694
          %v3172 = vsel %vm3168, 2, %v2695
          %v3173 = vsel %vm3169, 2, %v2696
          %v3174 = vmul.f32 %v2825, %v2825
          %v3175 = vmul.f32 %v2826, %v2826
          %v3176 = vmul.f32 %v2827, %v2827
          %v3177 = vmul.f32 %v2828, %v2828
          %v3178 = vmul.f32 %v2829, %v2829
          %v3179 = vmul.f32 %v2830, %v2830
          %v3180 = vmul.f32 %v2831, %v2831
          %v3181 = vmul.f32 %v2832, %v2832
          %v3182 = vmul.f32 %v2833, %v2833
          %v3183 = vmul.f32 %v2834, %v2834
          %v3184 = vmul.f32 %v2835, %v2835
          %v3185 = vmul.f32 %v2836, %v2836
          %v3186 = vmul.f32 %v2837, %v2837
          %v3187 = vmul.f32 %v2838, %v2838
          %v3188 = vmul.f32 %v2839, %v2839
          %v3189 = vmul.f32 %v2840, %v2840
          %v3190 = vmul.f32 %v2841, %v2841
          %v3191 = vmul.f32 %v2842, %v2842
          %v3192 = vmul.f32 %v2843, %v2843
          %v3193 = vmul.f32 %v2844, %v2844
          %v3194 = vmul.f32 %v2845, %v2845
          %v3195 = vmul.f32 %v2846, %v2846
          %v3196 = vmul.f32 %v2847, %v2847
          %v3197 = vmul.f32 %v2848, %v2848
          %v3198 = vmul.f32 %v2849, %v2849
          %v3199 = vmul.f32 %v2850, %v2850
          %v3200 = vmul.f32 %v2851, %v2851
          %v3201 = vmul.f32 %v2852, %v2852
          %v3202 = vmul.f32 %v2853, %v2853
          %v3203 = vmul.f32 %v2854, %v2854
          %v3204 = vmul.f32 %v2855, %v2855
          %v3205 = vmul.f32 %v2856, %v2856
          %v3206 = vmul.f32 %v2857, %v2857
          %v3207 = vmul.f32 %v2858, %v2858
          %v3208 = vmul.f32 %v2859, %v2859
          %v3209 = vmul.f32 %v2860, %v2860
          %v3210 = vmul.f32 %v2861, %v2861
          %v3211 = vmul.f32 %v2862, %v2862
          %v3212 = vmul.f32 %v2863, %v2863
          %v3213 = vmul.f32 %v2864, %v2864
          %v3214 = vmul.f32 %v2865, %v2865
          %v3215 = vmul.f32 %v2866, %v2866
          %v3216 = vmul.f32 %v2867, %v2867
          %v3217 = vmul.f32 %v2868, %v2868
          %v3218 = vmul.f32 %v2869, %v2869
          %v3219 = vmul.f32 %v2870, %v2870
          %v3220 = vmul.f32 %v2871, %v2871
          %v3221 = vmul.f32 %v2872, %v2872
          %v3222 = vmul.f32 %v2873, %v2873
          %v3223 = vmul.f32 %v2874, %v2874
          %v3224 = vmul.f32 %v2875, %v2875
          %v3225 = vmul.f32 %v2876, %v2876
          %v3226 = vmul.f32 %v2877, %v2877
          %v3227 = vmul.f32 %v2878, %v2878
          %v3228 = vmul.f32 %v2879, %v2879
          %v3229 = vmul.f32 %v2880, %v2880
          %v3230 = vmul.f32 %v2881, %v2881
          %v3231 = vmul.f32 %v2882, %v2882
          %v3232 = vmul.f32 %v2883, %v2883
          %v3233 = vmul.f32 %v2884, %v2884
          %v3234 = vmul.f32 %v2885, %v2885
          %v3235 = vmul.f32 %v2886, %v2886
          %v3236 = vmul.f32 %v2887, %v2887
          %v3237 = vmul.f32 %v2888, %v2888
          %vm3238 = vcmp.gt.f32.partialorder %v3174, 0.8
          %vm3239 = vcmp.gt.f32.partialorder %v3175, 0.8
          %vm3240 = vcmp.gt.f32.partialorder %v3176, 0.8
          %vm3241 = vcmp.gt.f32.partialorder %v3177, 0.8
          %vm3242 = vcmp.gt.f32.partialorder %v3178, 0.8
          %vm3243 = vcmp.gt.f32.partialorder %v3179, 0.8
          %vm3244 = vcmp.gt.f32.partialorder %v3180, 0.8
          %vm3245 = vcmp.gt.f32.partialorder %v3181, 0.8
          %vm3246 = vcmp.gt.f32.partialorder %v3182, 0.8
          %vm3247 = vcmp.gt.f32.partialorder %v3183, 0.8
          %vm3248 = vcmp.gt.f32.partialorder %v3184, 0.8
          %vm3249 = vcmp.gt.f32.partialorder %v3185, 0.8
          %vm3250 = vcmp.gt.f32.partialorder %v3186, 0.8
          %vm3251 = vcmp.gt.f32.partialorder %v3187, 0.8
          %vm3252 = vcmp.gt.f32.partialorder %v3188, 0.8
          %vm3253 = vcmp.gt.f32.partialorder %v3189, 0.8
          %vm3254 = vcmp.gt.f32.partialorder %v3190, 0.8
          %vm3255 = vcmp.gt.f32.partialorder %v3191, 0.8
          %vm3256 = vcmp.gt.f32.partialorder %v3192, 0.8
          %vm3257 = vcmp.gt.f32.partialorder %v3193, 0.8
          %vm3258 = vcmp.gt.f32.partialorder %v3194, 0.8
          %vm3259 = vcmp.gt.f32.partialorder %v3195, 0.8
          %vm3260 = vcmp.gt.f32.partialorder %v3196, 0.8
          %vm3261 = vcmp.gt.f32.partialorder %v3197, 0.8
          %vm3262 = vcmp.gt.f32.partialorder %v3198, 0.8
          %vm3263 = vcmp.gt.f32.partialorder %v3199, 0.8
          %vm3264 = vcmp.gt.f32.partialorder %v3200, 0.8
          %vm3265 = vcmp.gt.f32.partialorder %v3201, 0.8
          %vm3266 = vcmp.gt.f32.partialorder %v3202, 0.8
          %vm3267 = vcmp.gt.f32.partialorder %v3203, 0.8
          %vm3268 = vcmp.gt.f32.partialorder %v3204, 0.8
          %vm3269 = vcmp.gt.f32.partialorder %v3205, 0.8
          %vm3270 = vcmp.gt.f32.partialorder %v3206, 0.8
          %vm3271 = vcmp.gt.f32.partialorder %v3207, 0.8
          %vm3272 = vcmp.gt.f32.partialorder %v3208, 0.8
          %vm3273 = vcmp.gt.f32.partialorder %v3209, 0.8
          %vm3274 = vcmp.gt.f32.partialorder %v3210, 0.8
          %vm3275 = vcmp.gt.f32.partialorder %v3211, 0.8
          %vm3276 = vcmp.gt.f32.partialorder %v3212, 0.8
          %vm3277 = vcmp.gt.f32.partialorder %v3213, 0.8
          %vm3278 = vcmp.gt.f32.partialorder %v3214, 0.8
          %vm3279 = vcmp.gt.f32.partialorder %v3215, 0.8
          %vm3280 = vcmp.gt.f32.partialorder %v3216, 0.8
          %vm3281 = vcmp.gt.f32.partialorder %v3217, 0.8
          %vm3282 = vcmp.gt.f32.partialorder %v3218, 0.8
          %vm3283 = vcmp.gt.f32.partialorder %v3219, 0.8
          %vm3284 = vcmp.gt.f32.partialorder %v3220, 0.8
          %vm3285 = vcmp.gt.f32.partialorder %v3221, 0.8
          %vm3286 = vcmp.gt.f32.partialorder %v3222, 0.8
          %vm3287 = vcmp.gt.f32.partialorder %v3223, 0.8
          %vm3288 = vcmp.gt.f32.partialorder %v3224, 0.8
          %vm3289 = vcmp.gt.f32.partialorder %v3225, 0.8
          %vm3290 = vcmp.gt.f32.partialorder %v3226, 0.8
          %vm3291 = vcmp.gt.f32.partialorder %v3227, 0.8
          %vm3292 = vcmp.gt.f32.partialorder %v3228, 0.8
          %vm3293 = vcmp.gt.f32.partialorder %v3229, 0.8
          %vm3294 = vcmp.gt.f32.partialorder %v3230, 0.8
          %vm3295 = vcmp.gt.f32.partialorder %v3231, 0.8
          %vm3296 = vcmp.gt.f32.partialorder %v3232, 0.8
          %vm3297 = vcmp.gt.f32.partialorder %v3233, 0.8
          %vm3298 = vcmp.gt.f32.partialorder %v3234, 0.8
          %vm3299 = vcmp.gt.f32.partialorder %v3235, 0.8
          %vm3300 = vcmp.gt.f32.partialorder %v3236, 0.8
          %vm3301 = vcmp.gt.f32.partialorder %v3237, 0.8
          %v3302 = vsel %vm3238, %v3174, 0.0
          %v3303 = vsel %vm3239, %v3175, 0.0
          %v3304 = vsel %vm3240, %v3176, 0.0
          %v3305 = vsel %vm3241, %v3177, 0.0
          %v3306 = vsel %vm3242, %v3178, 0.0
          %v3307 = vsel %vm3243, %v3179, 0.0
          %v3308 = vsel %vm3244, %v3180, 0.0
          %v3309 = vsel %vm3245, %v3181, 0.0
          %v3310 = vsel %vm3246, %v3182, 0.0
          %v3311 = vsel %vm3247, %v3183, 0.0
          %v3312 = vsel %vm3248, %v3184, 0.0
          %v3313 = vsel %vm3249, %v3185, 0.0
          %v3314 = vsel %vm3250, %v3186, 0.0
          %v3315 = vsel %vm3251, %v3187, 0.0
          %v3316 = vsel %vm3252, %v3188, 0.0
          %v3317 = vsel %vm3253, %v3189, 0.0
          %v3318 = vsel %vm3254, %v3190, 0.0
          %v3319 = vsel %vm3255, %v3191, 0.0
          %v3320 = vsel %vm3256, %v3192, 0.0
          %v3321 = vsel %vm3257, %v3193, 0.0
          %v3322 = vsel %vm3258, %v3194, 0.0
          %v3323 = vsel %vm3259, %v3195, 0.0
          %v3324 = vsel %vm3260, %v3196, 0.0
          %v3325 = vsel %vm3261, %v3197, 0.0
          %v3326 = vsel %vm3262, %v3198, 0.0
          %v3327 = vsel %vm3263, %v3199, 0.0
          %v3328 = vsel %vm3264, %v3200, 0.0
          %v3329 = vsel %vm3265, %v3201, 0.0
          %v3330 = vsel %vm3266, %v3202, 0.0
          %v3331 = vsel %vm3267, %v3203, 0.0
          %v3332 = vsel %vm3268, %v3204, 0.0
          %v3333 = vsel %vm3269, %v3205, 0.0
          %v3334 = vsel %vm3270, %v3206, 0.0
          %v3335 = vsel %vm3271, %v3207, 0.0
          %v3336 = vsel %vm3272, %v3208, 0.0
          %v3337 = vsel %vm3273, %v3209, 0.0
          %v3338 = vsel %vm3274, %v3210, 0.0
          %v3339 = vsel %vm3275, %v3211, 0.0
          %v3340 = vsel %vm3276, %v3212, 0.0
          %v3341 = vsel %vm3277, %v3213, 0.0
          %v3342 = vsel %vm3278, %v3214, 0.0
          %v3343 = vsel %vm3279, %v3215, 0.0
          %v3344 = vsel %vm3280, %v3216, 0.0
          %v3345 = vsel %vm3281, %v3217, 0.0
          %v3346 = vsel %vm3282, %v3218, 0.0
          %v3347 = vsel %vm3283, %v3219, 0.0
          %v3348 = vsel %vm3284, %v3220, 0.0
          %v3349 = vsel %vm3285, %v3221, 0.0
          %v3350 = vsel %vm3286, %v3222, 0.0
          %v3351 = vsel %vm3287, %v3223, 0.0
          %v3352 = vsel %vm3288, %v3224, 0.0
          %v3353 = vsel %vm3289, %v3225, 0.0
          %v3354 = vsel %vm3290, %v3226, 0.0
          %v3355 = vsel %vm3291, %v3227, 0.0
          %v3356 = vsel %vm3292, %v3228, 0.0
          %v3357 = vsel %vm3293, %v3229, 0.0
          %v3358 = vsel %vm3294, %v3230, 0.0
          %v3359 = vsel %vm3295, %v3231, 0.0
          %v3360 = vsel %vm3296, %v3232, 0.0
          %v3361 = vsel %vm3297, %v3233, 0.0
          %v3362 = vsel %vm3298, %v3234, 0.0
          %v3363 = vsel %vm3299, %v3235, 0.0
          %v3364 = vsel %vm3300, %v3236, 0.0
          %v3365 = vsel %vm3301, %v3237, 0.0
          %v3366 = vadd.f32 %v3302, %v3304
          %v3367 = vadd.f32 %v3366, %v3306
          %v3368 = vadd.f32 %v3367, %v3308
          %v3369 = vadd.f32 %v3368, %v3310
          %v3370 = vadd.f32 %v3369, %v3312
          %v3371 = vadd.f32 %v3370, %v3314
          %v3372 = vadd.f32 %v3371, %v3316
          %v3373 = vadd.f32 %v3372, %v3318
          %v3374 = vadd.f32 %v3373, %v3320
          %v3375 = vadd.f32 %v3374, %v3322
          %v3376 = vadd.f32 %v3375, %v3324
          %v3377 = vadd.f32 %v3376, %v3326
          %v3378 = vadd.f32 %v3377, %v3328
          %v3379 = vadd.f32 %v3378, %v3330
          %v3380 = vadd.f32 %v3379, %v3332
          %v3381 = vadd.f32 %v3380, %v3334
          %v3382 = vadd.f32 %v3381, %v3336
          %v3383 = vadd.f32 %v3382, %v3338
          %v3384 = vadd.f32 %v3383, %v3340
          %v3385 = vadd.f32 %v3384, %v3342
          %v3386 = vadd.f32 %v3385, %v3344
          %v3387 = vadd.f32 %v3386, %v3346
          %v3388 = vadd.f32 %v3387, %v3348
          %v3389 = vadd.f32 %v3388, %v3350
          %v3390 = vadd.f32 %v3389, %v3352
          %v3391 = vadd.f32 %v3390, %v3354
          %v3392 = vadd.f32 %v3391, %v3356
          %v3393 = vadd.f32 %v3392, %v3358
          %v3394 = vadd.f32 %v3393, %v3360
          %v3395 = vadd.f32 %v3394, %v3362
          %v3396 = vadd.f32 %v3395, %v3364
          %v3397 = vrot.slane %v3396, 4
          %v3398 = vadd.f32 %v3396, %v3397
          %v3399 = vrot.slane %v3398, 2
          %v3400 = vadd.f32 %v3398, %v3399
          %v3401 = vrot.slane %v3400, 1
          %v3402 = vadd.f32 %v3400, %v3401
          %v3403 = vadd.f32 %v3303, %v3305
          %v3404 = vadd.f32 %v3403, %v3307
          %v3405 = vadd.f32 %v3404, %v3309
          %v3406 = vadd.f32 %v3405, %v3311
          %v3407 = vadd.f32 %v3406, %v3313
          %v3408 = vadd.f32 %v3407, %v3315
          %v3409 = vadd.f32 %v3408, %v3317
          %v3410 = vadd.f32 %v3409, %v3319
          %v3411 = vadd.f32 %v3410, %v3321
          %v3412 = vadd.f32 %v3411, %v3323
          %v3413 = vadd.f32 %v3412, %v3325
          %v3414 = vadd.f32 %v3413, %v3327
          %v3415 = vadd.f32 %v3414, %v3329
          %v3416 = vadd.f32 %v3415, %v3331
          %v3417 = vadd.f32 %v3416, %v3333
          %v3418 = vadd.f32 %v3417, %v3335
          %v3419 = vadd.f32 %v3418, %v3337
          %v3420 = vadd.f32 %v3419, %v3339
          %v3421 = vadd.f32 %v3420, %v3341
          %v3422 = vadd.f32 %v3421, %v3343
          %v3423 = vadd.f32 %v3422, %v3345
          %v3424 = vadd.f32 %v3423, %v3347
          %v3425 = vadd.f32 %v3424, %v3349
          %v3426 = vadd.f32 %v3425, %v3351
          %v3427 = vadd.f32 %v3426, %v3353
          %v3428 = vadd.f32 %v3427, %v3355
          %v3429 = vadd.f32 %v3428, %v3357
          %v3430 = vadd.f32 %v3429, %v3359
          %v3431 = vadd.f32 %v3430, %v3361
          %v3432 = vadd.f32 %v3431, %v3363
          %v3433 = vadd.f32 %v3432, %v3365
          %v3434 = vrot.slane %v3433, 4
          %v3435 = vadd.f32 %v3433, %v3434
          %v3436 = vrot.slane %v3435, 2
          %v3437 = vadd.f32 %v3435, %v3436
          %v3438 = vrot.slane %v3437, 1
          %v3439 = vadd.f32 %v3437, %v3438
          %v3440 = vrcp.pop %v3402
          %v3441 = vrcp.pop %v3439
          %3442 = vmatprep.subr.mxu0 %v3303
          %3443 = vmatpush1.msra.mxu0 %v3302
          %3444 = vmatprep.subr.mxu0 %v3305
          %3445 = vmatpush1.msra.mxu0 %v3304
          %3446 = vmatprep.subr.mxu0 %v3307
          %3447 = vmatpush1.msra.mxu0 %v3306
          %3448 = vmatprep.subr.mxu0 %v3309
          %3449 = vmatpush1.msra.mxu0 %v3308
          %3450 = vmatprep.subr.mxu0 %v3311
          %3451 = vmatpush1.msra.mxu0 %v3310
          %3452 = vmatprep.subr.mxu0 %v3313
          %3453 = vmatpush1.msra.mxu0 %v3312
          %3454 = vmatprep.subr.mxu0 %v3315
          %3455 = vmatpush1.msra.mxu0 %v3314
          %3456 = vmatprep.subr.mxu0 %v3317
          %3457 = vmatpush1.msra.mxu0 %v3316
          %3458 = vmatprep.subr.mxu0 %v3319
          %3459 = vmatpush1.msra.mxu0 %v3318
          %3460 = vmatprep.subr.mxu0 %v3321
          %3461 = vmatpush1.msra.mxu0 %v3320
          %3462 = vmatprep.subr.mxu0 %v3323
          %3463 = vmatpush1.msra.mxu0 %v3322
          %3464 = vmatprep.subr.mxu0 %v3325
          %3465 = vmatpush1.msra.mxu0 %v3324
          %3466 = vmatprep.subr.mxu0 %v3327
          %3467 = vmatpush1.msra.mxu0 %v3326
          %3468 = vmatprep.subr.mxu0 %v3329
          %3469 = vmatpush1.msra.mxu0 %v3328
          %3470 = vmatprep.subr.mxu0 %v3331
          %3471 = vmatpush1.msra.mxu0 %v3330
          %3472 = vmatprep.subr.mxu0 %v3333
          %3473 = vmatpush1.msra.mxu0 %v3332
          %3474 = vmatprep.subr.mxu0 %v3335
          %3475 = vmatpush1.msra.mxu0 %v3334
          %3476 = vmatprep.subr.mxu0 %v3337
          %3477 = vmatpush1.msra.mxu0 %v3336
          %3478 = vmatprep.subr.mxu0 %v3339
          %3479 = vmatpush1.msra.mxu0 %v3338
          %3480 = vmatprep.subr.mxu0 %v3341
          %3481 = vmatpush1.msra.mxu0 %v3340
          %3482 = vmatprep.subr.mxu0 %v3343
          %3483 = vmatpush1.msra.mxu0 %v3342
          %3484 = vmatprep.subr.mxu0 %v3345
          %3485 = vmatpush1.msra.mxu0 %v3344
          %3486 = vmatprep.subr.mxu0 %v3347
          %3487 = vmatpush1.msra.mxu0 %v3346
          %3488 = vmatprep.subr.mxu0 %v3349
          %3489 = vmatpush1.msra.mxu0 %v3348
          %3490 = vmatprep.subr.mxu0 %v3351
          %3491 = vmatpush1.msra.mxu0 %v3350
          %3492 = vmatprep.subr.mxu0 %v3353
          %3493 = vmatpush1.msra.mxu0 %v3352
          %3494 = vmatprep.subr.mxu0 %v3355
          %3495 = vmatpush1.msra.mxu0 %v3354
          %3496 = vmatprep.subr.mxu0 %v3357
          %3497 = vmatpush1.msra.mxu0 %v3356
          %3498 = vmatprep.subr.mxu0 %v3359
          %3499 = vmatpush1.msra.mxu0 %v3358
          %3500 = vmatprep.subr.mxu0 %v3361
          %3501 = vmatpush1.msra.mxu0 %v3360
          %3502 = vmatprep.subr.mxu0 %v3363
          %3503 = vmatpush1.msra.mxu0 %v3362
          %3504 = vmatprep.subr.mxu0 %v3365
          %3505 = vmatpush1.msra.mxu0 %v3364
          %3506 = vmatprep.mubr.f32.mxu0 %v1741
          %3507 = vmatmul.mubr.f32.gmra.mrb[0].mxu0 %v1739
          %v3508 = vpop.f32.mrb[0].mxu0
          %v3509 = vadd.f32 0.0, %v3508
          %v3510 = vpop.f32.mrb[0].mxu0
          %v3511 = vadd.f32 0.0, %v3510
          %3512 = vdwg.mxu0
          %v3513 = vmul.f32 %v3509, %v3440
          %v3514 = vmul.f32 %v3511, %v3441
          %v3515 = vadd.f32 %v3513, %v2408
          %v3516 = vadd.f32 %v3514, %v2408
          %vm3517 = vcmp.gt.f32.partialorder %v3515, %v3170
          %vm3518 = vcmp.gt.f32.partialorder %v3516, %v3171
          %v3519 = vsel %vm3517, %v3515, %v3170
          %v3520 = vsel %vm3518, %v3516, %v3171
          %v3521 = vsel %vm3517, 3, %v3172
          %v3522 = vsel %vm3518, 3, %v3173
          %v3523 = vmul.f32 %v3174, %v3174
          %v3524 = vmul.f32 %v3175, %v3175
          %v3525 = vmul.f32 %v3176, %v3176
          %v3526 = vmul.f32 %v3177, %v3177
          %v3527 = vmul.f32 %v3178, %v3178
          %v3528 = vmul.f32 %v3179, %v3179
          %v3529 = vmul.f32 %v3180, %v3180
          %v3530 = vmul.f32 %v3181, %v3181
          %v3531 = vmul.f32 %v3182, %v3182
          %v3532 = vmul.f32 %v3183, %v3183
          %v3533 = vmul.f32 %v3184, %v3184
          %v3534 = vmul.f32 %v3185, %v3185
          %v3535 = vmul.f32 %v3186, %v3186
          %v3536 = vmul.f32 %v3187, %v3187
          %v3537 = vmul.f32 %v3188, %v3188
          %v3538 = vmul.f32 %v3189, %v3189
          %v3539 = vmul.f32 %v3190, %v3190
          %v3540 = vmul.f32 %v3191, %v3191
          %v3541 = vmul.f32 %v3192, %v3192
          %v3542 = vmul.f32 %v3193, %v3193
          %v3543 = vmul.f32 %v3194, %v3194
          %v3544 = vmul.f32 %v3195, %v3195
          %v3545 = vmul.f32 %v3196, %v3196
          %v3546 = vmul.f32 %v3197, %v3197
          %v3547 = vmul.f32 %v3198, %v3198
          %v3548 = vmul.f32 %v3199, %v3199
          %v3549 = vmul.f32 %v3200, %v3200
          %v3550 = vmul.f32 %v3201, %v3201
          %v3551 = vmul.f32 %v3202, %v3202
          %v3552 = vmul.f32 %v3203, %v3203
          %v3553 = vmul.f32 %v3204, %v3204
          %v3554 = vmul.f32 %v3205, %v3205
          %v3555 = vmul.f32 %v3206, %v3206
          %v3556 = vmul.f32 %v3207, %v3207
          %v3557 = vmul.f32 %v3208, %v3208
          %v3558 = vmul.f32 %v3209, %v3209
          %v3559 = vmul.f32 %v3210, %v3210
          %v3560 = vmul.f32 %v3211, %v3211
          %v3561 = vmul.f32 %v3212, %v3212
          %v3562 = vmul.f32 %v3213, %v3213
          %v3563 = vmul.f32 %v3214, %v3214
          %v3564 = vmul.f32 %v3215, %v3215
          %v3565 = vmul.f32 %v3216, %v3216
          %v3566 = vmul.f32 %v3217, %v3217
          %v3567 = vmul.f32 %v3218, %v3218
          %v3568 = vmul.f32 %v3219, %v3219
          %v3569 = vmul.f32 %v3220, %v3220
          %v3570 = vmul.f32 %v3221, %v3221
          %v3571 = vmul.f32 %v3222, %v3222
          %v3572 = vmul.f32 %v3223, %v3223
          %v3573 = vmul.f32 %v3224, %v3224
          %v3574 = vmul.f32 %v3225, %v3225
          %v3575 = vmul.f32 %v3226, %v3226
          %v3576 = vmul.f32 %v3227, %v3227
          %v3577 = vmul.f32 %v3228, %v3228
          %v3578 = vmul.f32 %v3229, %v3229
          %v3579 = vmul.f32 %v3230, %v3230
          %v3580 = vmul.f32 %v3231, %v3231
          %v3581 = vmul.f32 %v3232, %v3232
          %v3582 = vmul.f32 %v3233, %v3233
          %v3583 = vmul.f32 %v3234, %v3234
          %v3584 = vmul.f32 %v3235, %v3235
          %v3585 = vmul.f32 %v3236, %v3236
          %v3586 = vmul.f32 %v3237, %v3237
          %vm3587 = vcmp.gt.f32.partialorder %v3523, 0.8
          %vm3588 = vcmp.gt.f32.partialorder %v3524, 0.8
          %vm3589 = vcmp.gt.f32.partialorder %v3525, 0.8
          %vm3590 = vcmp.gt.f32.partialorder %v3526, 0.8
          %vm3591 = vcmp.gt.f32.partialorder %v3527, 0.8
          %vm3592 = vcmp.gt.f32.partialorder %v3528, 0.8
          %vm3593 = vcmp.gt.f32.partialorder %v3529, 0.8
          %vm3594 = vcmp.gt.f32.partialorder %v3530, 0.8
          %vm3595 = vcmp.gt.f32.partialorder %v3531, 0.8
          %vm3596 = vcmp.gt.f32.partialorder %v3532, 0.8
          %vm3597 = vcmp.gt.f32.partialorder %v3533, 0.8
          %vm3598 = vcmp.gt.f32.partialorder %v3534, 0.8
          %vm3599 = vcmp.gt.f32.partialorder %v3535, 0.8
          %vm3600 = vcmp.gt.f32.partialorder %v3536, 0.8
          %vm3601 = vcmp.gt.f32.partialorder %v3537, 0.8
          %vm3602 = vcmp.gt.f32.partialorder %v3538, 0.8
          %vm3603 = vcmp.gt.f32.partialorder %v3539, 0.8
          %vm3604 = vcmp.gt.f32.partialorder %v3540, 0.8
          %vm3605 = vcmp.gt.f32.partialorder %v3541, 0.8
          %vm3606 = vcmp.gt.f32.partialorder %v3542, 0.8
          %vm3607 = vcmp.gt.f32.partialorder %v3543, 0.8
          %vm3608 = vcmp.gt.f32.partialorder %v3544, 0.8
          %vm3609 = vcmp.gt.f32.partialorder %v3545, 0.8
          %vm3610 = vcmp.gt.f32.partialorder %v3546, 0.8
          %vm3611 = vcmp.gt.f32.partialorder %v3547, 0.8
          %vm3612 = vcmp.gt.f32.partialorder %v3548, 0.8
          %vm3613 = vcmp.gt.f32.partialorder %v3549, 0.8
          %vm3614 = vcmp.gt.f32.partialorder %v3550, 0.8
          %vm3615 = vcmp.gt.f32.partialorder %v3551, 0.8
          %vm3616 = vcmp.gt.f32.partialorder %v3552, 0.8
          %vm3617 = vcmp.gt.f32.partialorder %v3553, 0.8
          %vm3618 = vcmp.gt.f32.partialorder %v3554, 0.8
          %vm3619 = vcmp.gt.f32.partialorder %v3555, 0.8
          %vm3620 = vcmp.gt.f32.partialorder %v3556, 0.8
          %vm3621 = vcmp.gt.f32.partialorder %v3557, 0.8
          %vm3622 = vcmp.gt.f32.partialorder %v3558, 0.8
          %vm3623 = vcmp.gt.f32.partialorder %v3559, 0.8
          %vm3624 = vcmp.gt.f32.partialorder %v3560, 0.8
          %vm3625 = vcmp.gt.f32.partialorder %v3561, 0.8
          %vm3626 = vcmp.gt.f32.partialorder %v3562, 0.8
          %vm3627 = vcmp.gt.f32.partialorder %v3563, 0.8
          %vm3628 = vcmp.gt.f32.partialorder %v3564, 0.8
          %vm3629 = vcmp.gt.f32.partialorder %v3565, 0.8
          %vm3630 = vcmp.gt.f32.partialorder %v3566, 0.8
          %vm3631 = vcmp.gt.f32.partialorder %v3567, 0.8
          %vm3632 = vcmp.gt.f32.partialorder %v3568, 0.8
          %vm3633 = vcmp.gt.f32.partialorder %v3569, 0.8
          %vm3634 = vcmp.gt.f32.partialorder %v3570, 0.8
          %vm3635 = vcmp.gt.f32.partialorder %v3571, 0.8
          %vm3636 = vcmp.gt.f32.partialorder %v3572, 0.8
          %vm3637 = vcmp.gt.f32.partialorder %v3573, 0.8
          %vm3638 = vcmp.gt.f32.partialorder %v3574, 0.8
          %vm3639 = vcmp.gt.f32.partialorder %v3575, 0.8
          %vm3640 = vcmp.gt.f32.partialorder %v3576, 0.8
          %vm3641 = vcmp.gt.f32.partialorder %v3577, 0.8
          %vm3642 = vcmp.gt.f32.partialorder %v3578, 0.8
          %vm3643 = vcmp.gt.f32.partialorder %v3579, 0.8
          %vm3644 = vcmp.gt.f32.partialorder %v3580, 0.8
          %vm3645 = vcmp.gt.f32.partialorder %v3581, 0.8
          %vm3646 = vcmp.gt.f32.partialorder %v3582, 0.8
          %vm3647 = vcmp.gt.f32.partialorder %v3583, 0.8
          %vm3648 = vcmp.gt.f32.partialorder %v3584, 0.8
          %vm3649 = vcmp.gt.f32.partialorder %v3585, 0.8
          %vm3650 = vcmp.gt.f32.partialorder %v3586, 0.8
          %v3651 = vsel %vm3587, %v3523, 0.0
          %v3652 = vsel %vm3588, %v3524, 0.0
          %v3653 = vsel %vm3589, %v3525, 0.0
          %v3654 = vsel %vm3590, %v3526, 0.0
          %v3655 = vsel %vm3591, %v3527, 0.0
          %v3656 = vsel %vm3592, %v3528, 0.0
          %v3657 = vsel %vm3593, %v3529, 0.0
          %v3658 = vsel %vm3594, %v3530, 0.0
          %v3659 = vsel %vm3595, %v3531, 0.0
          %v3660 = vsel %vm3596, %v3532, 0.0
          %v3661 = vsel %vm3597, %v3533, 0.0
          %v3662 = vsel %vm3598, %v3534, 0.0
          %v3663 = vsel %vm3599, %v3535, 0.0
          %v3664 = vsel %vm3600, %v3536, 0.0
          %v3665 = vsel %vm3601, %v3537, 0.0
          %v3666 = vsel %vm3602, %v3538, 0.0
          %v3667 = vsel %vm3603, %v3539, 0.0
          %v3668 = vsel %vm3604, %v3540, 0.0
          %v3669 = vsel %vm3605, %v3541, 0.0
          %v3670 = vsel %vm3606, %v3542, 0.0
          %v3671 = vsel %vm3607, %v3543, 0.0
          %v3672 = vsel %vm3608, %v3544, 0.0
          %v3673 = vsel %vm3609, %v3545, 0.0
          %v3674 = vsel %vm3610, %v3546, 0.0
          %v3675 = vsel %vm3611, %v3547, 0.0
          %v3676 = vsel %vm3612, %v3548, 0.0
          %v3677 = vsel %vm3613, %v3549, 0.0
          %v3678 = vsel %vm3614, %v3550, 0.0
          %v3679 = vsel %vm3615, %v3551, 0.0
          %v3680 = vsel %vm3616, %v3552, 0.0
          %v3681 = vsel %vm3617, %v3553, 0.0
          %v3682 = vsel %vm3618, %v3554, 0.0
          %v3683 = vsel %vm3619, %v3555, 0.0
          %v3684 = vsel %vm3620, %v3556, 0.0
          %v3685 = vsel %vm3621, %v3557, 0.0
          %v3686 = vsel %vm3622, %v3558, 0.0
          %v3687 = vsel %vm3623, %v3559, 0.0
          %v3688 = vsel %vm3624, %v3560, 0.0
          %v3689 = vsel %vm3625, %v3561, 0.0
          %v3690 = vsel %vm3626, %v3562, 0.0
          %v3691 = vsel %vm3627, %v3563, 0.0
          %v3692 = vsel %vm3628, %v3564, 0.0
          %v3693 = vsel %vm3629, %v3565, 0.0
          %v3694 = vsel %vm3630, %v3566, 0.0
          %v3695 = vsel %vm3631, %v3567, 0.0
          %v3696 = vsel %vm3632, %v3568, 0.0
          %v3697 = vsel %vm3633, %v3569, 0.0
          %v3698 = vsel %vm3634, %v3570, 0.0
          %v3699 = vsel %vm3635, %v3571, 0.0
          %v3700 = vsel %vm3636, %v3572, 0.0
          %v3701 = vsel %vm3637, %v3573, 0.0
          %v3702 = vsel %vm3638, %v3574, 0.0
          %v3703 = vsel %vm3639, %v3575, 0.0
          %v3704 = vsel %vm3640, %v3576, 0.0
          %v3705 = vsel %vm3641, %v3577, 0.0
          %v3706 = vsel %vm3642, %v3578, 0.0
          %v3707 = vsel %vm3643, %v3579, 0.0
          %v3708 = vsel %vm3644, %v3580, 0.0
          %v3709 = vsel %vm3645, %v3581, 0.0
          %v3710 = vsel %vm3646, %v3582, 0.0
          %v3711 = vsel %vm3647, %v3583, 0.0
          %v3712 = vsel %vm3648, %v3584, 0.0
          %v3713 = vsel %vm3649, %v3585, 0.0
          %v3714 = vsel %vm3650, %v3586, 0.0
          %v3715 = vadd.f32 %v3651, %v3653
          %v3716 = vadd.f32 %v3715, %v3655
          %v3717 = vadd.f32 %v3716, %v3657
          %v3718 = vadd.f32 %v3717, %v3659
          %v3719 = vadd.f32 %v3718, %v3661
          %v3720 = vadd.f32 %v3719, %v3663
          %v3721 = vadd.f32 %v3720, %v3665
          %v3722 = vadd.f32 %v3721, %v3667
          %v3723 = vadd.f32 %v3722, %v3669
          %v3724 = vadd.f32 %v3723, %v3671
          %v3725 = vadd.f32 %v3724, %v3673
          %v3726 = vadd.f32 %v3725, %v3675
          %v3727 = vadd.f32 %v3726, %v3677
          %v3728 = vadd.f32 %v3727, %v3679
          %v3729 = vadd.f32 %v3728, %v3681
          %v3730 = vadd.f32 %v3729, %v3683
          %v3731 = vadd.f32 %v3730, %v3685
          %v3732 = vadd.f32 %v3731, %v3687
          %v3733 = vadd.f32 %v3732, %v3689
          %v3734 = vadd.f32 %v3733, %v3691
          %v3735 = vadd.f32 %v3734, %v3693
          %v3736 = vadd.f32 %v3735, %v3695
          %v3737 = vadd.f32 %v3736, %v3697
          %v3738 = vadd.f32 %v3737, %v3699
          %v3739 = vadd.f32 %v3738, %v3701
          %v3740 = vadd.f32 %v3739, %v3703
          %v3741 = vadd.f32 %v3740, %v3705
          %v3742 = vadd.f32 %v3741, %v3707
          %v3743 = vadd.f32 %v3742, %v3709
          %v3744 = vadd.f32 %v3743, %v3711
          %v3745 = vadd.f32 %v3744, %v3713
          %v3746 = vrot.slane %v3745, 4
          %v3747 = vadd.f32 %v3745, %v3746
          %v3748 = vrot.slane %v3747, 2
          %v3749 = vadd.f32 %v3747, %v3748
          %v3750 = vrot.slane %v3749, 1
          %v3751 = vadd.f32 %v3749, %v3750
          %v3752 = vadd.f32 %v3652, %v3654
          %v3753 = vadd.f32 %v3752, %v3656
          %v3754 = vadd.f32 %v3753, %v3658
          %v3755 = vadd.f32 %v3754, %v3660
          %v3756 = vadd.f32 %v3755, %v3662
          %v3757 = vadd.f32 %v3756, %v3664
          %v3758 = vadd.f32 %v3757, %v3666
          %v3759 = vadd.f32 %v3758, %v3668
          %v3760 = vadd.f32 %v3759, %v3670
          %v3761 = vadd.f32 %v3760, %v3672
          %v3762 = vadd.f32 %v3761, %v3674
          %v3763 = vadd.f32 %v3762, %v3676
          %v3764 = vadd.f32 %v3763, %v3678
          %v3765 = vadd.f32 %v3764, %v3680
          %v3766 = vadd.f32 %v3765, %v3682
          %v3767 = vadd.f32 %v3766, %v3684
          %v3768 = vadd.f32 %v3767, %v3686
          %v3769 = vadd.f32 %v3768, %v3688
          %v3770 = vadd.f32 %v3769, %v3690
          %v3771 = vadd.f32 %v3770, %v3692
          %v3772 = vadd.f32 %v3771, %v3694
          %v3773 = vadd.f32 %v3772, %v3696
          %v3774 = vadd.f32 %v3773, %v3698
          %v3775 = vadd.f32 %v3774, %v3700
          %v3776 = vadd.f32 %v3775, %v3702
          %v3777 = vadd.f32 %v3776, %v3704
          %v3778 = vadd.f32 %v3777, %v3706
          %v3779 = vadd.f32 %v3778, %v3708
          %v3780 = vadd.f32 %v3779, %v3710
          %v3781 = vadd.f32 %v3780, %v3712
          %v3782 = vadd.f32 %v3781, %v3714
          %v3783 = vrot.slane %v3782, 4
          %v3784 = vadd.f32 %v3782, %v3783
          %v3785 = vrot.slane %v3784, 2
          %v3786 = vadd.f32 %v3784, %v3785
          %v3787 = vrot.slane %v3786, 1
          %v3788 = vadd.f32 %v3786, %v3787
          %v3789 = vrcp.pop %v3751
          %v3790 = vrcp.pop %v3788
          %3791 = vmatprep.subr.mxu0 %v3652
          %3792 = vmatpush1.msra.mxu0 %v3651
          %3793 = vmatprep.subr.mxu0 %v3654
          %3794 = vmatpush1.msra.mxu0 %v3653
          %3795 = vmatprep.subr.mxu0 %v3656
          %3796 = vmatpush1.msra.mxu0 %v3655
          %3797 = vmatprep.subr.mxu0 %v3658
          %3798 = vmatpush1.msra.mxu0 %v3657
          %3799 = vmatprep.subr.mxu0 %v3660
          %3800 = vmatpush1.msra.mxu0 %v3659
          %3801 = vmatprep.subr.mxu0 %v3662
          %3802 = vmatpush1.msra.mxu0 %v3661
          %3803 = vmatprep.subr.mxu0 %v3664
          %3804 = vmatpush1.msra.mxu0 %v3663
          %3805 = vmatprep.subr.mxu0 %v3666
          %3806 = vmatpush1.msra.mxu0 %v3665
          %3807 = vmatprep.subr.mxu0 %v3668
          %3808 = vmatpush1.msra.mxu0 %v3667
          %3809 = vmatprep.subr.mxu0 %v3670
          %3810 = vmatpush1.msra.mxu0 %v3669
          %3811 = vmatprep.subr.mxu0 %v3672
          %3812 = vmatpush1.msra.mxu0 %v3671
          %3813 = vmatprep.subr.mxu0 %v3674
          %3814 = vmatpush1.msra.mxu0 %v3673
          %3815 = vmatprep.subr.mxu0 %v3676
          %3816 = vmatpush1.msra.mxu0 %v3675
          %3817 = vmatprep.subr.mxu0 %v3678
          %3818 = vmatpush1.msra.mxu0 %v3677
          %3819 = vmatprep.subr.mxu0 %v3680
          %3820 = vmatpush1.msra.mxu0 %v3679
          %3821 = vmatprep.subr.mxu0 %v3682
          %3822 = vmatpush1.msra.mxu0 %v3681
          %3823 = vmatprep.subr.mxu0 %v3684
          %3824 = vmatpush1.msra.mxu0 %v3683
          %3825 = vmatprep.subr.mxu0 %v3686
          %3826 = vmatpush1.msra.mxu0 %v3685
          %3827 = vmatprep.subr.mxu0 %v3688
          %3828 = vmatpush1.msra.mxu0 %v3687
          %3829 = vmatprep.subr.mxu0 %v3690
          %3830 = vmatpush1.msra.mxu0 %v3689
          %3831 = vmatprep.subr.mxu0 %v3692
          %3832 = vmatpush1.msra.mxu0 %v3691
          %3833 = vmatprep.subr.mxu0 %v3694
          %3834 = vmatpush1.msra.mxu0 %v3693
          %3835 = vmatprep.subr.mxu0 %v3696
          %3836 = vmatpush1.msra.mxu0 %v3695
          %3837 = vmatprep.subr.mxu0 %v3698
          %3838 = vmatpush1.msra.mxu0 %v3697
          %3839 = vmatprep.subr.mxu0 %v3700
          %3840 = vmatpush1.msra.mxu0 %v3699
          %3841 = vmatprep.subr.mxu0 %v3702
          %3842 = vmatpush1.msra.mxu0 %v3701
          %3843 = vmatprep.subr.mxu0 %v3704
          %3844 = vmatpush1.msra.mxu0 %v3703
          %3845 = vmatprep.subr.mxu0 %v3706
          %3846 = vmatpush1.msra.mxu0 %v3705
          %3847 = vmatprep.subr.mxu0 %v3708
          %3848 = vmatpush1.msra.mxu0 %v3707
          %3849 = vmatprep.subr.mxu0 %v3710
          %3850 = vmatpush1.msra.mxu0 %v3709
          %3851 = vmatprep.subr.mxu0 %v3712
          %3852 = vmatpush1.msra.mxu0 %v3711
          %3853 = vmatprep.subr.mxu0 %v3714
          %3854 = vmatpush1.msra.mxu0 %v3713
          %3855 = vmatprep.mubr.f32.mxu0 %v1741
          %3856 = vmatmul.mubr.f32.gmra.mrb[0].mxu0 %v1739
          %v3857 = vpop.f32.mrb[0].mxu0
          %v3858 = vadd.f32 0.0, %v3857
          %v3859 = vpop.f32.mrb[0].mxu0
          %v3860 = vadd.f32 0.0, %v3859
          %3861 = vdwg.mxu0
          %v3862 = vmul.f32 %v3858, %v3789
          %v3863 = vmul.f32 %v3860, %v3790
          %v3864 = vadd.f32 %v3862, %v2408
          %v3865 = vadd.f32 %v3863, %v2408
          %vm3866 = vcmp.gt.f32.partialorder %v3864, %v3519
          %vm3867 = vcmp.gt.f32.partialorder %v3865, %v3520
          %v3868 = vsel %vm3866, %v3864, %v3519
          %v3869 = vsel %vm3867, %v3865, %v3520
          %v3870 = vsel %vm3866, 4, %v3521
          %v3871 = vsel %vm3867, 4, %v3522
          %v3872 = vmul.f32 %v3523, %v3523
          %v3873 = vmul.f32 %v3524, %v3524
          %v3874 = vmul.f32 %v3525, %v3525
          %v3875 = vmul.f32 %v3526, %v3526
          %v3876 = vmul.f32 %v3527, %v3527
          %v3877 = vmul.f32 %v3528, %v3528
          %v3878 = vmul.f32 %v3529, %v3529
          %v3879 = vmul.f32 %v3530, %v3530
          %v3880 = vmul.f32 %v3531, %v3531
          %v3881 = vmul.f32 %v3532, %v3532
          %v3882 = vmul.f32 %v3533, %v3533
          %v3883 = vmul.f32 %v3534, %v3534
          %v3884 = vmul.f32 %v3535, %v3535
          %v3885 = vmul.f32 %v3536, %v3536
          %v3886 = vmul.f32 %v3537, %v3537
          %v3887 = vmul.f32 %v3538, %v3538
          %v3888 = vmul.f32 %v3539, %v3539
          %v3889 = vmul.f32 %v3540, %v3540
          %v3890 = vmul.f32 %v3541, %v3541
          %v3891 = vmul.f32 %v3542, %v3542
          %v3892 = vmul.f32 %v3543, %v3543
          %v3893 = vmul.f32 %v3544, %v3544
          %v3894 = vmul.f32 %v3545, %v3545
          %v3895 = vmul.f32 %v3546, %v3546
          %v3896 = vmul.f32 %v3547, %v3547
          %v3897 = vmul.f32 %v3548, %v3548
          %v3898 = vmul.f32 %v3549, %v3549
          %v3899 = vmul.f32 %v3550, %v3550
          %v3900 = vmul.f32 %v3551, %v3551
          %v3901 = vmul.f32 %v3552, %v3552
          %v3902 = vmul.f32 %v3553, %v3553
          %v3903 = vmul.f32 %v3554, %v3554
          %v3904 = vmul.f32 %v3555, %v3555
          %v3905 = vmul.f32 %v3556, %v3556
          %v3906 = vmul.f32 %v3557, %v3557
          %v3907 = vmul.f32 %v3558, %v3558
          %v3908 = vmul.f32 %v3559, %v3559
          %v3909 = vmul.f32 %v3560, %v3560
          %v3910 = vmul.f32 %v3561, %v3561
          %v3911 = vmul.f32 %v3562, %v3562
          %v3912 = vmul.f32 %v3563, %v3563
          %v3913 = vmul.f32 %v3564, %v3564
          %v3914 = vmul.f32 %v3565, %v3565
          %v3915 = vmul.f32 %v3566, %v3566
          %v3916 = vmul.f32 %v3567, %v3567
          %v3917 = vmul.f32 %v3568, %v3568
          %v3918 = vmul.f32 %v3569, %v3569
          %v3919 = vmul.f32 %v3570, %v3570
          %v3920 = vmul.f32 %v3571, %v3571
          %v3921 = vmul.f32 %v3572, %v3572
          %v3922 = vmul.f32 %v3573, %v3573
          %v3923 = vmul.f32 %v3574, %v3574
          %v3924 = vmul.f32 %v3575, %v3575
          %v3925 = vmul.f32 %v3576, %v3576
          %v3926 = vmul.f32 %v3577, %v3577
          %v3927 = vmul.f32 %v3578, %v3578
          %v3928 = vmul.f32 %v3579, %v3579
          %v3929 = vmul.f32 %v3580, %v3580
          %v3930 = vmul.f32 %v3581, %v3581
          %v3931 = vmul.f32 %v3582, %v3582
          %v3932 = vmul.f32 %v3583, %v3583
          %v3933 = vmul.f32 %v3584, %v3584
          %v3934 = vmul.f32 %v3585, %v3585
          %v3935 = vmul.f32 %v3586, %v3586
          %v3936 = vmul.f32 %v3872, %v3174
          %v3937 = vmul.f32 %v3873, %v3175
          %v3938 = vmul.f32 %v3874, %v3176
          %v3939 = vmul.f32 %v3875, %v3177
          %v3940 = vmul.f32 %v3876, %v3178
          %v3941 = vmul.f32 %v3877, %v3179
          %v3942 = vmul.f32 %v3878, %v3180
          %v3943 = vmul.f32 %v3879, %v3181
          %v3944 = vmul.f32 %v3880, %v3182
          %v3945 = vmul.f32 %v3881, %v3183
          %v3946 = vmul.f32 %v3882, %v3184
          %v3947 = vmul.f32 %v3883, %v3185
          %v3948 = vmul.f32 %v3884, %v3186
          %v3949 = vmul.f32 %v3885, %v3187
          %v3950 = vmul.f32 %v3886, %v3188
          %v3951 = vmul.f32 %v3887, %v3189
          %v3952 = vmul.f32 %v3888, %v3190
          %v3953 = vmul.f32 %v3889, %v3191
          %v3954 = vmul.f32 %v3890, %v3192
          %v3955 = vmul.f32 %v3891, %v3193
          %v3956 = vmul.f32 %v3892, %v3194
          %v3957 = vmul.f32 %v3893, %v3195
          %v3958 = vmul.f32 %v3894, %v3196
          %v3959 = vmul.f32 %v3895, %v3197
          %v3960 = vmul.f32 %v3896, %v3198
          %v3961 = vmul.f32 %v3897, %v3199
          %v3962 = vmul.f32 %v3898, %v3200
          %v3963 = vmul.f32 %v3899, %v3201
          %v3964 = vmul.f32 %v3900, %v3202
          %v3965 = vmul.f32 %v3901, %v3203
          %v3966 = vmul.f32 %v3902, %v3204
          %v3967 = vmul.f32 %v3903, %v3205
          %v3968 = vmul.f32 %v3904, %v3206
          %v3969 = vmul.f32 %v3905, %v3207
          %v3970 = vmul.f32 %v3906, %v3208
          %v3971 = vmul.f32 %v3907, %v3209
          %v3972 = vmul.f32 %v3908, %v3210
          %v3973 = vmul.f32 %v3909, %v3211
          %v3974 = vmul.f32 %v3910, %v3212
          %v3975 = vmul.f32 %v3911, %v3213
          %v3976 = vmul.f32 %v3912, %v3214
          %v3977 = vmul.f32 %v3913, %v3215
          %v3978 = vmul.f32 %v3914, %v3216
          %v3979 = vmul.f32 %v3915, %v3217
          %v3980 = vmul.f32 %v3916, %v3218
          %v3981 = vmul.f32 %v3917, %v3219
          %v3982 = vmul.f32 %v3918, %v3220
          %v3983 = vmul.f32 %v3919, %v3221
          %v3984 = vmul.f32 %v3920, %v3222
          %v3985 = vmul.f32 %v3921, %v3223
          %v3986 = vmul.f32 %v3922, %v3224
          %v3987 = vmul.f32 %v3923, %v3225
          %v3988 = vmul.f32 %v3924, %v3226
          %v3989 = vmul.f32 %v3925, %v3227
          %v3990 = vmul.f32 %v3926, %v3228
          %v3991 = vmul.f32 %v3927, %v3229
          %v3992 = vmul.f32 %v3928, %v3230
          %v3993 = vmul.f32 %v3929, %v3231
          %v3994 = vmul.f32 %v3930, %v3232
          %v3995 = vmul.f32 %v3931, %v3233
          %v3996 = vmul.f32 %v3932, %v3234
          %v3997 = vmul.f32 %v3933, %v3235
          %v3998 = vmul.f32 %v3934, %v3236
          %v3999 = vmul.f32 %v3935, %v3237
          %vm4000 = vcmp.gt.f32.partialorder %v3936, 0.8
          %vm4001 = vcmp.gt.f32.partialorder %v3937, 0.8
          %vm4002 = vcmp.gt.f32.partialorder %v3938, 0.8
          %vm4003 = vcmp.gt.f32.partialorder %v3939, 0.8
          %vm4004 = vcmp.gt.f32.partialorder %v3940, 0.8
          %vm4005 = vcmp.gt.f32.partialorder %v3941, 0.8
          %vm4006 = vcmp.gt.f32.partialorder %v3942, 0.8
          %vm4007 = vcmp.gt.f32.partialorder %v3943, 0.8
          %vm4008 = vcmp.gt.f32.partialorder %v3944, 0.8
          %vm4009 = vcmp.gt.f32.partialorder %v3945, 0.8
          %vm4010 = vcmp.gt.f32.partialorder %v3946, 0.8
          %vm4011 = vcmp.gt.f32.partialorder %v3947, 0.8
          %vm4012 = vcmp.gt.f32.partialorder %v3948, 0.8
          %vm4013 = vcmp.gt.f32.partialorder %v3949, 0.8
          %vm4014 = vcmp.gt.f32.partialorder %v3950, 0.8
          %vm4015 = vcmp.gt.f32.partialorder %v3951, 0.8
          %vm4016 = vcmp.gt.f32.partialorder %v3952, 0.8
          %vm4017 = vcmp.gt.f32.partialorder %v3953, 0.8
          %vm4018 = vcmp.gt.f32.partialorder %v3954, 0.8
          %vm4019 = vcmp.gt.f32.partialorder %v3955, 0.8
          %vm4020 = vcmp.gt.f32.partialorder %v3956, 0.8
          %vm4021 = vcmp.gt.f32.partialorder %v3957, 0.8
          %vm4022 = vcmp.gt.f32.partialorder %v3958, 0.8
          %vm4023 = vcmp.gt.f32.partialorder %v3959, 0.8
          %vm4024 = vcmp.gt.f32.partialorder %v3960, 0.8
          %vm4025 = vcmp.gt.f32.partialorder %v3961, 0.8
          %vm4026 = vcmp.gt.f32.partialorder %v3962, 0.8
          %vm4027 = vcmp.gt.f32.partialorder %v3963, 0.8
          %vm4028 = vcmp.gt.f32.partialorder %v3964, 0.8
          %vm4029 = vcmp.gt.f32.partialorder %v3965, 0.8
          %vm4030 = vcmp.gt.f32.partialorder %v3966, 0.8
          %vm4031 = vcmp.gt.f32.partialorder %v3967, 0.8
          %vm4032 = vcmp.gt.f32.partialorder %v3968, 0.8
          %vm4033 = vcmp.gt.f32.partialorder %v3969, 0.8
          %vm4034 = vcmp.gt.f32.partialorder %v3970, 0.8
          %vm4035 = vcmp.gt.f32.partialorder %v3971, 0.8
          %vm4036 = vcmp.gt.f32.partialorder %v3972, 0.8
          %vm4037 = vcmp.gt.f32.partialorder %v3973, 0.8
          %vm4038 = vcmp.gt.f32.partialorder %v3974, 0.8
          %vm4039 = vcmp.gt.f32.partialorder %v3975, 0.8
          %vm4040 = vcmp.gt.f32.partialorder %v3976, 0.8
          %vm4041 = vcmp.gt.f32.partialorder %v3977, 0.8
          %vm4042 = vcmp.gt.f32.partialorder %v3978, 0.8
          %vm4043 = vcmp.gt.f32.partialorder %v3979, 0.8
          %vm4044 = vcmp.gt.f32.partialorder %v3980, 0.8
          %vm4045 = vcmp.gt.f32.partialorder %v3981, 0.8
          %vm4046 = vcmp.gt.f32.partialorder %v3982, 0.8
          %vm4047 = vcmp.gt.f32.partialorder %v3983, 0.8
          %vm4048 = vcmp.gt.f32.partialorder %v3984, 0.8
          %vm4049 = vcmp.gt.f32.partialorder %v3985, 0.8
          %vm4050 = vcmp.gt.f32.partialorder %v3986, 0.8
          %vm4051 = vcmp.gt.f32.partialorder %v3987, 0.8
          %vm4052 = vcmp.gt.f32.partialorder %v3988, 0.8
          %vm4053 = vcmp.gt.f32.partialorder %v3989, 0.8
          %vm4054 = vcmp.gt.f32.partialorder %v3990, 0.8
          %vm4055 = vcmp.gt.f32.partialorder %v3991, 0.8
          %vm4056 = vcmp.gt.f32.partialorder %v3992, 0.8
          %vm4057 = vcmp.gt.f32.partialorder %v3993, 0.8
          %vm4058 = vcmp.gt.f32.partialorder %v3994, 0.8
          %vm4059 = vcmp.gt.f32.partialorder %v3995, 0.8
          %vm4060 = vcmp.gt.f32.partialorder %v3996, 0.8
          %vm4061 = vcmp.gt.f32.partialorder %v3997, 0.8
          %vm4062 = vcmp.gt.f32.partialorder %v3998, 0.8
          %vm4063 = vcmp.gt.f32.partialorder %v3999, 0.8
          %v4064 = vsel %vm4000, %v3936, 0.0
          %v4065 = vsel %vm4001, %v3937, 0.0
          %v4066 = vsel %vm4002, %v3938, 0.0
          %v4067 = vsel %vm4003, %v3939, 0.0
          %v4068 = vsel %vm4004, %v3940, 0.0
          %v4069 = vsel %vm4005, %v3941, 0.0
          %v4070 = vsel %vm4006, %v3942, 0.0
          %v4071 = vsel %vm4007, %v3943, 0.0
          %v4072 = vsel %vm4008, %v3944, 0.0
          %v4073 = vsel %vm4009, %v3945, 0.0
          %v4074 = vsel %vm4010, %v3946, 0.0
          %v4075 = vsel %vm4011, %v3947, 0.0
          %v4076 = vsel %vm4012, %v3948, 0.0
          %v4077 = vsel %vm4013, %v3949, 0.0
          %v4078 = vsel %vm4014, %v3950, 0.0
          %v4079 = vsel %vm4015, %v3951, 0.0
          %v4080 = vsel %vm4016, %v3952, 0.0
          %v4081 = vsel %vm4017, %v3953, 0.0
          %v4082 = vsel %vm4018, %v3954, 0.0
          %v4083 = vsel %vm4019, %v3955, 0.0
          %v4084 = vsel %vm4020, %v3956, 0.0
          %v4085 = vsel %vm4021, %v3957, 0.0
          %v4086 = vsel %vm4022, %v3958, 0.0
          %v4087 = vsel %vm4023, %v3959, 0.0
          %v4088 = vsel %vm4024, %v3960, 0.0
          %v4089 = vsel %vm4025, %v3961, 0.0
          %v4090 = vsel %vm4026, %v3962, 0.0
          %v4091 = vsel %vm4027, %v3963, 0.0
          %v4092 = vsel %vm4028, %v3964, 0.0
          %v4093 = vsel %vm4029, %v3965, 0.0
          %v4094 = vsel %vm4030, %v3966, 0.0
          %v4095 = vsel %vm4031, %v3967, 0.0
          %v4096 = vsel %vm4032, %v3968, 0.0
          %v4097 = vsel %vm4033, %v3969, 0.0
          %v4098 = vsel %vm4034, %v3970, 0.0
          %v4099 = vsel %vm4035, %v3971, 0.0
          %v4100 = vsel %vm4036, %v3972, 0.0
          %v4101 = vsel %vm4037, %v3973, 0.0
          %v4102 = vsel %vm4038, %v3974, 0.0
          %v4103 = vsel %vm4039, %v3975, 0.0
          %v4104 = vsel %vm4040, %v3976, 0.0
          %v4105 = vsel %vm4041, %v3977, 0.0
          %v4106 = vsel %vm4042, %v3978, 0.0
          %v4107 = vsel %vm4043, %v3979, 0.0
          %v4108 = vsel %vm4044, %v3980, 0.0
          %v4109 = vsel %vm4045, %v3981, 0.0
          %v4110 = vsel %vm4046, %v3982, 0.0
          %v4111 = vsel %vm4047, %v3983, 0.0
          %v4112 = vsel %vm4048, %v3984, 0.0
          %v4113 = vsel %vm4049, %v3985, 0.0
          %v4114 = vsel %vm4050, %v3986, 0.0
          %v4115 = vsel %vm4051, %v3987, 0.0
          %v4116 = vsel %vm4052, %v3988, 0.0
          %v4117 = vsel %vm4053, %v3989, 0.0
          %v4118 = vsel %vm4054, %v3990, 0.0
          %v4119 = vsel %vm4055, %v3991, 0.0
          %v4120 = vsel %vm4056, %v3992, 0.0
          %v4121 = vsel %vm4057, %v3993, 0.0
          %v4122 = vsel %vm4058, %v3994, 0.0
          %v4123 = vsel %vm4059, %v3995, 0.0
          %v4124 = vsel %vm4060, %v3996, 0.0
          %v4125 = vsel %vm4061, %v3997, 0.0
          %v4126 = vsel %vm4062, %v3998, 0.0
          %v4127 = vsel %vm4063, %v3999, 0.0
          %v4128 = vadd.f32 %v4064, %v4066
          %v4129 = vadd.f32 %v4128, %v4068
          %v4130 = vadd.f32 %v4129, %v4070
          %v4131 = vadd.f32 %v4130, %v4072
          %v4132 = vadd.f32 %v4131, %v4074
          %v4133 = vadd.f32 %v4132, %v4076
          %v4134 = vadd.f32 %v4133, %v4078
          %v4135 = vadd.f32 %v4134, %v4080
          %v4136 = vadd.f32 %v4135, %v4082
          %v4137 = vadd.f32 %v4136, %v4084
          %v4138 = vadd.f32 %v4137, %v4086
          %v4139 = vadd.f32 %v4138, %v4088
          %v4140 = vadd.f32 %v4139, %v4090
          %v4141 = vadd.f32 %v4140, %v4092
          %v4142 = vadd.f32 %v4141, %v4094
          %v4143 = vadd.f32 %v4142, %v4096
          %v4144 = vadd.f32 %v4143, %v4098
          %v4145 = vadd.f32 %v4144, %v4100
          %v4146 = vadd.f32 %v4145, %v4102
          %v4147 = vadd.f32 %v4146, %v4104
          %v4148 = vadd.f32 %v4147, %v4106
          %v4149 = vadd.f32 %v4148, %v4108
          %v4150 = vadd.f32 %v4149, %v4110
          %v4151 = vadd.f32 %v4150, %v4112
          %v4152 = vadd.f32 %v4151, %v4114
          %v4153 = vadd.f32 %v4152, %v4116
          %v4154 = vadd.f32 %v4153, %v4118
          %v4155 = vadd.f32 %v4154, %v4120
          %v4156 = vadd.f32 %v4155, %v4122
          %v4157 = vadd.f32 %v4156, %v4124
          %v4158 = vadd.f32 %v4157, %v4126
          %v4159 = vrot.slane %v4158, 4
          %v4160 = vadd.f32 %v4158, %v4159
          %v4161 = vrot.slane %v4160, 2
          %v4162 = vadd.f32 %v4160, %v4161
          %v4163 = vrot.slane %v4162, 1
          %v4164 = vadd.f32 %v4162, %v4163
          %v4165 = vadd.f32 %v4065, %v4067
          %v4166 = vadd.f32 %v4165, %v4069
          %v4167 = vadd.f32 %v4166, %v4071
          %v4168 = vadd.f32 %v4167, %v4073
          %v4169 = vadd.f32 %v4168, %v4075
          %v4170 = vadd.f32 %v4169, %v4077
          %v4171 = vadd.f32 %v4170, %v4079
          %v4172 = vadd.f32 %v4171, %v4081
          %v4173 = vadd.f32 %v4172, %v4083
          %v4174 = vadd.f32 %v4173, %v4085
          %v4175 = vadd.f32 %v4174, %v4087
          %v4176 = vadd.f32 %v4175, %v4089
          %v4177 = vadd.f32 %v4176, %v4091
          %v4178 = vadd.f32 %v4177, %v4093
          %v4179 = vadd.f32 %v4178, %v4095
          %v4180 = vadd.f32 %v4179, %v4097
          %v4181 = vadd.f32 %v4180, %v4099
          %v4182 = vadd.f32 %v4181, %v4101
          %v4183 = vadd.f32 %v4182, %v4103
          %v4184 = vadd.f32 %v4183, %v4105
          %v4185 = vadd.f32 %v4184, %v4107
          %v4186 = vadd.f32 %v4185, %v4109
          %v4187 = vadd.f32 %v4186, %v4111
          %v4188 = vadd.f32 %v4187, %v4113
          %v4189 = vadd.f32 %v4188, %v4115
          %v4190 = vadd.f32 %v4189, %v4117
          %v4191 = vadd.f32 %v4190, %v4119
          %v4192 = vadd.f32 %v4191, %v4121
          %v4193 = vadd.f32 %v4192, %v4123
          %v4194 = vadd.f32 %v4193, %v4125
          %v4195 = vadd.f32 %v4194, %v4127
          %v4196 = vrot.slane %v4195, 4
          %v4197 = vadd.f32 %v4195, %v4196
          %v4198 = vrot.slane %v4197, 2
          %v4199 = vadd.f32 %v4197, %v4198
          %v4200 = vrot.slane %v4199, 1
          %v4201 = vadd.f32 %v4199, %v4200
          %v4202 = vrcp.pop %v4164
          %v4203 = vrcp.pop %v4201
          %4204 = vmatprep.subr.mxu0 %v4065
          %4205 = vmatpush1.msra.mxu0 %v4064
          %4206 = vmatprep.subr.mxu0 %v4067
          %4207 = vmatpush1.msra.mxu0 %v4066
          %4208 = vmatprep.subr.mxu0 %v4069
          %4209 = vmatpush1.msra.mxu0 %v4068
          %4210 = vmatprep.subr.mxu0 %v4071
          %4211 = vmatpush1.msra.mxu0 %v4070
          %4212 = vmatprep.subr.mxu0 %v4073
          %4213 = vmatpush1.msra.mxu0 %v4072
          %4214 = vmatprep.subr.mxu0 %v4075
          %4215 = vmatpush1.msra.mxu0 %v4074
          %4216 = vmatprep.subr.mxu0 %v4077
          %4217 = vmatpush1.msra.mxu0 %v4076
          %4218 = vmatprep.subr.mxu0 %v4079
          %4219 = vmatpush1.msra.mxu0 %v4078
          %4220 = vmatprep.subr.mxu0 %v4081
          %4221 = vmatpush1.msra.mxu0 %v4080
          %4222 = vmatprep.subr.mxu0 %v4083
          %4223 = vmatpush1.msra.mxu0 %v4082
          %4224 = vmatprep.subr.mxu0 %v4085
          %4225 = vmatpush1.msra.mxu0 %v4084
          %4226 = vmatprep.subr.mxu0 %v4087
          %4227 = vmatpush1.msra.mxu0 %v4086
          %4228 = vmatprep.subr.mxu0 %v4089
          %4229 = vmatpush1.msra.mxu0 %v4088
          %4230 = vmatprep.subr.mxu0 %v4091
          %4231 = vmatpush1.msra.mxu0 %v4090
          %4232 = vmatprep.subr.mxu0 %v4093
          %4233 = vmatpush1.msra.mxu0 %v4092
          %4234 = vmatprep.subr.mxu0 %v4095
          %4235 = vmatpush1.msra.mxu0 %v4094
          %4236 = vmatprep.subr.mxu0 %v4097
          %4237 = vmatpush1.msra.mxu0 %v4096
          %4238 = vmatprep.subr.mxu0 %v4099
          %4239 = vmatpush1.msra.mxu0 %v4098
          %4240 = vmatprep.subr.mxu0 %v4101
          %4241 = vmatpush1.msra.mxu0 %v4100
          %4242 = vmatprep.subr.mxu0 %v4103
          %4243 = vmatpush1.msra.mxu0 %v4102
          %4244 = vmatprep.subr.mxu0 %v4105
          %4245 = vmatpush1.msra.mxu0 %v4104
          %4246 = vmatprep.subr.mxu0 %v4107
          %4247 = vmatpush1.msra.mxu0 %v4106
          %4248 = vmatprep.subr.mxu0 %v4109
          %4249 = vmatpush1.msra.mxu0 %v4108
          %4250 = vmatprep.subr.mxu0 %v4111
          %4251 = vmatpush1.msra.mxu0 %v4110
          %4252 = vmatprep.subr.mxu0 %v4113
          %4253 = vmatpush1.msra.mxu0 %v4112
          %4254 = vmatprep.subr.mxu0 %v4115
          %4255 = vmatpush1.msra.mxu0 %v4114
          %4256 = vmatprep.subr.mxu0 %v4117
          %4257 = vmatpush1.msra.mxu0 %v4116
          %4258 = vmatprep.subr.mxu0 %v4119
          %4259 = vmatpush1.msra.mxu0 %v4118
          %4260 = vmatprep.subr.mxu0 %v4121
          %4261 = vmatpush1.msra.mxu0 %v4120
          %4262 = vmatprep.subr.mxu0 %v4123
          %4263 = vmatpush1.msra.mxu0 %v4122
          %4264 = vmatprep.subr.mxu0 %v4125
          %4265 = vmatpush1.msra.mxu0 %v4124
          %4266 = vmatprep.subr.mxu0 %v4127
          %4267 = vmatpush1.msra.mxu0 %v4126
          %4268 = vmatprep.mubr.f32.mxu0 %v1741
          %4269 = vmatmul.mubr.f32.gmra.mrb[0].mxu0 %v1739
          %v4270 = vpop.f32.mrb[0].mxu0
          %v4271 = vadd.f32 0.0, %v4270
          %v4272 = vpop.f32.mrb[0].mxu0
          %v4273 = vadd.f32 0.0, %v4272
          %4274 = vdwg.mxu0
          %v4275 = vmul.f32 %v4271, %v4202
          %v4276 = vmul.f32 %v4273, %v4203
          %v4277 = vadd.f32 %v4275, %v2408
          %v4278 = vadd.f32 %v4276, %v2408
          %vm4279 = vcmp.gt.f32.partialorder %v4277, %v3868
          %vm4280 = vcmp.gt.f32.partialorder %v4278, %v3869
          %v4281 = vsel %vm4279, %v4277, %v3868
          %v4282 = vsel %vm4280, %v4278, %v3869
          %v4283 = vsel %vm4279, 5, %v3870
          %v4284 = vsel %vm4280, 5, %v3871
          %v4285 = vmul.f32 %v3936, %v3936
          %v4286 = vmul.f32 %v3937, %v3937
          %v4287 = vmul.f32 %v3938, %v3938
          %v4288 = vmul.f32 %v3939, %v3939
          %v4289 = vmul.f32 %v3940, %v3940
          %v4290 = vmul.f32 %v3941, %v3941
          %v4291 = vmul.f32 %v3942, %v3942
          %v4292 = vmul.f32 %v3943, %v3943
          %v4293 = vmul.f32 %v3944, %v3944
          %v4294 = vmul.f32 %v3945, %v3945
          %v4295 = vmul.f32 %v3946, %v3946
          %v4296 = vmul.f32 %v3947, %v3947
          %v4297 = vmul.f32 %v3948, %v3948
          %v4298 = vmul.f32 %v3949, %v3949
          %v4299 = vmul.f32 %v3950, %v3950
          %v4300 = vmul.f32 %v3951, %v3951
          %v4301 = vmul.f32 %v3952, %v3952
          %v4302 = vmul.f32 %v3953, %v3953
          %v4303 = vmul.f32 %v3954, %v3954
          %v4304 = vmul.f32 %v3955, %v3955
          %v4305 = vmul.f32 %v3956, %v3956
          %v4306 = vmul.f32 %v3957, %v3957
          %v4307 = vmul.f32 %v3958, %v3958
          %v4308 = vmul.f32 %v3959, %v3959
          %v4309 = vmul.f32 %v3960, %v3960
          %v4310 = vmul.f32 %v3961, %v3961
          %v4311 = vmul.f32 %v3962, %v3962
          %v4312 = vmul.f32 %v3963, %v3963
          %v4313 = vmul.f32 %v3964, %v3964
          %v4314 = vmul.f32 %v3965, %v3965
          %v4315 = vmul.f32 %v3966, %v3966
          %v4316 = vmul.f32 %v3967, %v3967
          %v4317 = vmul.f32 %v3968, %v3968
          %v4318 = vmul.f32 %v3969, %v3969
          %v4319 = vmul.f32 %v3970, %v3970
          %v4320 = vmul.f32 %v3971, %v3971
          %v4321 = vmul.f32 %v3972, %v3972
          %v4322 = vmul.f32 %v3973, %v3973
          %v4323 = vmul.f32 %v3974, %v3974
          %v4324 = vmul.f32 %v3975, %v3975
          %v4325 = vmul.f32 %v3976, %v3976
          %v4326 = vmul.f32 %v3977, %v3977
          %v4327 = vmul.f32 %v3978, %v3978
          %v4328 = vmul.f32 %v3979, %v3979
          %v4329 = vmul.f32 %v3980, %v3980
          %v4330 = vmul.f32 %v3981, %v3981
          %v4331 = vmul.f32 %v3982, %v3982
          %v4332 = vmul.f32 %v3983, %v3983
          %v4333 = vmul.f32 %v3984, %v3984
          %v4334 = vmul.f32 %v3985, %v3985
          %v4335 = vmul.f32 %v3986, %v3986
          %v4336 = vmul.f32 %v3987, %v3987
          %v4337 = vmul.f32 %v3988, %v3988
          %v4338 = vmul.f32 %v3989, %v3989
          %v4339 = vmul.f32 %v3990, %v3990
          %v4340 = vmul.f32 %v3991, %v3991
          %v4341 = vmul.f32 %v3992, %v3992
          %v4342 = vmul.f32 %v3993, %v3993
          %v4343 = vmul.f32 %v3994, %v3994
          %v4344 = vmul.f32 %v3995, %v3995
          %v4345 = vmul.f32 %v3996, %v3996
          %v4346 = vmul.f32 %v3997, %v3997
          %v4347 = vmul.f32 %v3998, %v3998
          %v4348 = vmul.f32 %v3999, %v3999
          %vm4349 = vcmp.gt.f32.partialorder %v4285, 0.8
          %vm4350 = vcmp.gt.f32.partialorder %v4286, 0.8
          %vm4351 = vcmp.gt.f32.partialorder %v4287, 0.8
          %vm4352 = vcmp.gt.f32.partialorder %v4288, 0.8
          %vm4353 = vcmp.gt.f32.partialorder %v4289, 0.8
          %vm4354 = vcmp.gt.f32.partialorder %v4290, 0.8
          %vm4355 = vcmp.gt.f32.partialorder %v4291, 0.8
          %vm4356 = vcmp.gt.f32.partialorder %v4292, 0.8
          %vm4357 = vcmp.gt.f32.partialorder %v4293, 0.8
          %vm4358 = vcmp.gt.f32.partialorder %v4294, 0.8
          %vm4359 = vcmp.gt.f32.partialorder %v4295, 0.8
          %vm4360 = vcmp.gt.f32.partialorder %v4296, 0.8
          %vm4361 = vcmp.gt.f32.partialorder %v4297, 0.8
          %vm4362 = vcmp.gt.f32.partialorder %v4298, 0.8
          %vm4363 = vcmp.gt.f32.partialorder %v4299, 0.8
          %vm4364 = vcmp.gt.f32.partialorder %v4300, 0.8
          %vm4365 = vcmp.gt.f32.partialorder %v4301, 0.8
          %vm4366 = vcmp.gt.f32.partialorder %v4302, 0.8
          %vm4367 = vcmp.gt.f32.partialorder %v4303, 0.8
          %vm4368 = vcmp.gt.f32.partialorder %v4304, 0.8
          %vm4369 = vcmp.gt.f32.partialorder %v4305, 0.8
          %vm4370 = vcmp.gt.f32.partialorder %v4306, 0.8
          %vm4371 = vcmp.gt.f32.partialorder %v4307, 0.8
          %vm4372 = vcmp.gt.f32.partialorder %v4308, 0.8
          %vm4373 = vcmp.gt.f32.partialorder %v4309, 0.8
          %vm4374 = vcmp.gt.f32.partialorder %v4310, 0.8
          %vm4375 = vcmp.gt.f32.partialorder %v4311, 0.8
          %vm4376 = vcmp.gt.f32.partialorder %v4312, 0.8
          %vm4377 = vcmp.gt.f32.partialorder %v4313, 0.8
          %vm4378 = vcmp.gt.f32.partialorder %v4314, 0.8
          %vm4379 = vcmp.gt.f32.partialorder %v4315, 0.8
          %vm4380 = vcmp.gt.f32.partialorder %v4316, 0.8
          %vm4381 = vcmp.gt.f32.partialorder %v4317, 0.8
          %vm4382 = vcmp.gt.f32.partialorder %v4318, 0.8
          %vm4383 = vcmp.gt.f32.partialorder %v4319, 0.8
          %vm4384 = vcmp.gt.f32.partialorder %v4320, 0.8
          %vm4385 = vcmp.gt.f32.partialorder %v4321, 0.8
          %vm4386 = vcmp.gt.f32.partialorder %v4322, 0.8
          %vm4387 = vcmp.gt.f32.partialorder %v4323, 0.8
          %vm4388 = vcmp.gt.f32.partialorder %v4324, 0.8
          %vm4389 = vcmp.gt.f32.partialorder %v4325, 0.8
          %vm4390 = vcmp.gt.f32.partialorder %v4326, 0.8
          %vm4391 = vcmp.gt.f32.partialorder %v4327, 0.8
          %vm4392 = vcmp.gt.f32.partialorder %v4328, 0.8
          %vm4393 = vcmp.gt.f32.partialorder %v4329, 0.8
          %vm4394 = vcmp.gt.f32.partialorder %v4330, 0.8
          %vm4395 = vcmp.gt.f32.partialorder %v4331, 0.8
          %vm4396 = vcmp.gt.f32.partialorder %v4332, 0.8
          %vm4397 = vcmp.gt.f32.partialorder %v4333, 0.8
          %vm4398 = vcmp.gt.f32.partialorder %v4334, 0.8
          %vm4399 = vcmp.gt.f32.partialorder %v4335, 0.8
          %vm4400 = vcmp.gt.f32.partialorder %v4336, 0.8
          %vm4401 = vcmp.gt.f32.partialorder %v4337, 0.8
          %vm4402 = vcmp.gt.f32.partialorder %v4338, 0.8
          %vm4403 = vcmp.gt.f32.partialorder %v4339, 0.8
          %vm4404 = vcmp.gt.f32.partialorder %v4340, 0.8
          %vm4405 = vcmp.gt.f32.partialorder %v4341, 0.8
          %vm4406 = vcmp.gt.f32.partialorder %v4342, 0.8
          %vm4407 = vcmp.gt.f32.partialorder %v4343, 0.8
          %vm4408 = vcmp.gt.f32.partialorder %v4344, 0.8
          %vm4409 = vcmp.gt.f32.partialorder %v4345, 0.8
          %vm4410 = vcmp.gt.f32.partialorder %v4346, 0.8
          %vm4411 = vcmp.gt.f32.partialorder %v4347, 0.8
          %vm4412 = vcmp.gt.f32.partialorder %v4348, 0.8
          %v4413 = vsel %vm4349, %v4285, 0.0
          %v4414 = vsel %vm4350, %v4286, 0.0
          %v4415 = vsel %vm4351, %v4287, 0.0
          %v4416 = vsel %vm4352, %v4288, 0.0
          %v4417 = vsel %vm4353, %v4289, 0.0
          %v4418 = vsel %vm4354, %v4290, 0.0
          %v4419 = vsel %vm4355, %v4291, 0.0
          %v4420 = vsel %vm4356, %v4292, 0.0
          %v4421 = vsel %vm4357, %v4293, 0.0
          %v4422 = vsel %vm4358, %v4294, 0.0
          %v4423 = vsel %vm4359, %v4295, 0.0
          %v4424 = vsel %vm4360, %v4296, 0.0
          %v4425 = vsel %vm4361, %v4297, 0.0
          %v4426 = vsel %vm4362, %v4298, 0.0
          %v4427 = vsel %vm4363, %v4299, 0.0
          %v4428 = vsel %vm4364, %v4300, 0.0
          %v4429 = vsel %vm4365, %v4301, 0.0
          %v4430 = vsel %vm4366, %v4302, 0.0
          %v4431 = vsel %vm4367, %v4303, 0.0
          %v4432 = vsel %vm4368, %v4304, 0.0
          %v4433 = vsel %vm4369, %v4305, 0.0
          %v4434 = vsel %vm4370, %v4306, 0.0
          %v4435 = vsel %vm4371, %v4307, 0.0
          %v4436 = vsel %vm4372, %v4308, 0.0
          %v4437 = vsel %vm4373, %v4309, 0.0
          %v4438 = vsel %vm4374, %v4310, 0.0
          %v4439 = vsel %vm4375, %v4311, 0.0
          %v4440 = vsel %vm4376, %v4312, 0.0
          %v4441 = vsel %vm4377, %v4313, 0.0
          %v4442 = vsel %vm4378, %v4314, 0.0
          %v4443 = vsel %vm4379, %v4315, 0.0
          %v4444 = vsel %vm4380, %v4316, 0.0
          %v4445 = vsel %vm4381, %v4317, 0.0
          %v4446 = vsel %vm4382, %v4318, 0.0
          %v4447 = vsel %vm4383, %v4319, 0.0
          %v4448 = vsel %vm4384, %v4320, 0.0
          %v4449 = vsel %vm4385, %v4321, 0.0
          %v4450 = vsel %vm4386, %v4322, 0.0
          %v4451 = vsel %vm4387, %v4323, 0.0
          %v4452 = vsel %vm4388, %v4324, 0.0
          %v4453 = vsel %vm4389, %v4325, 0.0
          %v4454 = vsel %vm4390, %v4326, 0.0
          %v4455 = vsel %vm4391, %v4327, 0.0
          %v4456 = vsel %vm4392, %v4328, 0.0
          %v4457 = vsel %vm4393, %v4329, 0.0
          %v4458 = vsel %vm4394, %v4330, 0.0
          %v4459 = vsel %vm4395, %v4331, 0.0
          %v4460 = vsel %vm4396, %v4332, 0.0
          %v4461 = vsel %vm4397, %v4333, 0.0
          %v4462 = vsel %vm4398, %v4334, 0.0
          %v4463 = vsel %vm4399, %v4335, 0.0
          %v4464 = vsel %vm4400, %v4336, 0.0
          %v4465 = vsel %vm4401, %v4337, 0.0
          %v4466 = vsel %vm4402, %v4338, 0.0
          %v4467 = vsel %vm4403, %v4339, 0.0
          %v4468 = vsel %vm4404, %v4340, 0.0
          %v4469 = vsel %vm4405, %v4341, 0.0
          %v4470 = vsel %vm4406, %v4342, 0.0
          %v4471 = vsel %vm4407, %v4343, 0.0
          %v4472 = vsel %vm4408, %v4344, 0.0
          %v4473 = vsel %vm4409, %v4345, 0.0
          %v4474 = vsel %vm4410, %v4346, 0.0
          %v4475 = vsel %vm4411, %v4347, 0.0
          %v4476 = vsel %vm4412, %v4348, 0.0
          %v4477 = vadd.f32 %v4413, %v4415
          %v4478 = vadd.f32 %v4477, %v4417
          %v4479 = vadd.f32 %v4478, %v4419
          %v4480 = vadd.f32 %v4479, %v4421
          %v4481 = vadd.f32 %v4480, %v4423
          %v4482 = vadd.f32 %v4481, %v4425
          %v4483 = vadd.f32 %v4482, %v4427
          %v4484 = vadd.f32 %v4483, %v4429
          %v4485 = vadd.f32 %v4484, %v4431
          %v4486 = vadd.f32 %v4485, %v4433
          %v4487 = vadd.f32 %v4486, %v4435
          %v4488 = vadd.f32 %v4487, %v4437
          %v4489 = vadd.f32 %v4488, %v4439
          %v4490 = vadd.f32 %v4489, %v4441
          %v4491 = vadd.f32 %v4490, %v4443
          %v4492 = vadd.f32 %v4491, %v4445
          %v4493 = vadd.f32 %v4492, %v4447
          %v4494 = vadd.f32 %v4493, %v4449
          %v4495 = vadd.f32 %v4494, %v4451
          %v4496 = vadd.f32 %v4495, %v4453
          %v4497 = vadd.f32 %v4496, %v4455
          %v4498 = vadd.f32 %v4497, %v4457
          %v4499 = vadd.f32 %v4498, %v4459
          %v4500 = vadd.f32 %v4499, %v4461
          %v4501 = vadd.f32 %v4500, %v4463
          %v4502 = vadd.f32 %v4501, %v4465
          %v4503 = vadd.f32 %v4502, %v4467
          %v4504 = vadd.f32 %v4503, %v4469
          %v4505 = vadd.f32 %v4504, %v4471
          %v4506 = vadd.f32 %v4505, %v4473
          %v4507 = vadd.f32 %v4506, %v4475
          %v4508 = vrot.slane %v4507, 4
          %v4509 = vadd.f32 %v4507, %v4508
          %v4510 = vrot.slane %v4509, 2
          %v4511 = vadd.f32 %v4509, %v4510
          %v4512 = vrot.slane %v4511, 1
          %v4513 = vadd.f32 %v4511, %v4512
          %v4514 = vadd.f32 %v4414, %v4416
          %v4515 = vadd.f32 %v4514, %v4418
          %v4516 = vadd.f32 %v4515, %v4420
          %v4517 = vadd.f32 %v4516, %v4422
          %v4518 = vadd.f32 %v4517, %v4424
          %v4519 = vadd.f32 %v4518, %v4426
          %v4520 = vadd.f32 %v4519, %v4428
          %v4521 = vadd.f32 %v4520, %v4430
          %v4522 = vadd.f32 %v4521, %v4432
          %v4523 = vadd.f32 %v4522, %v4434
          %v4524 = vadd.f32 %v4523, %v4436
          %v4525 = vadd.f32 %v4524, %v4438
          %v4526 = vadd.f32 %v4525, %v4440
          %v4527 = vadd.f32 %v4526, %v4442
          %v4528 = vadd.f32 %v4527, %v4444
          %v4529 = vadd.f32 %v4528, %v4446
          %v4530 = vadd.f32 %v4529, %v4448
          %v4531 = vadd.f32 %v4530, %v4450
          %v4532 = vadd.f32 %v4531, %v4452
          %v4533 = vadd.f32 %v4532, %v4454
          %v4534 = vadd.f32 %v4533, %v4456
          %v4535 = vadd.f32 %v4534, %v4458
          %v4536 = vadd.f32 %v4535, %v4460
          %v4537 = vadd.f32 %v4536, %v4462
          %v4538 = vadd.f32 %v4537, %v4464
          %v4539 = vadd.f32 %v4538, %v4466
          %v4540 = vadd.f32 %v4539, %v4468
          %v4541 = vadd.f32 %v4540, %v4470
          %v4542 = vadd.f32 %v4541, %v4472
          %v4543 = vadd.f32 %v4542, %v4474
          %v4544 = vadd.f32 %v4543, %v4476
          %v4545 = vrot.slane %v4544, 4
          %v4546 = vadd.f32 %v4544, %v4545
          %v4547 = vrot.slane %v4546, 2
          %v4548 = vadd.f32 %v4546, %v4547
          %v4549 = vrot.slane %v4548, 1
          %v4550 = vadd.f32 %v4548, %v4549
          %v4551 = vrcp.pop %v4513
          %v4552 = vrcp.pop %v4550
          %4553 = vmatprep.subr.mxu0 %v4414
          %4554 = vmatpush1.msra.mxu0 %v4413
          %4555 = vmatprep.subr.mxu0 %v4416
          %4556 = vmatpush1.msra.mxu0 %v4415
          %4557 = vmatprep.subr.mxu0 %v4418
          %4558 = vmatpush1.msra.mxu0 %v4417
          %4559 = vmatprep.subr.mxu0 %v4420
          %4560 = vmatpush1.msra.mxu0 %v4419
          %4561 = vmatprep.subr.mxu0 %v4422
          %4562 = vmatpush1.msra.mxu0 %v4421
          %4563 = vmatprep.subr.mxu0 %v4424
          %4564 = vmatpush1.msra.mxu0 %v4423
          %4565 = vmatprep.subr.mxu0 %v4426
          %4566 = vmatpush1.msra.mxu0 %v4425
          %4567 = vmatprep.subr.mxu0 %v4428
          %4568 = vmatpush1.msra.mxu0 %v4427
          %4569 = vmatprep.subr.mxu0 %v4430
          %4570 = vmatpush1.msra.mxu0 %v4429
          %4571 = vmatprep.subr.mxu0 %v4432
          %4572 = vmatpush1.msra.mxu0 %v4431
          %4573 = vmatprep.subr.mxu0 %v4434
          %4574 = vmatpush1.msra.mxu0 %v4433
          %4575 = vmatprep.subr.mxu0 %v4436
          %4576 = vmatpush1.msra.mxu0 %v4435
          %4577 = vmatprep.subr.mxu0 %v4438
          %4578 = vmatpush1.msra.mxu0 %v4437
          %4579 = vmatprep.subr.mxu0 %v4440
          %4580 = vmatpush1.msra.mxu0 %v4439
          %4581 = vmatprep.subr.mxu0 %v4442
          %4582 = vmatpush1.msra.mxu0 %v4441
          %4583 = vmatprep.subr.mxu0 %v4444
          %4584 = vmatpush1.msra.mxu0 %v4443
          %4585 = vmatprep.subr.mxu0 %v4446
          %4586 = vmatpush1.msra.mxu0 %v4445
          %4587 = vmatprep.subr.mxu0 %v4448
          %4588 = vmatpush1.msra.mxu0 %v4447
          %4589 = vmatprep.subr.mxu0 %v4450
          %4590 = vmatpush1.msra.mxu0 %v4449
          %4591 = vmatprep.subr.mxu0 %v4452
          %4592 = vmatpush1.msra.mxu0 %v4451
          %4593 = vmatprep.subr.mxu0 %v4454
          %4594 = vmatpush1.msra.mxu0 %v4453
          %4595 = vmatprep.subr.mxu0 %v4456
          %4596 = vmatpush1.msra.mxu0 %v4455
          %4597 = vmatprep.subr.mxu0 %v4458
          %4598 = vmatpush1.msra.mxu0 %v4457
          %4599 = vmatprep.subr.mxu0 %v4460
          %4600 = vmatpush1.msra.mxu0 %v4459
          %4601 = vmatprep.subr.mxu0 %v4462
          %4602 = vmatpush1.msra.mxu0 %v4461
          %4603 = vmatprep.subr.mxu0 %v4464
          %4604 = vmatpush1.msra.mxu0 %v4463
          %4605 = vmatprep.subr.mxu0 %v4466
          %4606 = vmatpush1.msra.mxu0 %v4465
          %4607 = vmatprep.subr.mxu0 %v4468
          %4608 = vmatpush1.msra.mxu0 %v4467
          %4609 = vmatprep.subr.mxu0 %v4470
          %4610 = vmatpush1.msra.mxu0 %v4469
          %4611 = vmatprep.subr.mxu0 %v4472
          %4612 = vmatpush1.msra.mxu0 %v4471
          %4613 = vmatprep.subr.mxu0 %v4474
          %4614 = vmatpush1.msra.mxu0 %v4473
          %4615 = vmatprep.subr.mxu0 %v4476
          %4616 = vmatpush1.msra.mxu0 %v4475
          %4617 = vmatprep.mubr.f32.mxu0 %v1741
          %4618 = vmatmul.mubr.f32.gmra.mrb[0].mxu0 %v1739
          %v4619 = vpop.f32.mrb[0].mxu0
          %v4620 = vadd.f32 0.0, %v4619
          %v4621 = vpop.f32.mrb[0].mxu0
          %v4622 = vadd.f32 0.0, %v4621
          %4623 = vdwg.mxu0
          %v4624 = vmul.f32 %v4620, %v4551
          %v4625 = vmul.f32 %v4622, %v4552
          %v4626 = vadd.f32 %v4624, %v2408
          %v4627 = vadd.f32 %v4625, %v2408
          %vm4628 = vcmp.gt.f32.partialorder %v4626, %v4281
          %vm4629 = vcmp.gt.f32.partialorder %v4627, %v4282
          %v4630 = vsel %vm4628, %v4626, %v4281
          %v4631 = vsel %vm4629, %v4627, %v4282
          %v4632 = vsel %vm4628, 6, %v4283
          %v4633 = vsel %vm4629, 6, %v4284
          %vm4634 = vcmask 1043456
          %v4635 = vsel %vm4634, %v4630, -inf
          %v4636 = vrot.slane %v4635, 4
          %v4637 = vmax.f32 %v4635, %v4636
          %v4638 = vrot.slane %v4637, 2
          %v4639 = vmax.f32 %v4637, %v4638
          %v4640 = vrot.slane %v4639, 1
          %v4641 = vmax.f32 %v4639, %v4640
          %v4642 = vsel %vm4634, %v4631, -inf
          %v4643 = vrot.slane %v4642, 4
          %v4644 = vmax.f32 %v4642, %v4643
          %v4645 = vrot.slane %v4644, 2
          %v4646 = vmax.f32 %v4644, %v4645
          %v4647 = vrot.slane %v4646, 1
          %v4648 = vmax.f32 %v4646, %v4647
          %v4649 = vsub.f32 %v4630, %v4641
          %v4650 = vsub.f32 %v4631, %v4648
          %v4651 = vmul.f32 %v4649, 1.442695
          %v4652 = vpow.pop %v4651
          %v4653 = vmul.f32 %v4650, 1.442695
          %v4654 = vpow.pop %v4653
          %v4655 = vsel %vm4634, %v4652, 0.0
          %v4656 = vrot.slane %v4655, 4
          %v4657 = vadd.f32 %v4655, %v4656
          %v4658 = vrot.slane %v4657, 2
          %v4659 = vadd.f32 %v4657, %v4658
          %v4660 = vrot.slane %v4659, 1
          %v4661 = vadd.f32 %v4659, %v4660
          %v4662 = vsel %vm4634, %v4654, 0.0
          %v4663 = vrot.slane %v4662, 4
          %v4664 = vadd.f32 %v4662, %v4663
          %v4665 = vrot.slane %v4664, 2
          %v4666 = vadd.f32 %v4664, %v4665
          %v4667 = vrot.slane %v4666, 1
          %v4668 = vadd.f32 %v4666, %v4667
          %v4669 = vrcp.pop %v4661
          %v4670 = vrcp.pop %v4668
          %v4671 = vmul.f32 %v4652, %v4669
          %v4672 = vmul.f32 %v4654, %v4670
          %v4673 = vld [vmem:[#allocation15] sm:$0xf]
          %v4674 = vmul.f32 %v4673, 1.442695
          %v4675 = vpow.pop %v4674
          %4677 = vset.pattern.permute.xlu0 0
          %4678 = vperm.xlu0 %4677, %v4675
          %v4679 = vpop.permute.xlu0 %4678
          %v4681 = vmul.f32 %v4671, %v4679
          %v4682 = vmul.f32 %v4672, %v4679
          %v4683 = vsel %vm4634, %v4681, -inf
          %v4684 = vsel %vm4634, %v4682, -inf
          %v4685 = vmax.f32 %v4683, %v4684
          %4686 = vmax.xlane.f32.xlu0 %v4685
          %v4687 = vpop.xlane.xlu0 %4686
          %v4688 = vsub.f32 %v4681, %v4687
          %v4689 = vsub.f32 %v4682, %v4687
          %v4690 = vmul.f32 %v4688, 1.442695
          %v4691 = vpow.pop %v4690
          %v4692 = vmul.f32 %v4689, 1.442695
          %v4693 = vpow.pop %v4692
          %v4694 = vsel %vm4634, %v4691, 0.0
          %v4695 = vsel %vm4634, %v4693, 0.0
          %v4696 = vadd.f32 %v4694, %v4695
          %4697 = vadd.xlane.f32.xlu0 %v4696
          %v4698 = vpop.xlane.xlu0 %4697
          %v4699 = vrcp.pop %v4698
          %v4700 = vmul.f32 %v4691, %v4699
          %v4701 = vmul.f32 %v4693, %v4699
          %v4702 = vmul.f32 %v4700, %v4630
          %v4703 = vmul.f32 %v4701, %v4631
          %v4704 = vsel %vm4634, %v4702, 0.0
          %v4705 = vsel %vm4634, %v4703, 0.0
          %v4706 = vadd.f32 %v4704, %v4705
          %4707 = vadd.xlane.f32.xlu0 %v4706
          %v4708 = vpop.xlane.xlu0 %4707
          %v4709 = vmul.f32 %v1743, 31.0
          %v4710 = vadd.f32 %v4708, %v4709
          %v4711 = vsub.f32 0.0, %v4710
          %v4712 = vmul.f32 %v4711, 1.442695
          %v4713 = vpow.pop %v4712
          %v4714 = vadd.f32 %v4713, 1.0
          %v4715 = vrcp.pop %v4714
          %v4716 = vmul.f32 1.0, %v4715
          %4718 = vset.pattern.permute.xlu0 0
          %4719 = vperm.xlu0 %4718, %v4716
          %v4720 = vpop.permute.xlu0 %4719
          %4722 = vst [vmem:[%s574] sm:$0xf] %v4720
          %v4725 = vcombine.low %v4671, %v4672
          %4727 = vst [vmem:[%s581] sm:$0xff] %v4725
          %v4730 = vcombine.low %v4700, %v4701
          %4732 = vst [vmem:[%s588] sm:$0xff] %v4730
          %v4733 = vcombine.low %v4632, %v4633
          %4734 = vst [vmem:[%s595] sm:$0xff] %v4733
        $region96: #{tpu_custom_call.1} parent=51 // pred_fallthru
          _
        %s4735 = sand.u32 %s248, 1
        %s4736 = scalar_lea.sflag [#allocation5], %s4735
        %s4737 = sand.u32 %s248, 1
        %s4738 = smul.addr %s4737, 4
        %s4739 = scalar_lea.vmem [#allocation17], %s4738
        %s4740 = sand.u32 %s43, 1
        %s4741 = scalar_lea.sflag [#allocation19], %s4740
        %s4742 = sand.u32 %s274, 1
        %s4743 = smul.addr %s4742, 8
        %s4744 = scalar_lea.vmem [#allocation18], %s4743
        %s4745 = sand.u32 %s43, 1
        %s4746 = scalar_lea.sflag [#allocation19], %s4745
        %s4747 = sand.u32 %s300, 1
        %s4748 = smul.addr %s4747, 8
        %s4749 = scalar_lea.vmem [#allocation20], %s4748
        %s4750 = sand.u32 %s326, 1
        %s4751 = scalar_lea.sflag [#allocation22], %s4750
        %s4752 = sand.u32 %s326, 1
        %s4753 = smul.addr %s4752, 8
        %s4754 = scalar_lea.vmem [#allocation21], %s4753
        // Predicated region
        $region97: #{tpu_custom_call.1} parent=51 // pred_check
          %p4755 = pneg %p258
        $region98: #{tpu_custom_call.1} parent=51 // pred_check_branch
          %4757 = sbr.rel (%p4755) target = $region100
        $region99: #{tpu_custom_call.1} parent=51 // pred_region
          %s4759 = ssub.s32 64, 64
          %4760 = vsyncadd %s4736, %s4759
          %s4761 = smul.addr %s47, 64
          %s4762 = scalar_lea.hbm %s8, %s4761
          %s4764 = sshll.u32 %s4739, 4
          %s4765 = int_to_ptr.vmem [resolvable:$true] %s4764
          %4767 = dma.vmem_to_hbm [thread:$0]  %s4765, 64, %s4762, %s4736
        $region100: #{tpu_custom_call.1} parent=51 // pred_fallthru
          _
        // Predicated region
        $region101: #{tpu_custom_call.1} parent=51 // pred_check
          %p4768 = pneg %p284
        $region102: #{tpu_custom_call.1} parent=51 // pred_check_branch
          %4770 = sbr.rel (%p4768) target = $region104
        $region103: #{tpu_custom_call.1} parent=51 // pred_region
          %s4772 = ssub.s32 128, 128
          %4773 = vsyncadd %s4741, %s4772
          %s4774 = smul.addr %s47, 2
          %s4775 = smul.addr %s4774, 64
          %s4776 = scalar_lea.hbm %s9, %s4775
          %s4778 = sshll.u32 %s4744, 4
          %s4779 = int_to_ptr.vmem [resolvable:$true] %s4778
          %4781 = dma.vmem_to_hbm [thread:$0]  %s4779, 128, %s4776, %s4741
        $region104: #{tpu_custom_call.1} parent=51 // pred_fallthru
          _
        // Predicated region
        $region105: #{tpu_custom_call.1} parent=51 // pred_check
          %p4782 = pneg %p310
        $region106: #{tpu_custom_call.1} parent=51 // pred_check_branch
          %4784 = sbr.rel (%p4782) target = $region108
        $region107: #{tpu_custom_call.1} parent=51 // pred_region
          %s4786 = ssub.s32 128, 128
          %4787 = vsyncadd %s4746, %s4786
          %s4788 = smul.addr %s47, 2
          %s4789 = smul.addr %s4788, 64
          %s4790 = scalar_lea.hbm %s10, %s4789
          %s4792 = sshll.u32 %s4749, 4
          %s4793 = int_to_ptr.vmem [resolvable:$true] %s4792
          %4795 = dma.vmem_to_hbm [thread:$0]  %s4793, 128, %s4790, %s4746
        $region108: #{tpu_custom_call.1} parent=51 // pred_fallthru
          _
        // Predicated region
        $region109: #{tpu_custom_call.1} parent=51 // pred_check
          %p4796 = pneg %p336
        $region110: #{tpu_custom_call.1} parent=51 // pred_check_branch
          %4798 = sbr.rel (%p4796) target = $region112
        $region111: #{tpu_custom_call.1} parent=51 // pred_region
          %s4800 = ssub.s32 128, 128
          %4801 = vsyncadd %s4751, %s4800
          %s4802 = smul.addr %s47, 2
          %s4803 = smul.addr %s4802, 64
          %s4804 = scalar_lea.hbm %s11, %s4803
          %s4806 = sshll.u32 %s4754, 4
          %s4807 = int_to_ptr.vmem [resolvable:$true] %s4806
          %4809 = dma.vmem_to_hbm [thread:$0]  %s4807, 128, %s4804, %s4751
        $region112: #{tpu_custom_call.1} parent=51 // pred_fallthru
          _
      $region52: #{tpu_custom_call.1} parent=5 // pred_fallthru
        _
      %p4810 = scmp.le.s32.totalorder 2, %s38
      // Predicated region
      $region113: #{tpu_custom_call.1} parent=5 // pred_check
        %p4811 = pneg %p4810
      $region114: #{tpu_custom_call.1} parent=5 // pred_check_branch
        %4813 = sbr.rel (%p4811) target = $region116
      $region115: #{tpu_custom_call.1} parent=5 // pred_region
        %s4814 = ssub.s32 %s38, 2
        // Predicated region
        $region117: #{tpu_custom_call.1} parent=115 // pred_check
          %p4815 = pneg %p264
        $region118: #{tpu_custom_call.1} parent=115 // pred_check_branch
          %4817 = sbr.rel (%p4815) target = $region120
        $region119: #{tpu_custom_call.1} parent=115 // pred_region
          %s4818 = sand.u32 %s249, 1
          %s4819 = scalar_lea.sflag [#allocation5], %s4818
          %s4820 = sand.u32 %s249, 1
          %s4821 = smul.addr %s4820, 4
          %s4822 = scalar_lea.vmem [#allocation17], %s4821
          %4823 = dma.done %s4819, 64
        $region120: #{tpu_custom_call.1} parent=115 // pred_fallthru
          _
        // Predicated region
        $region121: #{tpu_custom_call.1} parent=115 // pred_check
          %p4824 = pneg %p290
        $region122: #{tpu_custom_call.1} parent=115 // pred_check_branch
          %4826 = sbr.rel (%p4824) target = $region124
        $region123: #{tpu_custom_call.1} parent=115 // pred_region
          %s4827 = sand.u32 %s44, 1
          %s4828 = scalar_lea.sflag [#allocation19], %s4827
          %s4829 = sand.u32 %s275, 1
          %s4830 = smul.addr %s4829, 8
          %s4831 = scalar_lea.vmem [#allocation18], %s4830
          %4832 = dma.done %s4828, 128
        $region124: #{tpu_custom_call.1} parent=115 // pred_fallthru
          _
        // Predicated region
        $region125: #{tpu_custom_call.1} parent=115 // pred_check
          %p4833 = pneg %p316
        $region126: #{tpu_custom_call.1} parent=115 // pred_check_branch
          %4835 = sbr.rel (%p4833) target = $region128
        $region127: #{tpu_custom_call.1} parent=115 // pred_region
          %s4836 = sand.u32 %s44, 1
          %s4837 = scalar_lea.sflag [#allocation19], %s4836
          %s4838 = sand.u32 %s301, 1
          %s4839 = smul.addr %s4838, 8
          %s4840 = scalar_lea.vmem [#allocation20], %s4839
          %4841 = dma.done %s4837, 128
        $region128: #{tpu_custom_call.1} parent=115 // pred_fallthru
          _
        // Predicated region
        $region129: #{tpu_custom_call.1} parent=115 // pred_check
          %p4842 = pneg %p342
        $region130: #{tpu_custom_call.1} parent=115 // pred_check_branch
          %4844 = sbr.rel (%p4842) target = $region132
        $region131: #{tpu_custom_call.1} parent=115 // pred_region
          %s4845 = sand.u32 %s327, 1
          %s4846 = scalar_lea.sflag [#allocation22], %s4845
          %s4847 = sand.u32 %s327, 1
          %s4848 = smul.addr %s4847, 8
          %s4849 = scalar_lea.vmem [#allocation21], %s4848
          %4850 = dma.done %s4846, 128
        $region132: #{tpu_custom_call.1} parent=115 // pred_fallthru
          _
      $region116: #{tpu_custom_call.1} parent=5 // pred_fallthru
        _
    $region6: #{tpu_custom_call.1} parent=1 // loop_footer
      %s42 = sadd.s32 1, %s38
    $region7: #{tpu_custom_call.1} parent=1 // loop_footer_branch
      %37 = sbr.rel target = $region3
    $region8: #{tpu_custom_call.1} parent=1 // loop_exit
      _
    %4851 = vsyncpa [#allocation4], 1
    %s4852 = scalar_lea.sflag [#allocation4], 1
    %4853 = vsyncpa %s4852, 1
    %4854 = vsyncpa [#allocation7], 1
    %s4855 = scalar_lea.sflag [#allocation7], 1
    %4856 = vsyncpa %s4855, 1
    %4857 = vsyncpa [#allocation10], 1
    %s4858 = scalar_lea.sflag [#allocation10], 1
    %4859 = vsyncpa %s4858, 1
    %4860 = vsyncpa [#allocation13], 1
    %4861 = vsyncpa [#allocation16], 1
    %4862 = vsyncpa [#allocation5], 1
    %s4863 = scalar_lea.sflag [#allocation5], 1
    %4864 = vsyncpa %s4863, 1
    %4865 = vsyncpa [#allocation19], 1
    %s4866 = scalar_lea.sflag [#allocation19], 1
    %4867 = vsyncpa %s4866, 1
    %4868 = vsyncpa [#allocation22], 1
    %s4869 = scalar_lea.sflag [#allocation22], 1
    %4870 = vsyncpa %s4869, 1

</llo_original>
